<compile_context>
chip_gen: v7x
topology: tpu7x:2x2x1
jax: 0.10.0
libtpu: 0.0.40
codegen_flags: <defaults>
</compile_context>

<pallas_src>
import jax
import jax.numpy as jnp
from jax import lax
from jax.experimental import pallas as pl
from jax.experimental.pallas import tpu as pltpu

# ---- problem sizes (small, consistent with the module defaults) ----
N = 2            # batch
NC = 32          # nc  (block in/out channels)
GC = 16          # gc  (growth channels)
H = W = 16
HW = H * W       # 256 pixels per sample
LANES = N * HW   # 512 lanes: both samples' pixels batched into the lane dim
NEG_SLOPE = 0.2  # LeakyReLU(0.2)

# Guard against silent relayout copies on the row-slice adds (see perf review).
assert NC % 8 == 0 and GC % 8 == 0
assert HW % 128 == 0 and LANES % 128 == 0

# Static 3x3 tap offsets; roll shifts expressed as non-negative lane rotations.
_TAPS = [(kh - 1, kw - 1) for kh in range(3) for kw in range(3)]
_SHIFTS = [(-(dh * W + dw)) % LANES for dh, dw in _TAPS]


def _lrelu(x):
    return jnp.where(x >= 0, x, NEG_SLOPE * x)


def rdb5c_kernel(x_ref, m_ref, wx_ref, wx1_ref, wx2_ref, wx3_ref, wx4_ref,
                 b_ref, o_ref, slab_ref):
    # x_ref: (NC, LANES) f32 -- channels on sublanes, both samples' pixels on lanes.
    x = x_ref[...]

    def im2col(f, c):
        # f: (c, LANES) f32.  Write the tap-major (9*c, LANES) bf16 im2col slab
        # into the shared VMEM scratch (rows t*c + chan).
        for t in range(9):
            sh = _SHIFTS[t]
            if sh == 0:                              # centre tap: no shift, no border
                tap = f
            else:
                # XLU lane rotation; host-precomputed, pre-broadcast border mask.
                tap = pltpu.roll(f, shift=sh, axis=1) * m_ref[t * NC:t * NC + c, :]
            slab_ref[t * c:(t + 1) * c, :] = tap.astype(jnp.bfloat16)

    def contrib(w_ref, f, c):
        # One stacked im2col matmul per source feature (bf16 MXU, f32 accumulate).
        im2col(f, c)
        return jnp.dot(w_ref[...], slab_ref[0:9 * c, :],
                       preferred_element_type=jnp.float32)

    b = b_ref[...]                                   # (4*GC + NC, 1) f32

    # Contribution of each feature to every conv that consumes it (dense reuse).
    cx = contrib(wx_ref, x, NC)                      # rows: conv1..conv4 (GC), conv5 (NC)
    x1 = _lrelu(cx[0:GC] + b[0:GC])

    c1 = contrib(wx1_ref, x1, GC)                    # rows: conv2..conv4 (GC), conv5 (NC)
    x2 = _lrelu(cx[GC:2 * GC] + c1[0:GC] + b[GC:2 * GC])

    c2 = contrib(wx2_ref, x2, GC)                    # rows: conv3, conv4 (GC), conv5 (NC)
    x3 = _lrelu(cx[2 * GC:3 * GC] + c1[GC:2 * GC] + c2[0:GC] + b[2 * GC:3 * GC])

    c3 = contrib(wx3_ref, x3, GC)                    # rows: conv4 (GC), conv5 (NC)
    x4 = _lrelu(cx[3 * GC:4 * GC] + c1[2 * GC:3 * GC] + c2[GC:2 * GC]
                + c3[0:GC] + b[3 * GC:4 * GC])

    c4 = contrib(wx4_ref, x4, GC)                    # rows: conv5 (NC)
    x5 = (cx[4 * GC:4 * GC + NC] + c1[3 * GC:3 * GC + NC]
          + c2[2 * GC:2 * GC + NC] + c3[GC:GC + NC] + c4
          + b[4 * GC:4 * GC + NC])                   # conv5: no activation (mode='CNA')

    # TODO(synk): ChannelAttention / SpatialAttention are skipped because ca=False,
    # sa=False are the module's default ctor args (self.ca / self.sa are None).
    o_ref[...] = _lrelu(0.2 * x5 + x)                # (NC, 512) lane-dense store


# ---------------- host-side parameter / mask packing ----------------

def make_masks():
    """Border-validity masks for the 8 non-centre taps, pre-broadcast to NC rows.

    Row t*NC + c holds the mask of tap t (same for all c).  Computed from
    lane % HW so it is correct for lanes that carry multiple samples."""
    pix = jnp.arange(LANES, dtype=jnp.int32) % HW
    h_idx = pix // W
    w_idx = pix % W
    rows = []
    for dh, dw in _TAPS:
        valid = ((h_idx + dh >= 0) & (h_idx + dh < H) &
                 (w_idx + dw >= 0) & (w_idx + dw < W)).astype(jnp.float32)
        rows.append(jnp.broadcast_to(valid[None, :], (NC, LANES)))
    return jnp.concatenate(rows, axis=0)             # (9*NC, LANES) f32


def _pack_block(w_oihw, start, width):
    """(Cout, Cin, 3, 3) -> (Cout, 9*width) for input channels [start, start+width).

    K ordering is tap-major: index = (kh*3 + kw) * width + c, matching im2col()."""
    blk = w_oihw[:, start:start + width, :, :]
    return jnp.transpose(blk, (0, 2, 3, 1)).reshape(blk.shape[0], 9 * width)


def pack_params(weights, biases):
    """Group conv weights by *source feature*, stack along the output dim, cast bf16."""
    w1, w2, w3, w4, w5 = weights
    wx  = jnp.concatenate([_pack_block(w, 0, NC) for w in (w1, w2, w3, w4, w5)], axis=0)
    wx1 = jnp.concatenate([_pack_block(w, NC, GC) for w in (w2, w3, w4, w5)], axis=0)
    wx2 = jnp.concatenate([_pack_block(w, NC + GC, GC) for w in (w3, w4, w5)], axis=0)
    wx3 = jnp.concatenate([_pack_block(w, NC + 2 * GC, GC) for w in (w4, w5)], axis=0)
    wx4 = _pack_block(w5, NC + 3 * GC, GC)
    b_all = jnp.concatenate(biases).reshape(-1, 1).astype(jnp.float32)   # (4*GC+NC, 1)
    to_bf16 = lambda a: a.astype(jnp.bfloat16)       # bf16 MXU operands, f32 accumulate
    return tuple(map(to_bf16, (wx, wx1, wx2, wx3, wx4))) + (b_all,)


@jax.jit
def rdb5c_forward(x_nchw, masks, wx, wx1, wx2, wx3, wx4, b_all):
    n, c, h, w = x_nchw.shape
    assert c == NC and h == H and w == W and n == N
    lanes = n * h * w
    # NCHW -> (C, N*HW): channels on sublanes, both samples' pixels on lanes.
    x_lanes = jnp.transpose(x_nchw.reshape(n, c, h * w), (1, 0, 2)).reshape(c, lanes)

    out_lanes = pl.pallas_call(
        rdb5c_kernel,
        out_shape=jax.ShapeDtypeStruct((c, lanes), jnp.float32),
        grid_spec=pltpu.PrefetchScalarGridSpec(
            num_scalar_prefetch=0,
            grid=(1,),                                # single step: whole batch in lanes
            in_specs=[
                pl.BlockSpec((c, lanes), lambda i: (0, 0)),
                pl.BlockSpec(masks.shape, lambda i: (0, 0)),
                pl.BlockSpec(wx.shape, lambda i: (0, 0)),
                pl.BlockSpec(wx1.shape, lambda i: (0, 0)),
                pl.BlockSpec(wx2.shape, lambda i: (0, 0)),
                pl.BlockSpec(wx3.shape, lambda i: (0, 0)),
                pl.BlockSpec(wx4.shape, lambda i: (0, 0)),
                pl.BlockSpec(b_all.shape, lambda i: (0, 0)),
            ],
            out_specs=pl.BlockSpec((c, lanes), lambda i: (0, 0)),
            scratch_shapes=[pltpu.VMEM((9 * NC, lanes), jnp.bfloat16)],  # shared im2col slab
        ),
        compiler_params=pltpu.CompilerParams(
            dimension_semantics=("arbitrary",)),
    )(x_lanes, masks, wx, wx1, wx2, wx3, wx4, b_all)

    return jnp.transpose(out_lanes.reshape(c, n, h * w), (1, 0, 2)).reshape(n, c, h, w)


# ---------------- pure-JAX reference (NCHW, f32) ----------------

def reference_forward(x, weights, biases):
    def conv(inp, w, b):
        y = lax.conv_general_dilated(
            inp, w, window_strides=(1, 1), padding=((1, 1), (1, 1)),
            dimension_numbers=('NCHW', 'OIHW', 'NCHW'))
        return y + b.reshape(1, -1, 1, 1)

    def lrelu(t):
        return jnp.where(t >= 0, t, NEG_SLOPE * t)

    w1, w2, w3, w4, w5 = weights
    b1, b2, b3, b4, b5 = biases
    x1 = lrelu(conv(x, w1, b1))
    x2 = lrelu(conv(jnp.concatenate([x, x1], axis=1), w2, b2))
    x3 = lrelu(conv(jnp.concatenate([x, x1, x2], axis=1), w3, b3))
    x4 = lrelu(conv(jnp.concatenate([x, x1, x2, x3], axis=1), w4, b4))
    x5 = conv(jnp.concatenate([x, x1, x2, x3, x4], axis=1), w5, b5)   # no act (mode='CNA')
    return lrelu(0.2 * x5 + x)


if __name__ == "__main__":
    key = jax.random.PRNGKey(0)
    ks = jax.random.split(key, 11)

    cins = [NC, NC + GC, NC + 2 * GC, NC + 3 * GC, NC + 4 * GC]
    couts = [GC, GC, GC, GC, NC]
    weights = [jax.random.normal(ks[i], (couts[i], cins[i], 3, 3), jnp.float32) * 0.05
               for i in range(5)]
    biases = [jax.random.normal(ks[5 + i], (couts[i],), jnp.float32) * 0.05
              for i in range(5)]
    x = jax.random.normal(ks[10], (N, NC, H, W), jnp.float32)

    masks = make_masks()
    wx, wx1, wx2, wx3, wx4, b_all = pack_params(weights, biases)

    out = rdb5c_forward(x, masks, wx, wx1, wx2, wx3, wx4, b_all)
    out = jax.block_until_ready(out)

    ref = reference_forward(x, weights, biases)
    err = float(jnp.max(jnp.abs(out - ref)))
    assert out.shape == (N, NC, H, W)
    # Tolerance absorbs the bf16 MXU-operand path (accumulation stays f32); the
    # expected max error here is ~1e-2 at most, far below structural-bug scale.
    assert err < 2e-2, f"max abs error vs reference: {err}"

    print("KERNEL_OK")
</pallas_src>

<mosaic_0001>
module attributes {stable_mosaic.version = 11 : i64} {
  func.func @rdb5c_kernel(%arg0: i32, %arg1: memref<32x512xf32, #tpu.memory_space<vmem>>, %arg2: memref<288x512xf32, #tpu.memory_space<vmem>>, %arg3: memref<96x288xbf16, #tpu.memory_space<vmem>>, %arg4: memref<80x144xbf16, #tpu.memory_space<vmem>>, %arg5: memref<64x144xbf16, #tpu.memory_space<vmem>>, %arg6: memref<48x144xbf16, #tpu.memory_space<vmem>>, %arg7: memref<32x144xbf16, #tpu.memory_space<vmem>>, %arg8: memref<96x1xf32, #tpu.memory_space<vmem>>, %arg9: memref<32x512xf32, #tpu.memory_space<vmem>>, %arg10: memref<288x512xbf16, #tpu.memory_space<vmem>>) attributes {dimension_semantics = [#tpu.dimension_semantics<arbitrary>], iteration_bounds = array<i64: 1>, scalar_prefetch = 0 : i64, scratch_operands = 1 : i64, tpu.core_type = #tpu.core_type<tc>, window_params = [{pipeline_mode = #tpu.pipeline_mode<synchronous>, transform_indices = @transform_0, window_bounds = array<i64: 32, 512>}, {pipeline_mode = #tpu.pipeline_mode<synchronous>, transform_indices = @transform_1, window_bounds = array<i64: 288, 512>}, {pipeline_mode = #tpu.pipeline_mode<synchronous>, transform_indices = @transform_2, window_bounds = array<i64: 96, 288>}, {pipeline_mode = #tpu.pipeline_mode<synchronous>, transform_indices = @transform_3, window_bounds = array<i64: 80, 144>}, {pipeline_mode = #tpu.pipeline_mode<synchronous>, transform_indices = @transform_4, window_bounds = array<i64: 64, 144>}, {pipeline_mode = #tpu.pipeline_mode<synchronous>, transform_indices = @transform_5, window_bounds = array<i64: 48, 144>}, {pipeline_mode = #tpu.pipeline_mode<synchronous>, transform_indices = @transform_6, window_bounds = array<i64: 32, 144>}, {pipeline_mode = #tpu.pipeline_mode<synchronous>, transform_indices = @transform_7, window_bounds = array<i64: 96, 1>}, {pipeline_mode = #tpu.pipeline_mode<synchronous>, transform_indices = @transform_8, window_bounds = array<i64: 32, 512>}]} {
    %c0 = arith.constant 0 : index
    %c0_0 = arith.constant 0 : index
    %0 = vector.load %arg1[%c0, %c0_0] : memref<32x512xf32, #tpu.memory_space<vmem>>, vector<32x512xf32>
    %c0_1 = arith.constant 0 : index
    %c0_2 = arith.constant 0 : index
    %1 = vector.load %arg8[%c0_1, %c0_2] : memref<96x1xf32, #tpu.memory_space<vmem>>, vector<96x1xf32>
    %c17_i32 = arith.constant 17 : i32
    %2 = tpu.dynamic_rotate %0 by %c17_i32 dim 1 : vector<32x512xf32>, i32 -> vector<32x512xf32>
    %c0_3 = arith.constant 0 : index
    %c0_4 = arith.constant 0 : index
    %3 = vector.load %arg2[%c0_3, %c0_4] : memref<288x512xf32, #tpu.memory_space<vmem>>, vector<32x512xf32>
    %4 = arith.mulf %2, %3 : vector<32x512xf32>
    %5 = arith.truncf %4 : vector<32x512xf32> to vector<32x512xbf16>
    %c0_5 = arith.constant 0 : index
    %c0_6 = arith.constant 0 : index
    %6 = vector.load %arg10[%c0_5, %c0_6] : memref<288x512xbf16, #tpu.memory_space<vmem>>, vector<32x512xbf16>
    tpu.vector_store %arg10[%c0_5, %c0_6], %5 {strides = array<i32>} : memref<288x512xbf16, #tpu.memory_space<vmem>>, vector<32x512xbf16>,
    %c16_i32 = arith.constant 16 : i32
    %7 = tpu.dynamic_rotate %0 by %c16_i32 dim 1 : vector<32x512xf32>, i32 -> vector<32x512xf32>
    %c32 = arith.constant 32 : index
    %c0_7 = arith.constant 0 : index
    %8 = vector.load %arg2[%c32, %c0_7] : memref<288x512xf32, #tpu.memory_space<vmem>>, vector<32x512xf32>
    %9 = arith.mulf %7, %8 : vector<32x512xf32>
    %10 = arith.truncf %9 : vector<32x512xf32> to vector<32x512xbf16>
    %c32_8 = arith.constant 32 : index
    %c0_9 = arith.constant 0 : index
    %11 = vector.load %arg10[%c32_8, %c0_9] : memref<288x512xbf16, #tpu.memory_space<vmem>>, vector<32x512xbf16>
    tpu.vector_store %arg10[%c32_8, %c0_9], %10 {strides = array<i32>} : memref<288x512xbf16, #tpu.memory_space<vmem>>, vector<32x512xbf16>,
    %c15_i32 = arith.constant 15 : i32
    %12 = tpu.dynamic_rotate %0 by %c15_i32 dim 1 : vector<32x512xf32>, i32 -> vector<32x512xf32>
    %c64 = arith.constant 64 : index
    %c0_10 = arith.constant 0 : index
    %13 = vector.load %arg2[%c64, %c0_10] : memref<288x512xf32, #tpu.memory_space<vmem>>, vector<32x512xf32>
    %14 = arith.mulf %12, %13 : vector<32x512xf32>
    %15 = arith.truncf %14 : vector<32x512xf32> to vector<32x512xbf16>
    %c64_11 = arith.constant 64 : index
    %c0_12 = arith.constant 0 : index
    %16 = vector.load %arg10[%c64_11, %c0_12] : memref<288x512xbf16, #tpu.memory_space<vmem>>, vector<32x512xbf16>
    tpu.vector_store %arg10[%c64_11, %c0_12], %15 {strides = array<i32>} : memref<288x512xbf16, #tpu.memory_space<vmem>>, vector<32x512xbf16>,
    %c1_i32 = arith.constant 1 : i32
    %17 = tpu.dynamic_rotate %0 by %c1_i32 dim 1 : vector<32x512xf32>, i32 -> vector<32x512xf32>
    %c96 = arith.constant 96 : index
    %c0_13 = arith.constant 0 : index
    %18 = vector.load %arg2[%c96, %c0_13] : memref<288x512xf32, #tpu.memory_space<vmem>>, vector<32x512xf32>
    %19 = arith.mulf %17, %18 : vector<32x512xf32>
    %20 = arith.truncf %19 : vector<32x512xf32> to vector<32x512xbf16>
    %c96_14 = arith.constant 96 : index
    %c0_15 = arith.constant 0 : index
    %21 = vector.load %arg10[%c96_14, %c0_15] : memref<288x512xbf16, #tpu.memory_space<vmem>>, vector<32x512xbf16>
    tpu.vector_store %arg10[%c96_14, %c0_15], %20 {strides = array<i32>} : memref<288x512xbf16, #tpu.memory_space<vmem>>, vector<32x512xbf16>,
    %22 = arith.truncf %0 : vector<32x512xf32> to vector<32x512xbf16>
    %c128 = arith.constant 128 : index
    %c0_16 = arith.constant 0 : index
    %23 = vector.load %arg10[%c128, %c0_16] : memref<288x512xbf16, #tpu.memory_space<vmem>>, vector<32x512xbf16>
    tpu.vector_store %arg10[%c128, %c0_16], %22 {strides = array<i32>} : memref<288x512xbf16, #tpu.memory_space<vmem>>, vector<32x512xbf16>,
    %c511_i32 = arith.constant 511 : i32
    %24 = tpu.dynamic_rotate %0 by %c511_i32 dim 1 : vector<32x512xf32>, i32 -> vector<32x512xf32>
    %c160 = arith.constant 160 : index
    %c0_17 = arith.constant 0 : index
    %25 = vector.load %arg2[%c160, %c0_17] : memref<288x512xf32, #tpu.memory_space<vmem>>, vector<32x512xf32>
    %26 = arith.mulf %24, %25 : vector<32x512xf32>
    %27 = arith.truncf %26 : vector<32x512xf32> to vector<32x512xbf16>
    %c160_18 = arith.constant 160 : index
    %c0_19 = arith.constant 0 : index
    %28 = vector.load %arg10[%c160_18, %c0_19] : memref<288x512xbf16, #tpu.memory_space<vmem>>, vector<32x512xbf16>
    tpu.vector_store %arg10[%c160_18, %c0_19], %27 {strides = array<i32>} : memref<288x512xbf16, #tpu.memory_space<vmem>>, vector<32x512xbf16>,
    %c497_i32 = arith.constant 497 : i32
    %29 = tpu.dynamic_rotate %0 by %c497_i32 dim 1 : vector<32x512xf32>, i32 -> vector<32x512xf32>
    %c192 = arith.constant 192 : index
    %c0_20 = arith.constant 0 : index
    %30 = vector.load %arg2[%c192, %c0_20] : memref<288x512xf32, #tpu.memory_space<vmem>>, vector<32x512xf32>
    %31 = arith.mulf %29, %30 : vector<32x512xf32>
    %32 = arith.truncf %31 : vector<32x512xf32> to vector<32x512xbf16>
    %c192_21 = arith.constant 192 : index
    %c0_22 = arith.constant 0 : index
    %33 = vector.load %arg10[%c192_21, %c0_22] : memref<288x512xbf16, #tpu.memory_space<vmem>>, vector<32x512xbf16>
    tpu.vector_store %arg10[%c192_21, %c0_22], %32 {strides = array<i32>} : memref<288x512xbf16, #tpu.memory_space<vmem>>, vector<32x512xbf16>,
    %c496_i32 = arith.constant 496 : i32
    %34 = tpu.dynamic_rotate %0 by %c496_i32 dim 1 : vector<32x512xf32>, i32 -> vector<32x512xf32>
    %c224 = arith.constant 224 : index
    %c0_23 = arith.constant 0 : index
    %35 = vector.load %arg2[%c224, %c0_23] : memref<288x512xf32, #tpu.memory_space<vmem>>, vector<32x512xf32>
    %36 = arith.mulf %34, %35 : vector<32x512xf32>
    %37 = arith.truncf %36 : vector<32x512xf32> to vector<32x512xbf16>
    %c224_24 = arith.constant 224 : index
    %c0_25 = arith.constant 0 : index
    %38 = vector.load %arg10[%c224_24, %c0_25] : memref<288x512xbf16, #tpu.memory_space<vmem>>, vector<32x512xbf16>
    tpu.vector_store %arg10[%c224_24, %c0_25], %37 {strides = array<i32>} : memref<288x512xbf16, #tpu.memory_space<vmem>>, vector<32x512xbf16>,
    %c495_i32 = arith.constant 495 : i32
    %39 = tpu.dynamic_rotate %0 by %c495_i32 dim 1 : vector<32x512xf32>, i32 -> vector<32x512xf32>
    %c256 = arith.constant 256 : index
    %c0_26 = arith.constant 0 : index
    %40 = vector.load %arg2[%c256, %c0_26] : memref<288x512xf32, #tpu.memory_space<vmem>>, vector<32x512xf32>
    %41 = arith.mulf %39, %40 : vector<32x512xf32>
    %42 = arith.truncf %41 : vector<32x512xf32> to vector<32x512xbf16>
    %c256_27 = arith.constant 256 : index
    %c0_28 = arith.constant 0 : index
    %43 = vector.load %arg10[%c256_27, %c0_28] : memref<288x512xbf16, #tpu.memory_space<vmem>>, vector<32x512xbf16>
    tpu.vector_store %arg10[%c256_27, %c0_28], %42 {strides = array<i32>} : memref<288x512xbf16, #tpu.memory_space<vmem>>, vector<32x512xbf16>,
    %c0_29 = arith.constant 0 : index
    %c0_30 = arith.constant 0 : index
    %44 = vector.load %arg3[%c0_29, %c0_30] : memref<96x288xbf16, #tpu.memory_space<vmem>>, vector<96x288xbf16>
    %c0_31 = arith.constant 0 : index
    %c0_32 = arith.constant 0 : index
    %45 = vector.load %arg10[%c0_31, %c0_32] : memref<288x512xbf16, #tpu.memory_space<vmem>>, vector<288x512xbf16>
    %cst = arith.constant dense<0.000000e+00> : vector<96x512xf32>
    %46 = tpu.matmul %44, %45, %cst {dimension_numbers = #tpu.dot_dimension_numbers<[1], [0], [0], [1], [0, 0, 1, 1], [], []>} : vector<96x288xbf16>, vector<288x512xbf16>, vector<96x512xf32> -> vector<96x512xf32>
    %47 = vector.extract_strided_slice %46 {offsets = [0, 0], sizes = [16, 512], strides = [1, 1]} : vector<96x512xf32> to vector<16x512xf32>
    %48 = vector.extract_strided_slice %1 {offsets = [0, 0], sizes = [16, 1], strides = [1, 1]} : vector<96x1xf32> to vector<16x1xf32>
    %49 = vector.broadcast %48 : vector<16x1xf32> to vector<16x512xf32>
    %50 = arith.addf %47, %49 : vector<16x512xf32>
    %cst_33 = arith.constant 0.000000e+00 : f32
    %51 = vector.broadcast %cst_33 : f32 to vector<16x512xf32>
    %52 = arith.cmpf oge, %50, %51 : vector<16x512xf32>
    %cst_34 = arith.constant 2.000000e-01 : f32
    %53 = vector.broadcast %cst_34 : f32 to vector<16x512xf32>
    %54 = arith.mulf %53, %50 : vector<16x512xf32>
    %55 = arith.select %52, %50, %54 : vector<16x512xi1>, vector<16x512xf32>
    %c17_i32_35 = arith.constant 17 : i32
    %56 = tpu.dynamic_rotate %55 by %c17_i32_35 dim 1 : vector<16x512xf32>, i32 -> vector<16x512xf32>
    %c0_36 = arith.constant 0 : index
    %c0_37 = arith.constant 0 : index
    %57 = vector.load %arg2[%c0_36, %c0_37] : memref<288x512xf32, #tpu.memory_space<vmem>>, vector<16x512xf32>
    %58 = arith.mulf %56, %57 : vector<16x512xf32>
    %59 = arith.truncf %58 : vector<16x512xf32> to vector<16x512xbf16>
    %c0_38 = arith.constant 0 : index
    %c0_39 = arith.constant 0 : index
    %60 = vector.load %arg10[%c0_38, %c0_39] : memref<288x512xbf16, #tpu.memory_space<vmem>>, vector<16x512xbf16>
    tpu.vector_store %arg10[%c0_38, %c0_39], %59 {strides = array<i32>} : memref<288x512xbf16, #tpu.memory_space<vmem>>, vector<16x512xbf16>,
    %c16_i32_40 = arith.constant 16 : i32
    %61 = tpu.dynamic_rotate %55 by %c16_i32_40 dim 1 : vector<16x512xf32>, i32 -> vector<16x512xf32>
    %c32_41 = arith.constant 32 : index
    %c0_42 = arith.constant 0 : index
    %62 = vector.load %arg2[%c32_41, %c0_42] : memref<288x512xf32, #tpu.memory_space<vmem>>, vector<16x512xf32>
    %63 = arith.mulf %61, %62 : vector<16x512xf32>
    %64 = arith.truncf %63 : vector<16x512xf32> to vector<16x512xbf16>
    %c16 = arith.constant 16 : index
    %c0_43 = arith.constant 0 : index
    %65 = vector.load %arg10[%c16, %c0_43] : memref<288x512xbf16, #tpu.memory_space<vmem>>, vector<16x512xbf16>
    tpu.vector_store %arg10[%c16, %c0_43], %64 {strides = array<i32>} : memref<288x512xbf16, #tpu.memory_space<vmem>>, vector<16x512xbf16>,
    %c15_i32_44 = arith.constant 15 : i32
    %66 = tpu.dynamic_rotate %55 by %c15_i32_44 dim 1 : vector<16x512xf32>, i32 -> vector<16x512xf32>
    %c64_45 = arith.constant 64 : index
    %c0_46 = arith.constant 0 : index
    %67 = vector.load %arg2[%c64_45, %c0_46] : memref<288x512xf32, #tpu.memory_space<vmem>>, vector<16x512xf32>
    %68 = arith.mulf %66, %67 : vector<16x512xf32>
    %69 = arith.truncf %68 : vector<16x512xf32> to vector<16x512xbf16>
    %c32_47 = arith.constant 32 : index
    %c0_48 = arith.constant 0 : index
    %70 = vector.load %arg10[%c32_47, %c0_48] : memref<288x512xbf16, #tpu.memory_space<vmem>>, vector<16x512xbf16>
    tpu.vector_store %arg10[%c32_47, %c0_48], %69 {strides = array<i32>} : memref<288x512xbf16, #tpu.memory_space<vmem>>, vector<16x512xbf16>,
    %c1_i32_49 = arith.constant 1 : i32
    %71 = tpu.dynamic_rotate %55 by %c1_i32_49 dim 1 : vector<16x512xf32>, i32 -> vector<16x512xf32>
    %c96_50 = arith.constant 96 : index
    %c0_51 = arith.constant 0 : index
    %72 = vector.load %arg2[%c96_50, %c0_51] : memref<288x512xf32, #tpu.memory_space<vmem>>, vector<16x512xf32>
    %73 = arith.mulf %71, %72 : vector<16x512xf32>
    %74 = arith.truncf %73 : vector<16x512xf32> to vector<16x512xbf16>
    %c48 = arith.constant 48 : index
    %c0_52 = arith.constant 0 : index
    %75 = vector.load %arg10[%c48, %c0_52] : memref<288x512xbf16, #tpu.memory_space<vmem>>, vector<16x512xbf16>
    tpu.vector_store %arg10[%c48, %c0_52], %74 {strides = array<i32>} : memref<288x512xbf16, #tpu.memory_space<vmem>>, vector<16x512xbf16>,
    %76 = arith.truncf %55 : vector<16x512xf32> to vector<16x512xbf16>
    %c64_53 = arith.constant 64 : index
    %c0_54 = arith.constant 0 : index
    %77 = vector.load %arg10[%c64_53, %c0_54] : memref<288x512xbf16, #tpu.memory_space<vmem>>, vector<16x512xbf16>
    tpu.vector_store %arg10[%c64_53, %c0_54], %76 {strides = array<i32>} : memref<288x512xbf16, #tpu.memory_space<vmem>>, vector<16x512xbf16>,
    %c511_i32_55 = arith.constant 511 : i32
    %78 = tpu.dynamic_rotate %55 by %c511_i32_55 dim 1 : vector<16x512xf32>, i32 -> vector<16x512xf32>
    %c160_56 = arith.constant 160 : index
    %c0_57 = arith.constant 0 : index
    %79 = vector.load %arg2[%c160_56, %c0_57] : memref<288x512xf32, #tpu.memory_space<vmem>>, vector<16x512xf32>
    %80 = arith.mulf %78, %79 : vector<16x512xf32>
    %81 = arith.truncf %80 : vector<16x512xf32> to vector<16x512xbf16>
    %c80 = arith.constant 80 : index
    %c0_58 = arith.constant 0 : index
    %82 = vector.load %arg10[%c80, %c0_58] : memref<288x512xbf16, #tpu.memory_space<vmem>>, vector<16x512xbf16>
    tpu.vector_store %arg10[%c80, %c0_58], %81 {strides = array<i32>} : memref<288x512xbf16, #tpu.memory_space<vmem>>, vector<16x512xbf16>,
    %c497_i32_59 = arith.constant 497 : i32
    %83 = tpu.dynamic_rotate %55 by %c497_i32_59 dim 1 : vector<16x512xf32>, i32 -> vector<16x512xf32>
    %c192_60 = arith.constant 192 : index
    %c0_61 = arith.constant 0 : index
    %84 = vector.load %arg2[%c192_60, %c0_61] : memref<288x512xf32, #tpu.memory_space<vmem>>, vector<16x512xf32>
    %85 = arith.mulf %83, %84 : vector<16x512xf32>
    %86 = arith.truncf %85 : vector<16x512xf32> to vector<16x512xbf16>
    %c96_62 = arith.constant 96 : index
    %c0_63 = arith.constant 0 : index
    %87 = vector.load %arg10[%c96_62, %c0_63] : memref<288x512xbf16, #tpu.memory_space<vmem>>, vector<16x512xbf16>
    tpu.vector_store %arg10[%c96_62, %c0_63], %86 {strides = array<i32>} : memref<288x512xbf16, #tpu.memory_space<vmem>>, vector<16x512xbf16>,
    %c496_i32_64 = arith.constant 496 : i32
    %88 = tpu.dynamic_rotate %55 by %c496_i32_64 dim 1 : vector<16x512xf32>, i32 -> vector<16x512xf32>
    %c224_65 = arith.constant 224 : index
    %c0_66 = arith.constant 0 : index
    %89 = vector.load %arg2[%c224_65, %c0_66] : memref<288x512xf32, #tpu.memory_space<vmem>>, vector<16x512xf32>
    %90 = arith.mulf %88, %89 : vector<16x512xf32>
    %91 = arith.truncf %90 : vector<16x512xf32> to vector<16x512xbf16>
    %c112 = arith.constant 112 : index
    %c0_67 = arith.constant 0 : index
    %92 = vector.load %arg10[%c112, %c0_67] : memref<288x512xbf16, #tpu.memory_space<vmem>>, vector<16x512xbf16>
    tpu.vector_store %arg10[%c112, %c0_67], %91 {strides = array<i32>} : memref<288x512xbf16, #tpu.memory_space<vmem>>, vector<16x512xbf16>,
    %c495_i32_68 = arith.constant 495 : i32
    %93 = tpu.dynamic_rotate %55 by %c495_i32_68 dim 1 : vector<16x512xf32>, i32 -> vector<16x512xf32>
    %c256_69 = arith.constant 256 : index
    %c0_70 = arith.constant 0 : index
    %94 = vector.load %arg2[%c256_69, %c0_70] : memref<288x512xf32, #tpu.memory_space<vmem>>, vector<16x512xf32>
    %95 = arith.mulf %93, %94 : vector<16x512xf32>
    %96 = arith.truncf %95 : vector<16x512xf32> to vector<16x512xbf16>
    %c128_71 = arith.constant 128 : index
    %c0_72 = arith.constant 0 : index
    %97 = vector.load %arg10[%c128_71, %c0_72] : memref<288x512xbf16, #tpu.memory_space<vmem>>, vector<16x512xbf16>
    tpu.vector_store %arg10[%c128_71, %c0_72], %96 {strides = array<i32>} : memref<288x512xbf16, #tpu.memory_space<vmem>>, vector<16x512xbf16>,
    %c0_73 = arith.constant 0 : index
    %c0_74 = arith.constant 0 : index
    %98 = vector.load %arg4[%c0_73, %c0_74] : memref<80x144xbf16, #tpu.memory_space<vmem>>, vector<80x144xbf16>
    %c0_75 = arith.constant 0 : index
    %c0_76 = arith.constant 0 : index
    %99 = vector.load %arg10[%c0_75, %c0_76] : memref<288x512xbf16, #tpu.memory_space<vmem>>, vector<144x512xbf16>
    %cst_77 = arith.constant dense<0.000000e+00> : vector<80x512xf32>
    %100 = tpu.matmul %98, %99, %cst_77 {dimension_numbers = #tpu.dot_dimension_numbers<[1], [0], [0], [1], [0, 0, 1, 1], [], []>} : vector<80x144xbf16>, vector<144x512xbf16>, vector<80x512xf32> -> vector<80x512xf32>
    %101 = vector.extract_strided_slice %46 {offsets = [16, 0], sizes = [16, 512], strides = [1, 1]} : vector<96x512xf32> to vector<16x512xf32>
    %102 = vector.extract_strided_slice %100 {offsets = [0, 0], sizes = [16, 512], strides = [1, 1]} : vector<80x512xf32> to vector<16x512xf32>
    %103 = arith.addf %101, %102 : vector<16x512xf32>
    %104 = vector.extract_strided_slice %1 {offsets = [16, 0], sizes = [16, 1], strides = [1, 1]} : vector<96x1xf32> to vector<16x1xf32>
    %105 = vector.broadcast %104 : vector<16x1xf32> to vector<16x512xf32>
    %106 = arith.addf %103, %105 : vector<16x512xf32>
    %cst_78 = arith.constant 0.000000e+00 : f32
    %107 = vector.broadcast %cst_78 : f32 to vector<16x512xf32>
    %108 = arith.cmpf oge, %106, %107 : vector<16x512xf32>
    %cst_79 = arith.constant 2.000000e-01 : f32
    %109 = vector.broadcast %cst_79 : f32 to vector<16x512xf32>
    %110 = arith.mulf %109, %106 : vector<16x512xf32>
    %111 = arith.select %108, %106, %110 : vector<16x512xi1>, vector<16x512xf32>
    %c17_i32_80 = arith.constant 17 : i32
    %112 = tpu.dynamic_rotate %111 by %c17_i32_80 dim 1 : vector<16x512xf32>, i32 -> vector<16x512xf32>
    %c0_81 = arith.constant 0 : index
    %c0_82 = arith.constant 0 : index
    %113 = vector.load %arg2[%c0_81, %c0_82] : memref<288x512xf32, #tpu.memory_space<vmem>>, vector<16x512xf32>
    %114 = arith.mulf %112, %113 : vector<16x512xf32>
    %115 = arith.truncf %114 : vector<16x512xf32> to vector<16x512xbf16>
    %c0_83 = arith.constant 0 : index
    %c0_84 = arith.constant 0 : index
    %116 = vector.load %arg10[%c0_83, %c0_84] : memref<288x512xbf16, #tpu.memory_space<vmem>>, vector<16x512xbf16>
    tpu.vector_store %arg10[%c0_83, %c0_84], %115 {strides = array<i32>} : memref<288x512xbf16, #tpu.memory_space<vmem>>, vector<16x512xbf16>,
    %c16_i32_85 = arith.constant 16 : i32
    %117 = tpu.dynamic_rotate %111 by %c16_i32_85 dim 1 : vector<16x512xf32>, i32 -> vector<16x512xf32>
    %c32_86 = arith.constant 32 : index
    %c0_87 = arith.constant 0 : index
    %118 = vector.load %arg2[%c32_86, %c0_87] : memref<288x512xf32, #tpu.memory_space<vmem>>, vector<16x512xf32>
    %119 = arith.mulf %117, %118 : vector<16x512xf32>
    %120 = arith.truncf %119 : vector<16x512xf32> to vector<16x512xbf16>
    %c16_88 = arith.constant 16 : index
    %c0_89 = arith.constant 0 : index
    %121 = vector.load %arg10[%c16_88, %c0_89] : memref<288x512xbf16, #tpu.memory_space<vmem>>, vector<16x512xbf16>
    tpu.vector_store %arg10[%c16_88, %c0_89], %120 {strides = array<i32>} : memref<288x512xbf16, #tpu.memory_space<vmem>>, vector<16x512xbf16>,
    %c15_i32_90 = arith.constant 15 : i32
    %122 = tpu.dynamic_rotate %111 by %c15_i32_90 dim 1 : vector<16x512xf32>, i32 -> vector<16x512xf32>
    %c64_91 = arith.constant 64 : index
    %c0_92 = arith.constant 0 : index
    %123 = vector.load %arg2[%c64_91, %c0_92] : memref<288x512xf32, #tpu.memory_space<vmem>>, vector<16x512xf32>
    %124 = arith.mulf %122, %123 : vector<16x512xf32>
    %125 = arith.truncf %124 : vector<16x512xf32> to vector<16x512xbf16>
    %c32_93 = arith.constant 32 : index
    %c0_94 = arith.constant 0 : index
    %126 = vector.load %arg10[%c32_93, %c0_94] : memref<288x512xbf16, #tpu.memory_space<vmem>>, vector<16x512xbf16>
    tpu.vector_store %arg10[%c32_93, %c0_94], %125 {strides = array<i32>} : memref<288x512xbf16, #tpu.memory_space<vmem>>, vector<16x512xbf16>,
    %c1_i32_95 = arith.constant 1 : i32
    %127 = tpu.dynamic_rotate %111 by %c1_i32_95 dim 1 : vector<16x512xf32>, i32 -> vector<16x512xf32>
    %c96_96 = arith.constant 96 : index
    %c0_97 = arith.constant 0 : index
    %128 = vector.load %arg2[%c96_96, %c0_97] : memref<288x512xf32, #tpu.memory_space<vmem>>, vector<16x512xf32>
    %129 = arith.mulf %127, %128 : vector<16x512xf32>
    %130 = arith.truncf %129 : vector<16x512xf32> to vector<16x512xbf16>
    %c48_98 = arith.constant 48 : index
    %c0_99 = arith.constant 0 : index
    %131 = vector.load %arg10[%c48_98, %c0_99] : memref<288x512xbf16, #tpu.memory_space<vmem>>, vector<16x512xbf16>
    tpu.vector_store %arg10[%c48_98, %c0_99], %130 {strides = array<i32>} : memref<288x512xbf16, #tpu.memory_space<vmem>>, vector<16x512xbf16>,
    %132 = arith.truncf %111 : vector<16x512xf32> to vector<16x512xbf16>
    %c64_100 = arith.constant 64 : index
    %c0_101 = arith.constant 0 : index
    %133 = vector.load %arg10[%c64_100, %c0_101] : memref<288x512xbf16, #tpu.memory_space<vmem>>, vector<16x512xbf16>
    tpu.vector_store %arg10[%c64_100, %c0_101], %132 {strides = array<i32>} : memref<288x512xbf16, #tpu.memory_space<vmem>>, vector<16x512xbf16>,
    %c511_i32_102 = arith.constant 511 : i32
    %134 = tpu.dynamic_rotate %111 by %c511_i32_102 dim 1 : vector<16x512xf32>, i32 -> vector<16x512xf32>
    %c160_103 = arith.constant 160 : index
    %c0_104 = arith.constant 0 : index
    %135 = vector.load %arg2[%c160_103, %c0_104] : memref<288x512xf32, #tpu.memory_space<vmem>>, vector<16x512xf32>
    %136 = arith.mulf %134, %135 : vector<16x512xf32>
    %137 = arith.truncf %136 : vector<16x512xf32> to vector<16x512xbf16>
    %c80_105 = arith.constant 80 : index
    %c0_106 = arith.constant 0 : index
    %138 = vector.load %arg10[%c80_105, %c0_106] : memref<288x512xbf16, #tpu.memory_space<vmem>>, vector<16x512xbf16>
    tpu.vector_store %arg10[%c80_105, %c0_106], %137 {strides = array<i32>} : memref<288x512xbf16, #tpu.memory_space<vmem>>, vector<16x512xbf16>,
    %c497_i32_107 = arith.constant 497 : i32
    %139 = tpu.dynamic_rotate %111 by %c497_i32_107 dim 1 : vector<16x512xf32>, i32 -> vector<16x512xf32>
    %c192_108 = arith.constant 192 : index
    %c0_109 = arith.constant 0 : index
    %140 = vector.load %arg2[%c192_108, %c0_109] : memref<288x512xf32, #tpu.memory_space<vmem>>, vector<16x512xf32>
    %141 = arith.mulf %139, %140 : vector<16x512xf32>
    %142 = arith.truncf %141 : vector<16x512xf32> to vector<16x512xbf16>
    %c96_110 = arith.constant 96 : index
    %c0_111 = arith.constant 0 : index
    %143 = vector.load %arg10[%c96_110, %c0_111] : memref<288x512xbf16, #tpu.memory_space<vmem>>, vector<16x512xbf16>
    tpu.vector_store %arg10[%c96_110, %c0_111], %142 {strides = array<i32>} : memref<288x512xbf16, #tpu.memory_space<vmem>>, vector<16x512xbf16>,
    %c496_i32_112 = arith.constant 496 : i32
    %144 = tpu.dynamic_rotate %111 by %c496_i32_112 dim 1 : vector<16x512xf32>, i32 -> vector<16x512xf32>
    %c224_113 = arith.constant 224 : index
    %c0_114 = arith.constant 0 : index
    %145 = vector.load %arg2[%c224_113, %c0_114] : memref<288x512xf32, #tpu.memory_space<vmem>>, vector<16x512xf32>
    %146 = arith.mulf %144, %145 : vector<16x512xf32>
    %147 = arith.truncf %146 : vector<16x512xf32> to vector<16x512xbf16>
    %c112_115 = arith.constant 112 : index
    %c0_116 = arith.constant 0 : index
    %148 = vector.load %arg10[%c112_115, %c0_116] : memref<288x512xbf16, #tpu.memory_space<vmem>>, vector<16x512xbf16>
    tpu.vector_store %arg10[%c112_115, %c0_116], %147 {strides = array<i32>} : memref<288x512xbf16, #tpu.memory_space<vmem>>, vector<16x512xbf16>,
    %c495_i32_117 = arith.constant 495 : i32
    %149 = tpu.dynamic_rotate %111 by %c495_i32_117 dim 1 : vector<16x512xf32>, i32 -> vector<16x512xf32>
    %c256_118 = arith.constant 256 : index
    %c0_119 = arith.constant 0 : index
    %150 = vector.load %arg2[%c256_118, %c0_119] : memref<288x512xf32, #tpu.memory_space<vmem>>, vector<16x512xf32>
    %151 = arith.mulf %149, %150 : vector<16x512xf32>
    %152 = arith.truncf %151 : vector<16x512xf32> to vector<16x512xbf16>
    %c128_120 = arith.constant 128 : index
    %c0_121 = arith.constant 0 : index
    %153 = vector.load %arg10[%c128_120, %c0_121] : memref<288x512xbf16, #tpu.memory_space<vmem>>, vector<16x512xbf16>
    tpu.vector_store %arg10[%c128_120, %c0_121], %152 {strides = array<i32>} : memref<288x512xbf16, #tpu.memory_space<vmem>>, vector<16x512xbf16>,
    %c0_122 = arith.constant 0 : index
    %c0_123 = arith.constant 0 : index
    %154 = vector.load %arg5[%c0_122, %c0_123] : memref<64x144xbf16, #tpu.memory_space<vmem>>, vector<64x144xbf16>
    %c0_124 = arith.constant 0 : index
    %c0_125 = arith.constant 0 : index
    %155 = vector.load %arg10[%c0_124, %c0_125] : memref<288x512xbf16, #tpu.memory_space<vmem>>, vector<144x512xbf16>
    %cst_126 = arith.constant dense<0.000000e+00> : vector<64x512xf32>
    %156 = tpu.matmul %154, %155, %cst_126 {dimension_numbers = #tpu.dot_dimension_numbers<[1], [0], [0], [1], [0, 0, 1, 1], [], []>} : vector<64x144xbf16>, vector<144x512xbf16>, vector<64x512xf32> -> vector<64x512xf32>
    %157 = vector.extract_strided_slice %46 {offsets = [32, 0], sizes = [16, 512], strides = [1, 1]} : vector<96x512xf32> to vector<16x512xf32>
    %158 = vector.extract_strided_slice %100 {offsets = [16, 0], sizes = [16, 512], strides = [1, 1]} : vector<80x512xf32> to vector<16x512xf32>
    %159 = arith.addf %157, %158 : vector<16x512xf32>
    %160 = vector.extract_strided_slice %156 {offsets = [0, 0], sizes = [16, 512], strides = [1, 1]} : vector<64x512xf32> to vector<16x512xf32>
    %161 = arith.addf %159, %160 : vector<16x512xf32>
    %162 = vector.extract_strided_slice %1 {offsets = [32, 0], sizes = [16, 1], strides = [1, 1]} : vector<96x1xf32> to vector<16x1xf32>
    %163 = vector.broadcast %162 : vector<16x1xf32> to vector<16x512xf32>
    %164 = arith.addf %161, %163 : vector<16x512xf32>
    %cst_127 = arith.constant 0.000000e+00 : f32
    %165 = vector.broadcast %cst_127 : f32 to vector<16x512xf32>
    %166 = arith.cmpf oge, %164, %165 : vector<16x512xf32>
    %cst_128 = arith.constant 2.000000e-01 : f32
    %167 = vector.broadcast %cst_128 : f32 to vector<16x512xf32>
    %168 = arith.mulf %167, %164 : vector<16x512xf32>
    %169 = arith.select %166, %164, %168 : vector<16x512xi1>, vector<16x512xf32>
    %c17_i32_129 = arith.constant 17 : i32
    %170 = tpu.dynamic_rotate %169 by %c17_i32_129 dim 1 : vector<16x512xf32>, i32 -> vector<16x512xf32>
    %c0_130 = arith.constant 0 : index
    %c0_131 = arith.constant 0 : index
    %171 = vector.load %arg2[%c0_130, %c0_131] : memref<288x512xf32, #tpu.memory_space<vmem>>, vector<16x512xf32>
    %172 = arith.mulf %170, %171 : vector<16x512xf32>
    %173 = arith.truncf %172 : vector<16x512xf32> to vector<16x512xbf16>
    %c0_132 = arith.constant 0 : index
    %c0_133 = arith.constant 0 : index
    %174 = vector.load %arg10[%c0_132, %c0_133] : memref<288x512xbf16, #tpu.memory_space<vmem>>, vector<16x512xbf16>
    tpu.vector_store %arg10[%c0_132, %c0_133], %173 {strides = array<i32>} : memref<288x512xbf16, #tpu.memory_space<vmem>>, vector<16x512xbf16>,
    %c16_i32_134 = arith.constant 16 : i32
    %175 = tpu.dynamic_rotate %169 by %c16_i32_134 dim 1 : vector<16x512xf32>, i32 -> vector<16x512xf32>
    %c32_135 = arith.constant 32 : index
    %c0_136 = arith.constant 0 : index
    %176 = vector.load %arg2[%c32_135, %c0_136] : memref<288x512xf32, #tpu.memory_space<vmem>>, vector<16x512xf32>
    %177 = arith.mulf %175, %176 : vector<16x512xf32>
    %178 = arith.truncf %177 : vector<16x512xf32> to vector<16x512xbf16>
    %c16_137 = arith.constant 16 : index
    %c0_138 = arith.constant 0 : index
    %179 = vector.load %arg10[%c16_137, %c0_138] : memref<288x512xbf16, #tpu.memory_space<vmem>>, vector<16x512xbf16>
    tpu.vector_store %arg10[%c16_137, %c0_138], %178 {strides = array<i32>} : memref<288x512xbf16, #tpu.memory_space<vmem>>, vector<16x512xbf16>,
    %c15_i32_139 = arith.constant 15 : i32
    %180 = tpu.dynamic_rotate %169 by %c15_i32_139 dim 1 : vector<16x512xf32>, i32 -> vector<16x512xf32>
    %c64_140 = arith.constant 64 : index
    %c0_141 = arith.constant 0 : index
    %181 = vector.load %arg2[%c64_140, %c0_141] : memref<288x512xf32, #tpu.memory_space<vmem>>, vector<16x512xf32>
    %182 = arith.mulf %180, %181 : vector<16x512xf32>
    %183 = arith.truncf %182 : vector<16x512xf32> to vector<16x512xbf16>
    %c32_142 = arith.constant 32 : index
    %c0_143 = arith.constant 0 : index
    %184 = vector.load %arg10[%c32_142, %c0_143] : memref<288x512xbf16, #tpu.memory_space<vmem>>, vector<16x512xbf16>
    tpu.vector_store %arg10[%c32_142, %c0_143], %183 {strides = array<i32>} : memref<288x512xbf16, #tpu.memory_space<vmem>>, vector<16x512xbf16>,
    %c1_i32_144 = arith.constant 1 : i32
    %185 = tpu.dynamic_rotate %169 by %c1_i32_144 dim 1 : vector<16x512xf32>, i32 -> vector<16x512xf32>
    %c96_145 = arith.constant 96 : index
    %c0_146 = arith.constant 0 : index
    %186 = vector.load %arg2[%c96_145, %c0_146] : memref<288x512xf32, #tpu.memory_space<vmem>>, vector<16x512xf32>
    %187 = arith.mulf %185, %186 : vector<16x512xf32>
    %188 = arith.truncf %187 : vector<16x512xf32> to vector<16x512xbf16>
    %c48_147 = arith.constant 48 : index
    %c0_148 = arith.constant 0 : index
    %189 = vector.load %arg10[%c48_147, %c0_148] : memref<288x512xbf16, #tpu.memory_space<vmem>>, vector<16x512xbf16>
    tpu.vector_store %arg10[%c48_147, %c0_148], %188 {strides = array<i32>} : memref<288x512xbf16, #tpu.memory_space<vmem>>, vector<16x512xbf16>,
    %190 = arith.truncf %169 : vector<16x512xf32> to vector<16x512xbf16>
    %c64_149 = arith.constant 64 : index
    %c0_150 = arith.constant 0 : index
    %191 = vector.load %arg10[%c64_149, %c0_150] : memref<288x512xbf16, #tpu.memory_space<vmem>>, vector<16x512xbf16>
    tpu.vector_store %arg10[%c64_149, %c0_150], %190 {strides = array<i32>} : memref<288x512xbf16, #tpu.memory_space<vmem>>, vector<16x512xbf16>,
    %c511_i32_151 = arith.constant 511 : i32
    %192 = tpu.dynamic_rotate %169 by %c511_i32_151 dim 1 : vector<16x512xf32>, i32 -> vector<16x512xf32>
    %c160_152 = arith.constant 160 : index
    %c0_153 = arith.constant 0 : index
    %193 = vector.load %arg2[%c160_152, %c0_153] : memref<288x512xf32, #tpu.memory_space<vmem>>, vector<16x512xf32>
    %194 = arith.mulf %192, %193 : vector<16x512xf32>
    %195 = arith.truncf %194 : vector<16x512xf32> to vector<16x512xbf16>
    %c80_154 = arith.constant 80 : index
    %c0_155 = arith.constant 0 : index
    %196 = vector.load %arg10[%c80_154, %c0_155] : memref<288x512xbf16, #tpu.memory_space<vmem>>, vector<16x512xbf16>
    tpu.vector_store %arg10[%c80_154, %c0_155], %195 {strides = array<i32>} : memref<288x512xbf16, #tpu.memory_space<vmem>>, vector<16x512xbf16>,
    %c497_i32_156 = arith.constant 497 : i32
    %197 = tpu.dynamic_rotate %169 by %c497_i32_156 dim 1 : vector<16x512xf32>, i32 -> vector<16x512xf32>
    %c192_157 = arith.constant 192 : index
    %c0_158 = arith.constant 0 : index
    %198 = vector.load %arg2[%c192_157, %c0_158] : memref<288x512xf32, #tpu.memory_space<vmem>>, vector<16x512xf32>
    %199 = arith.mulf %197, %198 : vector<16x512xf32>
    %200 = arith.truncf %199 : vector<16x512xf32> to vector<16x512xbf16>
    %c96_159 = arith.constant 96 : index
    %c0_160 = arith.constant 0 : index
    %201 = vector.load %arg10[%c96_159, %c0_160] : memref<288x512xbf16, #tpu.memory_space<vmem>>, vector<16x512xbf16>
    tpu.vector_store %arg10[%c96_159, %c0_160], %200 {strides = array<i32>} : memref<288x512xbf16, #tpu.memory_space<vmem>>, vector<16x512xbf16>,
    %c496_i32_161 = arith.constant 496 : i32
    %202 = tpu.dynamic_rotate %169 by %c496_i32_161 dim 1 : vector<16x512xf32>, i32 -> vector<16x512xf32>
    %c224_162 = arith.constant 224 : index
    %c0_163 = arith.constant 0 : index
    %203 = vector.load %arg2[%c224_162, %c0_163] : memref<288x512xf32, #tpu.memory_space<vmem>>, vector<16x512xf32>
    %204 = arith.mulf %202, %203 : vector<16x512xf32>
    %205 = arith.truncf %204 : vector<16x512xf32> to vector<16x512xbf16>
    %c112_164 = arith.constant 112 : index
    %c0_165 = arith.constant 0 : index
    %206 = vector.load %arg10[%c112_164, %c0_165] : memref<288x512xbf16, #tpu.memory_space<vmem>>, vector<16x512xbf16>
    tpu.vector_store %arg10[%c112_164, %c0_165], %205 {strides = array<i32>} : memref<288x512xbf16, #tpu.memory_space<vmem>>, vector<16x512xbf16>,
    %c495_i32_166 = arith.constant 495 : i32
    %207 = tpu.dynamic_rotate %169 by %c495_i32_166 dim 1 : vector<16x512xf32>, i32 -> vector<16x512xf32>
    %c256_167 = arith.constant 256 : index
    %c0_168 = arith.constant 0 : index
    %208 = vector.load %arg2[%c256_167, %c0_168] : memref<288x512xf32, #tpu.memory_space<vmem>>, vector<16x512xf32>
    %209 = arith.mulf %207, %208 : vector<16x512xf32>
    %210 = arith.truncf %209 : vector<16x512xf32> to vector<16x512xbf16>
    %c128_169 = arith.constant 128 : index
    %c0_170 = arith.constant 0 : index
    %211 = vector.load %arg10[%c128_169, %c0_170] : memref<288x512xbf16, #tpu.memory_space<vmem>>, vector<16x512xbf16>
    tpu.vector_store %arg10[%c128_169, %c0_170], %210 {strides = array<i32>} : memref<288x512xbf16, #tpu.memory_space<vmem>>, vector<16x512xbf16>,
    %c0_171 = arith.constant 0 : index
    %c0_172 = arith.constant 0 : index
    %212 = vector.load %arg6[%c0_171, %c0_172] : memref<48x144xbf16, #tpu.memory_space<vmem>>, vector<48x144xbf16>
    %c0_173 = arith.constant 0 : index
    %c0_174 = arith.constant 0 : index
    %213 = vector.load %arg10[%c0_173, %c0_174] : memref<288x512xbf16, #tpu.memory_space<vmem>>, vector<144x512xbf16>
    %cst_175 = arith.constant dense<0.000000e+00> : vector<48x512xf32>
    %214 = tpu.matmul %212, %213, %cst_175 {dimension_numbers = #tpu.dot_dimension_numbers<[1], [0], [0], [1], [0, 0, 1, 1], [], []>} : vector<48x144xbf16>, vector<144x512xbf16>, vector<48x512xf32> -> vector<48x512xf32>
    %215 = vector.extract_strided_slice %46 {offsets = [48, 0], sizes = [16, 512], strides = [1, 1]} : vector<96x512xf32> to vector<16x512xf32>
    %216 = vector.extract_strided_slice %100 {offsets = [32, 0], sizes = [16, 512], strides = [1, 1]} : vector<80x512xf32> to vector<16x512xf32>
    %217 = arith.addf %215, %216 : vector<16x512xf32>
    %218 = vector.extract_strided_slice %156 {offsets = [16, 0], sizes = [16, 512], strides = [1, 1]} : vector<64x512xf32> to vector<16x512xf32>
    %219 = arith.addf %217, %218 : vector<16x512xf32>
    %220 = vector.extract_strided_slice %214 {offsets = [0, 0], sizes = [16, 512], strides = [1, 1]} : vector<48x512xf32> to vector<16x512xf32>
    %221 = arith.addf %219, %220 : vector<16x512xf32>
    %222 = vector.extract_strided_slice %1 {offsets = [48, 0], sizes = [16, 1], strides = [1, 1]} : vector<96x1xf32> to vector<16x1xf32>
    %223 = vector.broadcast %222 : vector<16x1xf32> to vector<16x512xf32>
    %224 = arith.addf %221, %223 : vector<16x512xf32>
    %cst_176 = arith.constant 0.000000e+00 : f32
    %225 = vector.broadcast %cst_176 : f32 to vector<16x512xf32>
    %226 = arith.cmpf oge, %224, %225 : vector<16x512xf32>
    %cst_177 = arith.constant 2.000000e-01 : f32
    %227 = vector.broadcast %cst_177 : f32 to vector<16x512xf32>
    %228 = arith.mulf %227, %224 : vector<16x512xf32>
    %229 = arith.select %226, %224, %228 : vector<16x512xi1>, vector<16x512xf32>
    %c17_i32_178 = arith.constant 17 : i32
    %230 = tpu.dynamic_rotate %229 by %c17_i32_178 dim 1 : vector<16x512xf32>, i32 -> vector<16x512xf32>
    %c0_179 = arith.constant 0 : index
    %c0_180 = arith.constant 0 : index
    %231 = vector.load %arg2[%c0_179, %c0_180] : memref<288x512xf32, #tpu.memory_space<vmem>>, vector<16x512xf32>
    %232 = arith.mulf %230, %231 : vector<16x512xf32>
    %233 = arith.truncf %232 : vector<16x512xf32> to vector<16x512xbf16>
    %c0_181 = arith.constant 0 : index
    %c0_182 = arith.constant 0 : index
    %234 = vector.load %arg10[%c0_181, %c0_182] : memref<288x512xbf16, #tpu.memory_space<vmem>>, vector<16x512xbf16>
    tpu.vector_store %arg10[%c0_181, %c0_182], %233 {strides = array<i32>} : memref<288x512xbf16, #tpu.memory_space<vmem>>, vector<16x512xbf16>,
    %c16_i32_183 = arith.constant 16 : i32
    %235 = tpu.dynamic_rotate %229 by %c16_i32_183 dim 1 : vector<16x512xf32>, i32 -> vector<16x512xf32>
    %c32_184 = arith.constant 32 : index
    %c0_185 = arith.constant 0 : index
    %236 = vector.load %arg2[%c32_184, %c0_185] : memref<288x512xf32, #tpu.memory_space<vmem>>, vector<16x512xf32>
    %237 = arith.mulf %235, %236 : vector<16x512xf32>
    %238 = arith.truncf %237 : vector<16x512xf32> to vector<16x512xbf16>
    %c16_186 = arith.constant 16 : index
    %c0_187 = arith.constant 0 : index
    %239 = vector.load %arg10[%c16_186, %c0_187] : memref<288x512xbf16, #tpu.memory_space<vmem>>, vector<16x512xbf16>
    tpu.vector_store %arg10[%c16_186, %c0_187], %238 {strides = array<i32>} : memref<288x512xbf16, #tpu.memory_space<vmem>>, vector<16x512xbf16>,
    %c15_i32_188 = arith.constant 15 : i32
    %240 = tpu.dynamic_rotate %229 by %c15_i32_188 dim 1 : vector<16x512xf32>, i32 -> vector<16x512xf32>
    %c64_189 = arith.constant 64 : index
    %c0_190 = arith.constant 0 : index
    %241 = vector.load %arg2[%c64_189, %c0_190] : memref<288x512xf32, #tpu.memory_space<vmem>>, vector<16x512xf32>
    %242 = arith.mulf %240, %241 : vector<16x512xf32>
    %243 = arith.truncf %242 : vector<16x512xf32> to vector<16x512xbf16>
    %c32_191 = arith.constant 32 : index
    %c0_192 = arith.constant 0 : index
    %244 = vector.load %arg10[%c32_191, %c0_192] : memref<288x512xbf16, #tpu.memory_space<vmem>>, vector<16x512xbf16>
    tpu.vector_store %arg10[%c32_191, %c0_192], %243 {strides = array<i32>} : memref<288x512xbf16, #tpu.memory_space<vmem>>, vector<16x512xbf16>,
    %c1_i32_193 = arith.constant 1 : i32
    %245 = tpu.dynamic_rotate %229 by %c1_i32_193 dim 1 : vector<16x512xf32>, i32 -> vector<16x512xf32>
    %c96_194 = arith.constant 96 : index
    %c0_195 = arith.constant 0 : index
    %246 = vector.load %arg2[%c96_194, %c0_195] : memref<288x512xf32, #tpu.memory_space<vmem>>, vector<16x512xf32>
    %247 = arith.mulf %245, %246 : vector<16x512xf32>
    %248 = arith.truncf %247 : vector<16x512xf32> to vector<16x512xbf16>
    %c48_196 = arith.constant 48 : index
    %c0_197 = arith.constant 0 : index
    %249 = vector.load %arg10[%c48_196, %c0_197] : memref<288x512xbf16, #tpu.memory_space<vmem>>, vector<16x512xbf16>
    tpu.vector_store %arg10[%c48_196, %c0_197], %248 {strides = array<i32>} : memref<288x512xbf16, #tpu.memory_space<vmem>>, vector<16x512xbf16>,
    %250 = arith.truncf %229 : vector<16x512xf32> to vector<16x512xbf16>
    %c64_198 = arith.constant 64 : index
    %c0_199 = arith.constant 0 : index
    %251 = vector.load %arg10[%c64_198, %c0_199] : memref<288x512xbf16, #tpu.memory_space<vmem>>, vector<16x512xbf16>
    tpu.vector_store %arg10[%c64_198, %c0_199], %250 {strides = array<i32>} : memref<288x512xbf16, #tpu.memory_space<vmem>>, vector<16x512xbf16>,
    %c511_i32_200 = arith.constant 511 : i32
    %252 = tpu.dynamic_rotate %229 by %c511_i32_200 dim 1 : vector<16x512xf32>, i32 -> vector<16x512xf32>
    %c160_201 = arith.constant 160 : index
    %c0_202 = arith.constant 0 : index
    %253 = vector.load %arg2[%c160_201, %c0_202] : memref<288x512xf32, #tpu.memory_space<vmem>>, vector<16x512xf32>
    %254 = arith.mulf %252, %253 : vector<16x512xf32>
    %255 = arith.truncf %254 : vector<16x512xf32> to vector<16x512xbf16>
    %c80_203 = arith.constant 80 : index
    %c0_204 = arith.constant 0 : index
    %256 = vector.load %arg10[%c80_203, %c0_204] : memref<288x512xbf16, #tpu.memory_space<vmem>>, vector<16x512xbf16>
    tpu.vector_store %arg10[%c80_203, %c0_204], %255 {strides = array<i32>} : memref<288x512xbf16, #tpu.memory_space<vmem>>, vector<16x512xbf16>,
    %c497_i32_205 = arith.constant 497 : i32
    %257 = tpu.dynamic_rotate %229 by %c497_i32_205 dim 1 : vector<16x512xf32>, i32 -> vector<16x512xf32>
    %c192_206 = arith.constant 192 : index
    %c0_207 = arith.constant 0 : index
    %258 = vector.load %arg2[%c192_206, %c0_207] : memref<288x512xf32, #tpu.memory_space<vmem>>, vector<16x512xf32>
    %259 = arith.mulf %257, %258 : vector<16x512xf32>
    %260 = arith.truncf %259 : vector<16x512xf32> to vector<16x512xbf16>
    %c96_208 = arith.constant 96 : index
    %c0_209 = arith.constant 0 : index
    %261 = vector.load %arg10[%c96_208, %c0_209] : memref<288x512xbf16, #tpu.memory_space<vmem>>, vector<16x512xbf16>
    tpu.vector_store %arg10[%c96_208, %c0_209], %260 {strides = array<i32>} : memref<288x512xbf16, #tpu.memory_space<vmem>>, vector<16x512xbf16>,
    %c496_i32_210 = arith.constant 496 : i32
    %262 = tpu.dynamic_rotate %229 by %c496_i32_210 dim 1 : vector<16x512xf32>, i32 -> vector<16x512xf32>
    %c224_211 = arith.constant 224 : index
    %c0_212 = arith.constant 0 : index
    %263 = vector.load %arg2[%c224_211, %c0_212] : memref<288x512xf32, #tpu.memory_space<vmem>>, vector<16x512xf32>
    %264 = arith.mulf %262, %263 : vector<16x512xf32>
    %265 = arith.truncf %264 : vector<16x512xf32> to vector<16x512xbf16>
    %c112_213 = arith.constant 112 : index
    %c0_214 = arith.constant 0 : index
    %266 = vector.load %arg10[%c112_213, %c0_214] : memref<288x512xbf16, #tpu.memory_space<vmem>>, vector<16x512xbf16>
    tpu.vector_store %arg10[%c112_213, %c0_214], %265 {strides = array<i32>} : memref<288x512xbf16, #tpu.memory_space<vmem>>, vector<16x512xbf16>,
    %c495_i32_215 = arith.constant 495 : i32
    %267 = tpu.dynamic_rotate %229 by %c495_i32_215 dim 1 : vector<16x512xf32>, i32 -> vector<16x512xf32>
    %c256_216 = arith.constant 256 : index
    %c0_217 = arith.constant 0 : index
    %268 = vector.load %arg2[%c256_216, %c0_217] : memref<288x512xf32, #tpu.memory_space<vmem>>, vector<16x512xf32>
    %269 = arith.mulf %267, %268 : vector<16x512xf32>
    %270 = arith.truncf %269 : vector<16x512xf32> to vector<16x512xbf16>
    %c128_218 = arith.constant 128 : index
    %c0_219 = arith.constant 0 : index
    %271 = vector.load %arg10[%c128_218, %c0_219] : memref<288x512xbf16, #tpu.memory_space<vmem>>, vector<16x512xbf16>
    tpu.vector_store %arg10[%c128_218, %c0_219], %270 {strides = array<i32>} : memref<288x512xbf16, #tpu.memory_space<vmem>>, vector<16x512xbf16>,
    %c0_220 = arith.constant 0 : index
    %c0_221 = arith.constant 0 : index
    %272 = vector.load %arg7[%c0_220, %c0_221] : memref<32x144xbf16, #tpu.memory_space<vmem>>, vector<32x144xbf16>
    %c0_222 = arith.constant 0 : index
    %c0_223 = arith.constant 0 : index
    %273 = vector.load %arg10[%c0_222, %c0_223] : memref<288x512xbf16, #tpu.memory_space<vmem>>, vector<144x512xbf16>
    %cst_224 = arith.constant dense<0.000000e+00> : vector<32x512xf32>
    %274 = tpu.matmul %272, %273, %cst_224 {dimension_numbers = #tpu.dot_dimension_numbers<[1], [0], [0], [1], [0, 0, 1, 1], [], []>} : vector<32x144xbf16>, vector<144x512xbf16>, vector<32x512xf32> -> vector<32x512xf32>
    %275 = vector.extract_strided_slice %46 {offsets = [64, 0], sizes = [32, 512], strides = [1, 1]} : vector<96x512xf32> to vector<32x512xf32>
    %276 = vector.extract_strided_slice %100 {offsets = [48, 0], sizes = [32, 512], strides = [1, 1]} : vector<80x512xf32> to vector<32x512xf32>
    %277 = arith.addf %275, %276 : vector<32x512xf32>
    %278 = vector.extract_strided_slice %156 {offsets = [32, 0], sizes = [32, 512], strides = [1, 1]} : vector<64x512xf32> to vector<32x512xf32>
    %279 = arith.addf %277, %278 : vector<32x512xf32>
    %280 = vector.extract_strided_slice %214 {offsets = [16, 0], sizes = [32, 512], strides = [1, 1]} : vector<48x512xf32> to vector<32x512xf32>
    %281 = arith.addf %279, %280 : vector<32x512xf32>
    %282 = arith.addf %281, %274 : vector<32x512xf32>
    %283 = vector.extract_strided_slice %1 {offsets = [64, 0], sizes = [32, 1], strides = [1, 1]} : vector<96x1xf32> to vector<32x1xf32>
    %284 = vector.broadcast %283 : vector<32x1xf32> to vector<32x512xf32>
    %285 = arith.addf %282, %284 : vector<32x512xf32>
    %cst_225 = arith.constant 2.000000e-01 : f32
    %286 = vector.broadcast %cst_225 : f32 to vector<32x512xf32>
    %287 = arith.mulf %286, %285 : vector<32x512xf32>
    %288 = arith.addf %287, %0 : vector<32x512xf32>
    %cst_226 = arith.constant 0.000000e+00 : f32
    %289 = vector.broadcast %cst_226 : f32 to vector<32x512xf32>
    %290 = arith.cmpf oge, %288, %289 : vector<32x512xf32>
    %cst_227 = arith.constant 2.000000e-01 : f32
    %291 = vector.broadcast %cst_227 : f32 to vector<32x512xf32>
    %292 = arith.mulf %291, %288 : vector<32x512xf32>
    %293 = arith.select %290, %288, %292 : vector<32x512xi1>, vector<32x512xf32>
    %c0_228 = arith.constant 0 : index
    %c0_229 = arith.constant 0 : index
    %294 = vector.load %arg9[%c0_228, %c0_229] : memref<32x512xf32, #tpu.memory_space<vmem>>, vector<32x512xf32>
    tpu.vector_store %arg9[%c0_228, %c0_229], %293 {strides = array<i32>} : memref<32x512xf32, #tpu.memory_space<vmem>>, vector<32x512xf32>,
    return
  }
  func.func @transform_0(%arg0: i32) -> (i32, i32) {
    %c0_i32 = arith.constant 0 : i32
    %c0_i32_0 = arith.constant 0 : i32
    %c0_i32_1 = arith.constant 0 : i32
    return %c0_i32, %c0_i32_0 : i32, i32
  }
  func.func @transform_1(%arg0: i32) -> (i32, i32) {
    %c0_i32 = arith.constant 0 : i32
    %c0_i32_0 = arith.constant 0 : i32
    %c0_i32_1 = arith.constant 0 : i32
    return %c0_i32, %c0_i32_0 : i32, i32
  }
  func.func @transform_2(%arg0: i32) -> (i32, i32) {
    %c0_i32 = arith.constant 0 : i32
    %c0_i32_0 = arith.constant 0 : i32
    %c0_i32_1 = arith.constant 0 : i32
    return %c0_i32, %c0_i32_0 : i32, i32
  }
  func.func @transform_3(%arg0: i32) -> (i32, i32) {
    %c0_i32 = arith.constant 0 : i32
    %c0_i32_0 = arith.constant 0 : i32
    %c0_i32_1 = arith.constant 0 : i32
    return %c0_i32, %c0_i32_0 : i32, i32
  }
  func.func @transform_4(%arg0: i32) -> (i32, i32) {
    %c0_i32 = arith.constant 0 : i32
    %c0_i32_0 = arith.constant 0 : i32
    %c0_i32_1 = arith.constant 0 : i32
    return %c0_i32, %c0_i32_0 : i32, i32
  }
  func.func @transform_5(%arg0: i32) -> (i32, i32) {
    %c0_i32 = arith.constant 0 : i32
    %c0_i32_0 = arith.constant 0 : i32
    %c0_i32_1 = arith.constant 0 : i32
    return %c0_i32, %c0_i32_0 : i32, i32
  }
  func.func @transform_6(%arg0: i32) -> (i32, i32) {
    %c0_i32 = arith.constant 0 : i32
    %c0_i32_0 = arith.constant 0 : i32
    %c0_i32_1 = arith.constant 0 : i32
    return %c0_i32, %c0_i32_0 : i32, i32
  }
  func.func @transform_7(%arg0: i32) -> (i32, i32) {
    %c0_i32 = arith.constant 0 : i32
    %c0_i32_0 = arith.constant 0 : i32
    %c0_i32_1 = arith.constant 0 : i32
    return %c0_i32, %c0_i32_0 : i32, i32
  }
  func.func @transform_8(%arg0: i32) -> (i32, i32) {
    %c0_i32 = arith.constant 0 : i32
    %c0_i32_0 = arith.constant 0 : i32
    %c0_i32_1 = arith.constant 0 : i32
    return %c0_i32, %c0_i32_0 : i32, i32
  }
}

</mosaic_0001>

<llo_original>
// kernel: rdb5c_forward.1
$region0: #{rdb5c_forward.1}
  #allocation0 [shape = 'u32[]', space=smem, size = 0x4, offset = 0x4, fixed_abs, tag = 'smem constant byte address 0x4 - core index']
  #allocation1 [shape = 'u32[144,128]{1,0:T(1,128)}', space=vmem, size = 0x12000, scoped, tag = 'internal scratch']
  #allocation2 [shape = 'bf16[288,512]{1,0:T(16,128)(2,1)}', space=vmem, size = 0x48000, scoped, tag = 'scratch operand']
  %s0 = inlined_call_operand.vmem [shape: f32[32,512], index: 0, kind: input, shape index: {}]
  %s1 = inlined_call_operand.vmem [shape: f32[288,512], index: 1, kind: input, shape index: {}]
  %s2 = inlined_call_operand.hbm [shape: bf16[96,288], index: 2, kind: input, shape index: {}]
  %s3 = inlined_call_operand.vmem [shape: bf16[80,144], index: 3, kind: input, shape index: {}]
  %s4 = inlined_call_operand.hbm [shape: bf16[64,144], index: 4, kind: input, shape index: {}]
  %s5 = inlined_call_operand.hbm [shape: bf16[48,144], index: 5, kind: input, shape index: {}]
  %s6 = inlined_call_operand.hbm [shape: bf16[32,144], index: 6, kind: input, shape index: {}]
  %s7 = inlined_call_operand.vmem [shape: f32[96,1], index: 7, kind: input, shape index: {}]
  %s8 = inlined_call_operand.vmem [shape: f32[32,512], index: 8, kind: output, shape index: {}]
  %s9 = sld [smem:[#allocation0]]
  $region58: #{rdb5c_forward.1} parent=0
    _
  %s11 = ssub.s32 1, %s9
  %s12 = scalar_select 0, %s11, %s9
  $region1: #{rdb5c_forward.1} parent=0
    #allocation3 [shape = 'u8[73728]{0}', space=vmem, size = 0x12000, scoped, tag = 'input window, operand 2, single buffered']
    #allocation4 [shape = 's32[1]{0}', space=sflag, size = 0x4, scoped, tag = 'scoped memory for rdb5c_forward.1']
    #allocation5 [shape = 'u8[32768]{0}', space=vmem, size = 0x8000, scoped, tag = 'input window, operand 4, single buffered']
    #allocation6 [shape = 's32[1]{0}', space=sflag, size = 0x4, scoped, tag = 'scoped memory for rdb5c_forward.1']
    #allocation7 [shape = 'u8[24576]{0}', space=vmem, size = 0x6000, scoped, tag = 'input window, operand 5, single buffered']
    #allocation8 [shape = 'u8[16384]{0}', space=vmem, size = 0x4000, scoped, tag = 'input window, operand 6, single buffered']
    #allocation9 [shape = 's32[1]{0}', space=sflag, size = 0x4, scoped, tag = 'scoped memory for rdb5c_forward.1']
    %13 = vsyncpa [#allocation4], 0
    %14 = vsyncpa [#allocation6], 0
    %15 = vsyncpa [#allocation9], 0
    // Predicated region
    $region2: #{rdb5c_forward.1} parent=1 // pred_check
      _
    $region3: #{rdb5c_forward.1} parent=1 // pred_check_branch
      %17 = sbr.rel (0) target = $region5
    $region4: #{rdb5c_forward.1} parent=1 // pred_region
      _
    $region5: #{rdb5c_forward.1} parent=1 // pred_fallthru
      _
    // Predicated region
    $region6: #{rdb5c_forward.1} parent=1 // pred_check
      _
    $region7: #{rdb5c_forward.1} parent=1 // pred_check_branch
      %19 = sbr.rel (0) target = $region9
    $region8: #{rdb5c_forward.1} parent=1 // pred_region
      _
    $region9: #{rdb5c_forward.1} parent=1 // pred_fallthru
      _
    // Predicated region
    $region10: #{rdb5c_forward.1} parent=1 // pred_check
      _
    $region11: #{rdb5c_forward.1} parent=1 // pred_check_branch
      %21 = sbr.rel (0) target = $region13
    $region12: #{rdb5c_forward.1} parent=1 // pred_region
      %s23 = ssub.s32 2304, 2304
      %24 = vsyncadd [#allocation4], %s23
      %s25 = sshll.u32 [#allocation3], 4
      %s26 = int_to_ptr.vmem [resolvable:$true] %s25
      %31 = dma.hbm_to_vmem [thread:$0]  %s2, 2304, %s26, [#allocation4], 192, 192, 12
    $region13: #{rdb5c_forward.1} parent=1 // pred_fallthru
      _
    // Predicated region
    $region14: #{rdb5c_forward.1} parent=1 // pred_check
      _
    $region15: #{rdb5c_forward.1} parent=1 // pred_check_branch
      %33 = sbr.rel (0) target = $region17
    $region16: #{rdb5c_forward.1} parent=1 // pred_region
      _
    $region17: #{rdb5c_forward.1} parent=1 // pred_fallthru
      _
    // Predicated region
    $region18: #{rdb5c_forward.1} parent=1 // pred_check
      _
    $region19: #{rdb5c_forward.1} parent=1 // pred_check_branch
      %35 = sbr.rel (0) target = $region21
    $region20: #{rdb5c_forward.1} parent=1 // pred_region
      %s37 = ssub.s32 1024, 1024
      %38 = vsyncadd [#allocation6], %s37
      %s39 = sshll.u32 [#allocation5], 4
      %s40 = int_to_ptr.vmem [resolvable:$true] %s39
      %45 = dma.hbm_to_vmem [thread:$0]  %s4, 1024, %s40, [#allocation6], 128, 128, 8
    $region21: #{rdb5c_forward.1} parent=1 // pred_fallthru
      _
    // Predicated region
    $region22: #{rdb5c_forward.1} parent=1 // pred_check
      _
    $region23: #{rdb5c_forward.1} parent=1 // pred_check_branch
      %47 = sbr.rel (0) target = $region25
    $region24: #{rdb5c_forward.1} parent=1 // pred_region
      %s49 = ssub.s32 768, 768
      %50 = vsyncadd [#allocation6], %s49
      %s51 = sshll.u32 [#allocation7], 4
      %s52 = int_to_ptr.vmem [resolvable:$true] %s51
      %57 = dma.hbm_to_vmem [thread:$0]  %s5, 768, %s52, [#allocation6], 128, 128, 8
    $region25: #{rdb5c_forward.1} parent=1 // pred_fallthru
      _
    // Predicated region
    $region26: #{rdb5c_forward.1} parent=1 // pred_check
      _
    $region27: #{rdb5c_forward.1} parent=1 // pred_check_branch
      %59 = sbr.rel (0) target = $region29
    $region28: #{rdb5c_forward.1} parent=1 // pred_region
      %s61 = ssub.s32 512, 512
      %62 = vsyncadd [#allocation9], %s61
      %s63 = sshll.u32 [#allocation8], 4
      %s64 = int_to_ptr.vmem [resolvable:$true] %s63
      %69 = dma.hbm_to_vmem [thread:$0]  %s6, 512, %s64, [#allocation9], 128, 128, 8
    $region29: #{rdb5c_forward.1} parent=1 // pred_fallthru
      _
    // Predicated region
    $region30: #{rdb5c_forward.1} parent=1 // pred_check
      _
    $region31: #{rdb5c_forward.1} parent=1 // pred_check_branch
      %71 = sbr.rel (0) target = $region33
    $region32: #{rdb5c_forward.1} parent=1 // pred_region
      _
    $region33: #{rdb5c_forward.1} parent=1 // pred_fallthru
      _
    // Predicated region
    $region34: #{rdb5c_forward.1} parent=1 // pred_check
      _
    $region35: #{rdb5c_forward.1} parent=1 // pred_check_branch
      %73 = sbr.rel (0) target = $region37
    $region36: #{rdb5c_forward.1} parent=1 // pred_region
      %74 = dma.done [#allocation4], 2304
    $region37: #{rdb5c_forward.1} parent=1 // pred_fallthru
      _
    // Predicated region
    $region38: #{rdb5c_forward.1} parent=1 // pred_check
      _
    $region39: #{rdb5c_forward.1} parent=1 // pred_check_branch
      %76 = sbr.rel (0) target = $region41
    $region40: #{rdb5c_forward.1} parent=1 // pred_region
      %77 = dma.done [#allocation6], 1024
    $region41: #{rdb5c_forward.1} parent=1 // pred_fallthru
      _
    // Predicated region
    $region42: #{rdb5c_forward.1} parent=1 // pred_check
      _
    $region43: #{rdb5c_forward.1} parent=1 // pred_check_branch
      %79 = sbr.rel (0) target = $region45
    $region44: #{rdb5c_forward.1} parent=1 // pred_region
      %80 = dma.done [#allocation6], 768
    $region45: #{rdb5c_forward.1} parent=1 // pred_fallthru
      _
    // Predicated region
    $region46: #{rdb5c_forward.1} parent=1 // pred_check
      _
    $region47: #{rdb5c_forward.1} parent=1 // pred_check_branch
      %82 = sbr.rel (0) target = $region49
    $region48: #{rdb5c_forward.1} parent=1 // pred_region
      %83 = dma.done [#allocation9], 512
    $region49: #{rdb5c_forward.1} parent=1 // pred_fallthru
      _
    %v85 = vld [vmem:[%s0] sm:$0xff]
    %v86 = vld [vmem:[%s0 + $0x8] sm:$0xff]
    %v87 = vld [vmem:[%s0 + $0x10] sm:$0xff]
    %v88 = vld [vmem:[%s0 + $0x18] sm:$0xff]
    %v89 = vld [vmem:[%s0 + $0x20] sm:$0xff]
    %v90 = vld [vmem:[%s0 + $0x28] sm:$0xff]
    %v91 = vld [vmem:[%s0 + $0x30] sm:$0xff]
    %v92 = vld [vmem:[%s0 + $0x38] sm:$0xff]
    %v93 = vld [vmem:[%s0 + $0x40] sm:$0xff]
    %v94 = vld [vmem:[%s0 + $0x48] sm:$0xff]
    %v95 = vld [vmem:[%s0 + $0x50] sm:$0xff]
    %v96 = vld [vmem:[%s0 + $0x58] sm:$0xff]
    %v97 = vld [vmem:[%s0 + $0x60] sm:$0xff]
    %v98 = vld [vmem:[%s0 + $0x68] sm:$0xff]
    %v99 = vld [vmem:[%s0 + $0x70] sm:$0xff]
    %v100 = vld [vmem:[%s0 + $0x78] sm:$0xff]
    %v101 = vld [vmem:[%s7] sm:$0xff]
    %v102 = vld [vmem:[%s7 + $0x8] sm:$0xff]
    %v103 = vld [vmem:[%s7 + $0x10] sm:$0xff]
    %v104 = vld [vmem:[%s7 + $0x18] sm:$0xff]
    %v105 = vld [vmem:[%s7 + $0x20] sm:$0xff]
    %v106 = vld [vmem:[%s7 + $0x28] sm:$0xff]
    %v107 = vld [vmem:[%s7 + $0x30] sm:$0xff]
    %v108 = vld [vmem:[%s7 + $0x38] sm:$0xff]
    %v109 = vld [vmem:[%s7 + $0x40] sm:$0xff]
    %v110 = vld [vmem:[%s7 + $0x48] sm:$0xff]
    %v111 = vld [vmem:[%s7 + $0x50] sm:$0xff]
    %v112 = vld [vmem:[%s7 + $0x58] sm:$0xff]
    %113 = vrot.lane.b32.xlu0 %v85, 17
    %v114 = vpop.permute.xlu0 %113
    %115 = vrot.lane.b32.xlu0 %v89, 17
    %v116 = vpop.permute.xlu0 %115
    %117 = vrot.lane.b32.xlu0 %v93, 17
    %v118 = vpop.permute.xlu0 %117
    %119 = vrot.lane.b32.xlu0 %v97, 17
    %v120 = vpop.permute.xlu0 %119
    %121 = vrot.lane.b32.xlu0 %v86, 17
    %v122 = vpop.permute.xlu0 %121
    %123 = vrot.lane.b32.xlu0 %v90, 17
    %v124 = vpop.permute.xlu0 %123
    %125 = vrot.lane.b32.xlu0 %v94, 17
    %v126 = vpop.permute.xlu0 %125
    %127 = vrot.lane.b32.xlu0 %v98, 17
    %v128 = vpop.permute.xlu0 %127
    %129 = vrot.lane.b32.xlu0 %v87, 17
    %v130 = vpop.permute.xlu0 %129
    %131 = vrot.lane.b32.xlu0 %v91, 17
    %v132 = vpop.permute.xlu0 %131
    %133 = vrot.lane.b32.xlu0 %v95, 17
    %v134 = vpop.permute.xlu0 %133
    %135 = vrot.lane.b32.xlu0 %v99, 17
    %v136 = vpop.permute.xlu0 %135
    %137 = vrot.lane.b32.xlu0 %v88, 17
    %v138 = vpop.permute.xlu0 %137
    %139 = vrot.lane.b32.xlu0 %v92, 17
    %v140 = vpop.permute.xlu0 %139
    %141 = vrot.lane.b32.xlu0 %v96, 17
    %v142 = vpop.permute.xlu0 %141
    %143 = vrot.lane.b32.xlu0 %v100, 17
    %v144 = vpop.permute.xlu0 %143
    %v145 = vlaneseq
    %v146 = vand.u32 %v145, 127
    %vm147 = vcmp.lt.s32.totalorder %v146, 17
    %v148 = vsel %vm147, %v130, %v138
    %v149 = vsel %vm147, %v132, %v140
    %v150 = vsel %vm147, %v134, %v142
    %v151 = vsel %vm147, %v136, %v144
    %v152 = vsel %vm147, %v122, %v130
    %v153 = vsel %vm147, %v124, %v132
    %v154 = vsel %vm147, %v126, %v134
    %v155 = vsel %vm147, %v128, %v136
    %v156 = vsel %vm147, %v114, %v122
    %v157 = vsel %vm147, %v116, %v124
    %v158 = vsel %vm147, %v118, %v126
    %v159 = vsel %vm147, %v120, %v128
    %v160 = vsel %vm147, %v138, %v114
    %v161 = vsel %vm147, %v140, %v116
    %v162 = vsel %vm147, %v142, %v118
    %v163 = vsel %vm147, %v144, %v120
    %v164 = vld [vmem:[%s1] sm:$0xff]
    %v165 = vld [vmem:[%s1 + $0x8] sm:$0xff]
    %v166 = vld [vmem:[%s1 + $0x10] sm:$0xff]
    %v167 = vld [vmem:[%s1 + $0x18] sm:$0xff]
    %v168 = vld [vmem:[%s1 + $0x20] sm:$0xff]
    %v169 = vld [vmem:[%s1 + $0x28] sm:$0xff]
    %v170 = vld [vmem:[%s1 + $0x30] sm:$0xff]
    %v171 = vld [vmem:[%s1 + $0x38] sm:$0xff]
    %v172 = vld [vmem:[%s1 + $0x40] sm:$0xff]
    %v173 = vld [vmem:[%s1 + $0x48] sm:$0xff]
    %v174 = vld [vmem:[%s1 + $0x50] sm:$0xff]
    %v175 = vld [vmem:[%s1 + $0x58] sm:$0xff]
    %v176 = vld [vmem:[%s1 + $0x60] sm:$0xff]
    %v177 = vld [vmem:[%s1 + $0x68] sm:$0xff]
    %v178 = vld [vmem:[%s1 + $0x70] sm:$0xff]
    %v179 = vld [vmem:[%s1 + $0x78] sm:$0xff]
    %v180 = vmul.f32 %v160, %v164
    %v181 = vmul.f32 %v156, %v165
    %v182 = vmul.f32 %v152, %v166
    %v183 = vmul.f32 %v148, %v167
    %v184 = vmul.f32 %v161, %v168
    %v185 = vmul.f32 %v157, %v169
    %v186 = vmul.f32 %v153, %v170
    %v187 = vmul.f32 %v149, %v171
    %v188 = vmul.f32 %v162, %v172
    %v189 = vmul.f32 %v158, %v173
    %v190 = vmul.f32 %v154, %v174
    %v191 = vmul.f32 %v150, %v175
    %v192 = vmul.f32 %v163, %v176
    %v193 = vmul.f32 %v159, %v177
    %v194 = vmul.f32 %v155, %v178
    %v195 = vmul.f32 %v151, %v179
    %v196 = vpack.c.bf16 %v184, %v180
    %v197 = vpack.c.bf16 %v185, %v181
    %v198 = vpack.c.bf16 %v186, %v182
    %v199 = vpack.c.bf16 %v187, %v183
    %v200 = vpack.c.bf16 %v192, %v188
    %v201 = vpack.c.bf16 %v193, %v189
    %v202 = vpack.c.bf16 %v194, %v190
    %v203 = vpack.c.bf16 %v195, %v191
    %204 = vst [vmem:[#allocation2] sm:$0xff] %v196
    %205 = vst [vmem:[#allocation2 + $0x8] sm:$0xff] %v197
    %206 = vst [vmem:[#allocation2 + $0x10] sm:$0xff] %v198
    %207 = vst [vmem:[#allocation2 + $0x18] sm:$0xff] %v199
    %208 = vst [vmem:[#allocation2 + $0x20] sm:$0xff] %v200
    %209 = vst [vmem:[#allocation2 + $0x28] sm:$0xff] %v201
    %210 = vst [vmem:[#allocation2 + $0x30] sm:$0xff] %v202
    %211 = vst [vmem:[#allocation2 + $0x38] sm:$0xff] %v203
    %212 = vrot.lane.b32.xlu0 %v85, 16
    %v213 = vpop.permute.xlu0 %212
    %214 = vrot.lane.b32.xlu0 %v89, 16
    %v215 = vpop.permute.xlu0 %214
    %216 = vrot.lane.b32.xlu0 %v93, 16
    %v217 = vpop.permute.xlu0 %216
    %218 = vrot.lane.b32.xlu0 %v97, 16
    %v219 = vpop.permute.xlu0 %218
    %220 = vrot.lane.b32.xlu0 %v86, 16
    %v221 = vpop.permute.xlu0 %220
    %222 = vrot.lane.b32.xlu0 %v90, 16
    %v223 = vpop.permute.xlu0 %222
    %224 = vrot.lane.b32.xlu0 %v94, 16
    %v225 = vpop.permute.xlu0 %224
    %226 = vrot.lane.b32.xlu0 %v98, 16
    %v227 = vpop.permute.xlu0 %226
    %228 = vrot.lane.b32.xlu0 %v87, 16
    %v229 = vpop.permute.xlu0 %228
    %230 = vrot.lane.b32.xlu0 %v91, 16
    %v231 = vpop.permute.xlu0 %230
    %232 = vrot.lane.b32.xlu0 %v95, 16
    %v233 = vpop.permute.xlu0 %232
    %234 = vrot.lane.b32.xlu0 %v99, 16
    %v235 = vpop.permute.xlu0 %234
    %236 = vrot.lane.b32.xlu0 %v88, 16
    %v237 = vpop.permute.xlu0 %236
    %238 = vrot.lane.b32.xlu0 %v92, 16
    %v239 = vpop.permute.xlu0 %238
    %240 = vrot.lane.b32.xlu0 %v96, 16
    %v241 = vpop.permute.xlu0 %240
    %242 = vrot.lane.b32.xlu0 %v100, 16
    %v243 = vpop.permute.xlu0 %242
    %vm244 = vcmp.lt.s32.totalorder %v146, 16
    %v245 = vsel %vm244, %v229, %v237
    %v246 = vsel %vm244, %v231, %v239
    %v247 = vsel %vm244, %v233, %v241
    %v248 = vsel %vm244, %v235, %v243
    %v249 = vsel %vm244, %v221, %v229
    %v250 = vsel %vm244, %v223, %v231
    %v251 = vsel %vm244, %v225, %v233
    %v252 = vsel %vm244, %v227, %v235
    %v253 = vsel %vm244, %v213, %v221
    %v254 = vsel %vm244, %v215, %v223
    %v255 = vsel %vm244, %v217, %v225
    %v256 = vsel %vm244, %v219, %v227
    %v257 = vsel %vm244, %v237, %v213
    %v258 = vsel %vm244, %v239, %v215
    %v259 = vsel %vm244, %v241, %v217
    %v260 = vsel %vm244, %v243, %v219
    %v261 = vld [vmem:[%s1 + $0x80] sm:$0xff]
    %v262 = vld [vmem:[%s1 + $0x88] sm:$0xff]
    %v263 = vld [vmem:[%s1 + $0x90] sm:$0xff]
    %v264 = vld [vmem:[%s1 + $0x98] sm:$0xff]
    %v265 = vld [vmem:[%s1 + $0xa0] sm:$0xff]
    %v266 = vld [vmem:[%s1 + $0xa8] sm:$0xff]
    %v267 = vld [vmem:[%s1 + $0xb0] sm:$0xff]
    %v268 = vld [vmem:[%s1 + $0xb8] sm:$0xff]
    %v269 = vld [vmem:[%s1 + $0xc0] sm:$0xff]
    %v270 = vld [vmem:[%s1 + $0xc8] sm:$0xff]
    %v271 = vld [vmem:[%s1 + $0xd0] sm:$0xff]
    %v272 = vld [vmem:[%s1 + $0xd8] sm:$0xff]
    %v273 = vld [vmem:[%s1 + $0xe0] sm:$0xff]
    %v274 = vld [vmem:[%s1 + $0xe8] sm:$0xff]
    %v275 = vld [vmem:[%s1 + $0xf0] sm:$0xff]
    %v276 = vld [vmem:[%s1 + $0xf8] sm:$0xff]
    %v277 = vmul.f32 %v257, %v261
    %v278 = vmul.f32 %v253, %v262
    %v279 = vmul.f32 %v249, %v263
    %v280 = vmul.f32 %v245, %v264
    %v281 = vmul.f32 %v258, %v265
    %v282 = vmul.f32 %v254, %v266
    %v283 = vmul.f32 %v250, %v267
    %v284 = vmul.f32 %v246, %v268
    %v285 = vmul.f32 %v259, %v269
    %v286 = vmul.f32 %v255, %v270
    %v287 = vmul.f32 %v251, %v271
    %v288 = vmul.f32 %v247, %v272
    %v289 = vmul.f32 %v260, %v273
    %v290 = vmul.f32 %v256, %v274
    %v291 = vmul.f32 %v252, %v275
    %v292 = vmul.f32 %v248, %v276
    %v293 = vpack.c.bf16 %v281, %v277
    %v294 = vpack.c.bf16 %v282, %v278
    %v295 = vpack.c.bf16 %v283, %v279
    %v296 = vpack.c.bf16 %v284, %v280
    %v297 = vpack.c.bf16 %v289, %v285
    %v298 = vpack.c.bf16 %v290, %v286
    %v299 = vpack.c.bf16 %v291, %v287
    %v300 = vpack.c.bf16 %v292, %v288
    %301 = vst [vmem:[#allocation2 + $0x40] sm:$0xff] %v293
    %302 = vst [vmem:[#allocation2 + $0x48] sm:$0xff] %v294
    %303 = vst [vmem:[#allocation2 + $0x50] sm:$0xff] %v295
    %304 = vst [vmem:[#allocation2 + $0x58] sm:$0xff] %v296
    %305 = vst [vmem:[#allocation2 + $0x60] sm:$0xff] %v297
    %306 = vst [vmem:[#allocation2 + $0x68] sm:$0xff] %v298
    %307 = vst [vmem:[#allocation2 + $0x70] sm:$0xff] %v299
    %308 = vst [vmem:[#allocation2 + $0x78] sm:$0xff] %v300
    %309 = vrot.lane.b32.xlu0 %v85, 15
    %v310 = vpop.permute.xlu0 %309
    %311 = vrot.lane.b32.xlu0 %v89, 15
    %v312 = vpop.permute.xlu0 %311
    %313 = vrot.lane.b32.xlu0 %v93, 15
    %v314 = vpop.permute.xlu0 %313
    %315 = vrot.lane.b32.xlu0 %v97, 15
    %v316 = vpop.permute.xlu0 %315
    %317 = vrot.lane.b32.xlu0 %v86, 15
    %v318 = vpop.permute.xlu0 %317
    %319 = vrot.lane.b32.xlu0 %v90, 15
    %v320 = vpop.permute.xlu0 %319
    %321 = vrot.lane.b32.xlu0 %v94, 15
    %v322 = vpop.permute.xlu0 %321
    %323 = vrot.lane.b32.xlu0 %v98, 15
    %v324 = vpop.permute.xlu0 %323
    %325 = vrot.lane.b32.xlu0 %v87, 15
    %v326 = vpop.permute.xlu0 %325
    %327 = vrot.lane.b32.xlu0 %v91, 15
    %v328 = vpop.permute.xlu0 %327
    %329 = vrot.lane.b32.xlu0 %v95, 15
    %v330 = vpop.permute.xlu0 %329
    %331 = vrot.lane.b32.xlu0 %v99, 15
    %v332 = vpop.permute.xlu0 %331
    %333 = vrot.lane.b32.xlu0 %v88, 15
    %v334 = vpop.permute.xlu0 %333
    %335 = vrot.lane.b32.xlu0 %v92, 15
    %v336 = vpop.permute.xlu0 %335
    %337 = vrot.lane.b32.xlu0 %v96, 15
    %v338 = vpop.permute.xlu0 %337
    %339 = vrot.lane.b32.xlu0 %v100, 15
    %v340 = vpop.permute.xlu0 %339
    %vm341 = vcmp.lt.s32.totalorder %v146, 15
    %v342 = vsel %vm341, %v326, %v334
    %v343 = vsel %vm341, %v328, %v336
    %v344 = vsel %vm341, %v330, %v338
    %v345 = vsel %vm341, %v332, %v340
    %v346 = vsel %vm341, %v318, %v326
    %v347 = vsel %vm341, %v320, %v328
    %v348 = vsel %vm341, %v322, %v330
    %v349 = vsel %vm341, %v324, %v332
    %v350 = vsel %vm341, %v310, %v318
    %v351 = vsel %vm341, %v312, %v320
    %v352 = vsel %vm341, %v314, %v322
    %v353 = vsel %vm341, %v316, %v324
    %v354 = vsel %vm341, %v334, %v310
    %v355 = vsel %vm341, %v336, %v312
    %v356 = vsel %vm341, %v338, %v314
    %v357 = vsel %vm341, %v340, %v316
    %v358 = vld [vmem:[%s1 + $0x100] sm:$0xff]
    %v359 = vld [vmem:[%s1 + $0x108] sm:$0xff]
    %v360 = vld [vmem:[%s1 + $0x110] sm:$0xff]
    %v361 = vld [vmem:[%s1 + $0x118] sm:$0xff]
    %v362 = vld [vmem:[%s1 + $0x120] sm:$0xff]
    %v363 = vld [vmem:[%s1 + $0x128] sm:$0xff]
    %v364 = vld [vmem:[%s1 + $0x130] sm:$0xff]
    %v365 = vld [vmem:[%s1 + $0x138] sm:$0xff]
    %v366 = vld [vmem:[%s1 + $0x140] sm:$0xff]
    %v367 = vld [vmem:[%s1 + $0x148] sm:$0xff]
    %v368 = vld [vmem:[%s1 + $0x150] sm:$0xff]
    %v369 = vld [vmem:[%s1 + $0x158] sm:$0xff]
    %v370 = vld [vmem:[%s1 + $0x160] sm:$0xff]
    %v371 = vld [vmem:[%s1 + $0x168] sm:$0xff]
    %v372 = vld [vmem:[%s1 + $0x170] sm:$0xff]
    %v373 = vld [vmem:[%s1 + $0x178] sm:$0xff]
    %v374 = vmul.f32 %v354, %v358
    %v375 = vmul.f32 %v350, %v359
    %v376 = vmul.f32 %v346, %v360
    %v377 = vmul.f32 %v342, %v361
    %v378 = vmul.f32 %v355, %v362
    %v379 = vmul.f32 %v351, %v363
    %v380 = vmul.f32 %v347, %v364
    %v381 = vmul.f32 %v343, %v365
    %v382 = vmul.f32 %v356, %v366
    %v383 = vmul.f32 %v352, %v367
    %v384 = vmul.f32 %v348, %v368
    %v385 = vmul.f32 %v344, %v369
    %v386 = vmul.f32 %v357, %v370
    %v387 = vmul.f32 %v353, %v371
    %v388 = vmul.f32 %v349, %v372
    %v389 = vmul.f32 %v345, %v373
    %v390 = vpack.c.bf16 %v378, %v374
    %v391 = vpack.c.bf16 %v379, %v375
    %v392 = vpack.c.bf16 %v380, %v376
    %v393 = vpack.c.bf16 %v381, %v377
    %v394 = vpack.c.bf16 %v386, %v382
    %v395 = vpack.c.bf16 %v387, %v383
    %v396 = vpack.c.bf16 %v388, %v384
    %v397 = vpack.c.bf16 %v389, %v385
    %398 = vst [vmem:[#allocation2 + $0x80] sm:$0xff] %v390
    %399 = vst [vmem:[#allocation2 + $0x88] sm:$0xff] %v391
    %400 = vst [vmem:[#allocation2 + $0x90] sm:$0xff] %v392
    %401 = vst [vmem:[#allocation2 + $0x98] sm:$0xff] %v393
    %402 = vst [vmem:[#allocation2 + $0xa0] sm:$0xff] %v394
    %403 = vst [vmem:[#allocation2 + $0xa8] sm:$0xff] %v395
    %404 = vst [vmem:[#allocation2 + $0xb0] sm:$0xff] %v396
    %405 = vst [vmem:[#allocation2 + $0xb8] sm:$0xff] %v397
    %406 = vrot.lane.b32.xlu0 %v85, 1
    %v407 = vpop.permute.xlu0 %406
    %408 = vrot.lane.b32.xlu0 %v89, 1
    %v409 = vpop.permute.xlu0 %408
    %410 = vrot.lane.b32.xlu0 %v93, 1
    %v411 = vpop.permute.xlu0 %410
    %412 = vrot.lane.b32.xlu0 %v97, 1
    %v413 = vpop.permute.xlu0 %412
    %414 = vrot.lane.b32.xlu0 %v86, 1
    %v415 = vpop.permute.xlu0 %414
    %416 = vrot.lane.b32.xlu0 %v90, 1
    %v417 = vpop.permute.xlu0 %416
    %418 = vrot.lane.b32.xlu0 %v94, 1
    %v419 = vpop.permute.xlu0 %418
    %420 = vrot.lane.b32.xlu0 %v98, 1
    %v421 = vpop.permute.xlu0 %420
    %422 = vrot.lane.b32.xlu0 %v87, 1
    %v423 = vpop.permute.xlu0 %422
    %424 = vrot.lane.b32.xlu0 %v91, 1
    %v425 = vpop.permute.xlu0 %424
    %426 = vrot.lane.b32.xlu0 %v95, 1
    %v427 = vpop.permute.xlu0 %426
    %428 = vrot.lane.b32.xlu0 %v99, 1
    %v429 = vpop.permute.xlu0 %428
    %430 = vrot.lane.b32.xlu0 %v88, 1
    %v431 = vpop.permute.xlu0 %430
    %432 = vrot.lane.b32.xlu0 %v92, 1
    %v433 = vpop.permute.xlu0 %432
    %434 = vrot.lane.b32.xlu0 %v96, 1
    %v435 = vpop.permute.xlu0 %434
    %436 = vrot.lane.b32.xlu0 %v100, 1
    %v437 = vpop.permute.xlu0 %436
    %vm438 = vcmp.lt.s32.totalorder %v146, 1
    %v439 = vsel %vm438, %v423, %v431
    %v440 = vsel %vm438, %v425, %v433
    %v441 = vsel %vm438, %v427, %v435
    %v442 = vsel %vm438, %v429, %v437
    %v443 = vsel %vm438, %v415, %v423
    %v444 = vsel %vm438, %v417, %v425
    %v445 = vsel %vm438, %v419, %v427
    %v446 = vsel %vm438, %v421, %v429
    %v447 = vsel %vm438, %v407, %v415
    %v448 = vsel %vm438, %v409, %v417
    %v449 = vsel %vm438, %v411, %v419
    %v450 = vsel %vm438, %v413, %v421
    %v451 = vsel %vm438, %v431, %v407
    %v452 = vsel %vm438, %v433, %v409
    %v453 = vsel %vm438, %v435, %v411
    %v454 = vsel %vm438, %v437, %v413
    %v455 = vld [vmem:[%s1 + $0x180] sm:$0xff]
    %v456 = vld [vmem:[%s1 + $0x188] sm:$0xff]
    %v457 = vld [vmem:[%s1 + $0x190] sm:$0xff]
    %v458 = vld [vmem:[%s1 + $0x198] sm:$0xff]
    %v459 = vld [vmem:[%s1 + $0x1a0] sm:$0xff]
    %v460 = vld [vmem:[%s1 + $0x1a8] sm:$0xff]
    %v461 = vld [vmem:[%s1 + $0x1b0] sm:$0xff]
    %v462 = vld [vmem:[%s1 + $0x1b8] sm:$0xff]
    %v463 = vld [vmem:[%s1 + $0x1c0] sm:$0xff]
    %v464 = vld [vmem:[%s1 + $0x1c8] sm:$0xff]
    %v465 = vld [vmem:[%s1 + $0x1d0] sm:$0xff]
    %v466 = vld [vmem:[%s1 + $0x1d8] sm:$0xff]
    %v467 = vld [vmem:[%s1 + $0x1e0] sm:$0xff]
    %v468 = vld [vmem:[%s1 + $0x1e8] sm:$0xff]
    %v469 = vld [vmem:[%s1 + $0x1f0] sm:$0xff]
    %v470 = vld [vmem:[%s1 + $0x1f8] sm:$0xff]
    %v471 = vmul.f32 %v451, %v455
    %v472 = vmul.f32 %v447, %v456
    %v473 = vmul.f32 %v443, %v457
    %v474 = vmul.f32 %v439, %v458
    %v475 = vmul.f32 %v452, %v459
    %v476 = vmul.f32 %v448, %v460
    %v477 = vmul.f32 %v444, %v461
    %v478 = vmul.f32 %v440, %v462
    %v479 = vmul.f32 %v453, %v463
    %v480 = vmul.f32 %v449, %v464
    %v481 = vmul.f32 %v445, %v465
    %v482 = vmul.f32 %v441, %v466
    %v483 = vmul.f32 %v454, %v467
    %v484 = vmul.f32 %v450, %v468
    %v485 = vmul.f32 %v446, %v469
    %v486 = vmul.f32 %v442, %v470
    %v487 = vpack.c.bf16 %v475, %v471
    %v488 = vpack.c.bf16 %v476, %v472
    %v489 = vpack.c.bf16 %v477, %v473
    %v490 = vpack.c.bf16 %v478, %v474
    %v491 = vpack.c.bf16 %v483, %v479
    %v492 = vpack.c.bf16 %v484, %v480
    %v493 = vpack.c.bf16 %v485, %v481
    %v494 = vpack.c.bf16 %v486, %v482
    %495 = vst [vmem:[#allocation2 + $0xc0] sm:$0xff] %v487
    %496 = vst [vmem:[#allocation2 + $0xc8] sm:$0xff] %v488
    %497 = vst [vmem:[#allocation2 + $0xd0] sm:$0xff] %v489
    %498 = vst [vmem:[#allocation2 + $0xd8] sm:$0xff] %v490
    %499 = vst [vmem:[#allocation2 + $0xe0] sm:$0xff] %v491
    %500 = vst [vmem:[#allocation2 + $0xe8] sm:$0xff] %v492
    %501 = vst [vmem:[#allocation2 + $0xf0] sm:$0xff] %v493
    %502 = vst [vmem:[#allocation2 + $0xf8] sm:$0xff] %v494
    %v503 = vpack.c.bf16 %v89, %v85
    %v504 = vpack.c.bf16 %v90, %v86
    %v505 = vpack.c.bf16 %v91, %v87
    %v506 = vpack.c.bf16 %v92, %v88
    %v507 = vpack.c.bf16 %v97, %v93
    %v508 = vpack.c.bf16 %v98, %v94
    %v509 = vpack.c.bf16 %v99, %v95
    %v510 = vpack.c.bf16 %v100, %v96
    %511 = vst [vmem:[#allocation2 + $0x100] sm:$0xff] %v503
    %512 = vst [vmem:[#allocation2 + $0x108] sm:$0xff] %v504
    %513 = vst [vmem:[#allocation2 + $0x110] sm:$0xff] %v505
    %514 = vst [vmem:[#allocation2 + $0x118] sm:$0xff] %v506
    %515 = vst [vmem:[#allocation2 + $0x120] sm:$0xff] %v507
    %516 = vst [vmem:[#allocation2 + $0x128] sm:$0xff] %v508
    %517 = vst [vmem:[#allocation2 + $0x130] sm:$0xff] %v509
    %518 = vst [vmem:[#allocation2 + $0x138] sm:$0xff] %v510
    %519 = vrot.lane.b32.xlu0 %v85, 127
    %v520 = vpop.permute.xlu0 %519
    %521 = vrot.lane.b32.xlu0 %v89, 127
    %v522 = vpop.permute.xlu0 %521
    %523 = vrot.lane.b32.xlu0 %v93, 127
    %v524 = vpop.permute.xlu0 %523
    %525 = vrot.lane.b32.xlu0 %v97, 127
    %v526 = vpop.permute.xlu0 %525
    %527 = vrot.lane.b32.xlu0 %v86, 127
    %v528 = vpop.permute.xlu0 %527
    %529 = vrot.lane.b32.xlu0 %v90, 127
    %v530 = vpop.permute.xlu0 %529
    %531 = vrot.lane.b32.xlu0 %v94, 127
    %v532 = vpop.permute.xlu0 %531
    %533 = vrot.lane.b32.xlu0 %v98, 127
    %v534 = vpop.permute.xlu0 %533
    %535 = vrot.lane.b32.xlu0 %v87, 127
    %v536 = vpop.permute.xlu0 %535
    %537 = vrot.lane.b32.xlu0 %v91, 127
    %v538 = vpop.permute.xlu0 %537
    %539 = vrot.lane.b32.xlu0 %v95, 127
    %v540 = vpop.permute.xlu0 %539
    %541 = vrot.lane.b32.xlu0 %v99, 127
    %v542 = vpop.permute.xlu0 %541
    %543 = vrot.lane.b32.xlu0 %v88, 127
    %v544 = vpop.permute.xlu0 %543
    %545 = vrot.lane.b32.xlu0 %v92, 127
    %v546 = vpop.permute.xlu0 %545
    %547 = vrot.lane.b32.xlu0 %v96, 127
    %v548 = vpop.permute.xlu0 %547
    %549 = vrot.lane.b32.xlu0 %v100, 127
    %v550 = vpop.permute.xlu0 %549
    %vm551 = vcmp.lt.s32.totalorder %v146, 127
    %v552 = vsel %vm551, %v536, %v544
    %v553 = vsel %vm551, %v538, %v546
    %v554 = vsel %vm551, %v540, %v548
    %v555 = vsel %vm551, %v542, %v550
    %v556 = vsel %vm551, %v528, %v536
    %v557 = vsel %vm551, %v530, %v538
    %v558 = vsel %vm551, %v532, %v540
    %v559 = vsel %vm551, %v534, %v542
    %v560 = vsel %vm551, %v520, %v528
    %v561 = vsel %vm551, %v522, %v530
    %v562 = vsel %vm551, %v524, %v532
    %v563 = vsel %vm551, %v526, %v534
    %v564 = vsel %vm551, %v544, %v520
    %v565 = vsel %vm551, %v546, %v522
    %v566 = vsel %vm551, %v548, %v524
    %v567 = vsel %vm551, %v550, %v526
    %v568 = vld [vmem:[%s1 + $0x280] sm:$0xff]
    %v569 = vld [vmem:[%s1 + $0x288] sm:$0xff]
    %v570 = vld [vmem:[%s1 + $0x290] sm:$0xff]
    %v571 = vld [vmem:[%s1 + $0x298] sm:$0xff]
    %v572 = vld [vmem:[%s1 + $0x2a0] sm:$0xff]
    %v573 = vld [vmem:[%s1 + $0x2a8] sm:$0xff]
    %v574 = vld [vmem:[%s1 + $0x2b0] sm:$0xff]
    %v575 = vld [vmem:[%s1 + $0x2b8] sm:$0xff]
    %v576 = vld [vmem:[%s1 + $0x2c0] sm:$0xff]
    %v577 = vld [vmem:[%s1 + $0x2c8] sm:$0xff]
    %v578 = vld [vmem:[%s1 + $0x2d0] sm:$0xff]
    %v579 = vld [vmem:[%s1 + $0x2d8] sm:$0xff]
    %v580 = vld [vmem:[%s1 + $0x2e0] sm:$0xff]
    %v581 = vld [vmem:[%s1 + $0x2e8] sm:$0xff]
    %v582 = vld [vmem:[%s1 + $0x2f0] sm:$0xff]
    %v583 = vld [vmem:[%s1 + $0x2f8] sm:$0xff]
    %v584 = vmul.f32 %v560, %v568
    %v585 = vmul.f32 %v556, %v569
    %v586 = vmul.f32 %v552, %v570
    %v587 = vmul.f32 %v564, %v571
    %v588 = vmul.f32 %v561, %v572
    %v589 = vmul.f32 %v557, %v573
    %v590 = vmul.f32 %v553, %v574
    %v591 = vmul.f32 %v565, %v575
    %v592 = vmul.f32 %v562, %v576
    %v593 = vmul.f32 %v558, %v577
    %v594 = vmul.f32 %v554, %v578
    %v595 = vmul.f32 %v566, %v579
    %v596 = vmul.f32 %v563, %v580
    %v597 = vmul.f32 %v559, %v581
    %v598 = vmul.f32 %v555, %v582
    %v599 = vmul.f32 %v567, %v583
    %v600 = vpack.c.bf16 %v588, %v584
    %v601 = vpack.c.bf16 %v589, %v585
    %v602 = vpack.c.bf16 %v590, %v586
    %v603 = vpack.c.bf16 %v591, %v587
    %v604 = vpack.c.bf16 %v596, %v592
    %v605 = vpack.c.bf16 %v597, %v593
    %v606 = vpack.c.bf16 %v598, %v594
    %v607 = vpack.c.bf16 %v599, %v595
    %608 = vst [vmem:[#allocation2 + $0x140] sm:$0xff] %v600
    %609 = vst [vmem:[#allocation2 + $0x148] sm:$0xff] %v601
    %610 = vst [vmem:[#allocation2 + $0x150] sm:$0xff] %v602
    %611 = vst [vmem:[#allocation2 + $0x158] sm:$0xff] %v603
    %612 = vst [vmem:[#allocation2 + $0x160] sm:$0xff] %v604
    %613 = vst [vmem:[#allocation2 + $0x168] sm:$0xff] %v605
    %614 = vst [vmem:[#allocation2 + $0x170] sm:$0xff] %v606
    %615 = vst [vmem:[#allocation2 + $0x178] sm:$0xff] %v607
    %616 = vrot.lane.b32.xlu0 %v85, 113
    %v617 = vpop.permute.xlu0 %616
    %618 = vrot.lane.b32.xlu0 %v89, 113
    %v619 = vpop.permute.xlu0 %618
    %620 = vrot.lane.b32.xlu0 %v93, 113
    %v621 = vpop.permute.xlu0 %620
    %622 = vrot.lane.b32.xlu0 %v97, 113
    %v623 = vpop.permute.xlu0 %622
    %624 = vrot.lane.b32.xlu0 %v86, 113
    %v625 = vpop.permute.xlu0 %624
    %626 = vrot.lane.b32.xlu0 %v90, 113
    %v627 = vpop.permute.xlu0 %626
    %628 = vrot.lane.b32.xlu0 %v94, 113
    %v629 = vpop.permute.xlu0 %628
    %630 = vrot.lane.b32.xlu0 %v98, 113
    %v631 = vpop.permute.xlu0 %630
    %632 = vrot.lane.b32.xlu0 %v87, 113
    %v633 = vpop.permute.xlu0 %632
    %634 = vrot.lane.b32.xlu0 %v91, 113
    %v635 = vpop.permute.xlu0 %634
    %636 = vrot.lane.b32.xlu0 %v95, 113
    %v637 = vpop.permute.xlu0 %636
    %638 = vrot.lane.b32.xlu0 %v99, 113
    %v639 = vpop.permute.xlu0 %638
    %640 = vrot.lane.b32.xlu0 %v88, 113
    %v641 = vpop.permute.xlu0 %640
    %642 = vrot.lane.b32.xlu0 %v92, 113
    %v643 = vpop.permute.xlu0 %642
    %644 = vrot.lane.b32.xlu0 %v96, 113
    %v645 = vpop.permute.xlu0 %644
    %646 = vrot.lane.b32.xlu0 %v100, 113
    %v647 = vpop.permute.xlu0 %646
    %vm648 = vcmp.lt.s32.totalorder %v146, 113
    %v649 = vsel %vm648, %v633, %v641
    %v650 = vsel %vm648, %v635, %v643
    %v651 = vsel %vm648, %v637, %v645
    %v652 = vsel %vm648, %v639, %v647
    %v653 = vsel %vm648, %v625, %v633
    %v654 = vsel %vm648, %v627, %v635
    %v655 = vsel %vm648, %v629, %v637
    %v656 = vsel %vm648, %v631, %v639
    %v657 = vsel %vm648, %v617, %v625
    %v658 = vsel %vm648, %v619, %v627
    %v659 = vsel %vm648, %v621, %v629
    %v660 = vsel %vm648, %v623, %v631
    %v661 = vsel %vm648, %v641, %v617
    %v662 = vsel %vm648, %v643, %v619
    %v663 = vsel %vm648, %v645, %v621
    %v664 = vsel %vm648, %v647, %v623
    %v665 = vld [vmem:[%s1 + $0x300] sm:$0xff]
    %v666 = vld [vmem:[%s1 + $0x308] sm:$0xff]
    %v667 = vld [vmem:[%s1 + $0x310] sm:$0xff]
    %v668 = vld [vmem:[%s1 + $0x318] sm:$0xff]
    %v669 = vld [vmem:[%s1 + $0x320] sm:$0xff]
    %v670 = vld [vmem:[%s1 + $0x328] sm:$0xff]
    %v671 = vld [vmem:[%s1 + $0x330] sm:$0xff]
    %v672 = vld [vmem:[%s1 + $0x338] sm:$0xff]
    %v673 = vld [vmem:[%s1 + $0x340] sm:$0xff]
    %v674 = vld [vmem:[%s1 + $0x348] sm:$0xff]
    %v675 = vld [vmem:[%s1 + $0x350] sm:$0xff]
    %v676 = vld [vmem:[%s1 + $0x358] sm:$0xff]
    %v677 = vld [vmem:[%s1 + $0x360] sm:$0xff]
    %v678 = vld [vmem:[%s1 + $0x368] sm:$0xff]
    %v679 = vld [vmem:[%s1 + $0x370] sm:$0xff]
    %v680 = vld [vmem:[%s1 + $0x378] sm:$0xff]
    %v681 = vmul.f32 %v657, %v665
    %v682 = vmul.f32 %v653, %v666
    %v683 = vmul.f32 %v649, %v667
    %v684 = vmul.f32 %v661, %v668
    %v685 = vmul.f32 %v658, %v669
    %v686 = vmul.f32 %v654, %v670
    %v687 = vmul.f32 %v650, %v671
    %v688 = vmul.f32 %v662, %v672
    %v689 = vmul.f32 %v659, %v673
    %v690 = vmul.f32 %v655, %v674
    %v691 = vmul.f32 %v651, %v675
    %v692 = vmul.f32 %v663, %v676
    %v693 = vmul.f32 %v660, %v677
    %v694 = vmul.f32 %v656, %v678
    %v695 = vmul.f32 %v652, %v679
    %v696 = vmul.f32 %v664, %v680
    %v697 = vpack.c.bf16 %v685, %v681
    %v698 = vpack.c.bf16 %v686, %v682
    %v699 = vpack.c.bf16 %v687, %v683
    %v700 = vpack.c.bf16 %v688, %v684
    %v701 = vpack.c.bf16 %v693, %v689
    %v702 = vpack.c.bf16 %v694, %v690
    %v703 = vpack.c.bf16 %v695, %v691
    %v704 = vpack.c.bf16 %v696, %v692
    %705 = vst [vmem:[#allocation2 + $0x180] sm:$0xff] %v697
    %706 = vst [vmem:[#allocation2 + $0x188] sm:$0xff] %v698
    %707 = vst [vmem:[#allocation2 + $0x190] sm:$0xff] %v699
    %708 = vst [vmem:[#allocation2 + $0x198] sm:$0xff] %v700
    %709 = vst [vmem:[#allocation2 + $0x1a0] sm:$0xff] %v701
    %710 = vst [vmem:[#allocation2 + $0x1a8] sm:$0xff] %v702
    %711 = vst [vmem:[#allocation2 + $0x1b0] sm:$0xff] %v703
    %712 = vst [vmem:[#allocation2 + $0x1b8] sm:$0xff] %v704
    %713 = vrot.lane.b32.xlu0 %v85, 112
    %v714 = vpop.permute.xlu0 %713
    %715 = vrot.lane.b32.xlu0 %v89, 112
    %v716 = vpop.permute.xlu0 %715
    %717 = vrot.lane.b32.xlu0 %v93, 112
    %v718 = vpop.permute.xlu0 %717
    %719 = vrot.lane.b32.xlu0 %v97, 112
    %v720 = vpop.permute.xlu0 %719
    %721 = vrot.lane.b32.xlu0 %v86, 112
    %v722 = vpop.permute.xlu0 %721
    %723 = vrot.lane.b32.xlu0 %v90, 112
    %v724 = vpop.permute.xlu0 %723
    %725 = vrot.lane.b32.xlu0 %v94, 112
    %v726 = vpop.permute.xlu0 %725
    %727 = vrot.lane.b32.xlu0 %v98, 112
    %v728 = vpop.permute.xlu0 %727
    %729 = vrot.lane.b32.xlu0 %v87, 112
    %v730 = vpop.permute.xlu0 %729
    %731 = vrot.lane.b32.xlu0 %v91, 112
    %v732 = vpop.permute.xlu0 %731
    %733 = vrot.lane.b32.xlu0 %v95, 112
    %v734 = vpop.permute.xlu0 %733
    %735 = vrot.lane.b32.xlu0 %v99, 112
    %v736 = vpop.permute.xlu0 %735
    %737 = vrot.lane.b32.xlu0 %v88, 112
    %v738 = vpop.permute.xlu0 %737
    %739 = vrot.lane.b32.xlu0 %v92, 112
    %v740 = vpop.permute.xlu0 %739
    %741 = vrot.lane.b32.xlu0 %v96, 112
    %v742 = vpop.permute.xlu0 %741
    %743 = vrot.lane.b32.xlu0 %v100, 112
    %v744 = vpop.permute.xlu0 %743
    %vm745 = vcmp.lt.s32.totalorder %v146, 112
    %v746 = vsel %vm745, %v730, %v738
    %v747 = vsel %vm745, %v732, %v740
    %v748 = vsel %vm745, %v734, %v742
    %v749 = vsel %vm745, %v736, %v744
    %v750 = vsel %vm745, %v722, %v730
    %v751 = vsel %vm745, %v724, %v732
    %v752 = vsel %vm745, %v726, %v734
    %v753 = vsel %vm745, %v728, %v736
    %v754 = vsel %vm745, %v714, %v722
    %v755 = vsel %vm745, %v716, %v724
    %v756 = vsel %vm745, %v718, %v726
    %v757 = vsel %vm745, %v720, %v728
    %v758 = vsel %vm745, %v738, %v714
    %v759 = vsel %vm745, %v740, %v716
    %v760 = vsel %vm745, %v742, %v718
    %v761 = vsel %vm745, %v744, %v720
    %v762 = vld [vmem:[%s1 + $0x380] sm:$0xff]
    %v763 = vld [vmem:[%s1 + $0x388] sm:$0xff]
    %v764 = vld [vmem:[%s1 + $0x390] sm:$0xff]
    %v765 = vld [vmem:[%s1 + $0x398] sm:$0xff]
    %v766 = vld [vmem:[%s1 + $0x3a0] sm:$0xff]
    %v767 = vld [vmem:[%s1 + $0x3a8] sm:$0xff]
    %v768 = vld [vmem:[%s1 + $0x3b0] sm:$0xff]
    %v769 = vld [vmem:[%s1 + $0x3b8] sm:$0xff]
    %v770 = vld [vmem:[%s1 + $0x3c0] sm:$0xff]
    %v771 = vld [vmem:[%s1 + $0x3c8] sm:$0xff]
    %v772 = vld [vmem:[%s1 + $0x3d0] sm:$0xff]
    %v773 = vld [vmem:[%s1 + $0x3d8] sm:$0xff]
    %v774 = vld [vmem:[%s1 + $0x3e0] sm:$0xff]
    %v775 = vld [vmem:[%s1 + $0x3e8] sm:$0xff]
    %v776 = vld [vmem:[%s1 + $0x3f0] sm:$0xff]
    %v777 = vld [vmem:[%s1 + $0x3f8] sm:$0xff]
    %v778 = vmul.f32 %v754, %v762
    %v779 = vmul.f32 %v750, %v763
    %v780 = vmul.f32 %v746, %v764
    %v781 = vmul.f32 %v758, %v765
    %v782 = vmul.f32 %v755, %v766
    %v783 = vmul.f32 %v751, %v767
    %v784 = vmul.f32 %v747, %v768
    %v785 = vmul.f32 %v759, %v769
    %v786 = vmul.f32 %v756, %v770
    %v787 = vmul.f32 %v752, %v771
    %v788 = vmul.f32 %v748, %v772
    %v789 = vmul.f32 %v760, %v773
    %v790 = vmul.f32 %v757, %v774
    %v791 = vmul.f32 %v753, %v775
    %v792 = vmul.f32 %v749, %v776
    %v793 = vmul.f32 %v761, %v777
    %v794 = vpack.c.bf16 %v782, %v778
    %v795 = vpack.c.bf16 %v783, %v779
    %v796 = vpack.c.bf16 %v784, %v780
    %v797 = vpack.c.bf16 %v785, %v781
    %v798 = vpack.c.bf16 %v790, %v786
    %v799 = vpack.c.bf16 %v791, %v787
    %v800 = vpack.c.bf16 %v792, %v788
    %v801 = vpack.c.bf16 %v793, %v789
    %802 = vst [vmem:[#allocation2 + $0x1c0] sm:$0xff] %v794
    %803 = vst [vmem:[#allocation2 + $0x1c8] sm:$0xff] %v795
    %804 = vst [vmem:[#allocation2 + $0x1d0] sm:$0xff] %v796
    %805 = vst [vmem:[#allocation2 + $0x1d8] sm:$0xff] %v797
    %806 = vst [vmem:[#allocation2 + $0x1e0] sm:$0xff] %v798
    %807 = vst [vmem:[#allocation2 + $0x1e8] sm:$0xff] %v799
    %808 = vst [vmem:[#allocation2 + $0x1f0] sm:$0xff] %v800
    %809 = vst [vmem:[#allocation2 + $0x1f8] sm:$0xff] %v801
    %810 = vrot.lane.b32.xlu0 %v85, 111
    %v811 = vpop.permute.xlu0 %810
    %812 = vrot.lane.b32.xlu0 %v89, 111
    %v813 = vpop.permute.xlu0 %812
    %814 = vrot.lane.b32.xlu0 %v93, 111
    %v815 = vpop.permute.xlu0 %814
    %816 = vrot.lane.b32.xlu0 %v97, 111
    %v817 = vpop.permute.xlu0 %816
    %818 = vrot.lane.b32.xlu0 %v86, 111
    %v819 = vpop.permute.xlu0 %818
    %820 = vrot.lane.b32.xlu0 %v90, 111
    %v821 = vpop.permute.xlu0 %820
    %822 = vrot.lane.b32.xlu0 %v94, 111
    %v823 = vpop.permute.xlu0 %822
    %824 = vrot.lane.b32.xlu0 %v98, 111
    %v825 = vpop.permute.xlu0 %824
    %826 = vrot.lane.b32.xlu0 %v87, 111
    %v827 = vpop.permute.xlu0 %826
    %828 = vrot.lane.b32.xlu0 %v91, 111
    %v829 = vpop.permute.xlu0 %828
    %830 = vrot.lane.b32.xlu0 %v95, 111
    %v831 = vpop.permute.xlu0 %830
    %832 = vrot.lane.b32.xlu0 %v99, 111
    %v833 = vpop.permute.xlu0 %832
    %834 = vrot.lane.b32.xlu0 %v88, 111
    %v835 = vpop.permute.xlu0 %834
    %836 = vrot.lane.b32.xlu0 %v92, 111
    %v837 = vpop.permute.xlu0 %836
    %838 = vrot.lane.b32.xlu0 %v96, 111
    %v839 = vpop.permute.xlu0 %838
    %840 = vrot.lane.b32.xlu0 %v100, 111
    %v841 = vpop.permute.xlu0 %840
    %vm842 = vcmp.lt.s32.totalorder %v146, 111
    %v843 = vsel %vm842, %v827, %v835
    %v844 = vsel %vm842, %v829, %v837
    %v845 = vsel %vm842, %v831, %v839
    %v846 = vsel %vm842, %v833, %v841
    %v847 = vsel %vm842, %v819, %v827
    %v848 = vsel %vm842, %v821, %v829
    %v849 = vsel %vm842, %v823, %v831
    %v850 = vsel %vm842, %v825, %v833
    %v851 = vsel %vm842, %v811, %v819
    %v852 = vsel %vm842, %v813, %v821
    %v853 = vsel %vm842, %v815, %v823
    %v854 = vsel %vm842, %v817, %v825
    %v855 = vsel %vm842, %v835, %v811
    %v856 = vsel %vm842, %v837, %v813
    %v857 = vsel %vm842, %v839, %v815
    %v858 = vsel %vm842, %v841, %v817
    %v859 = vld [vmem:[%s1 + $0x400] sm:$0xff]
    %v860 = vld [vmem:[%s1 + $0x408] sm:$0xff]
    %v861 = vld [vmem:[%s1 + $0x410] sm:$0xff]
    %v862 = vld [vmem:[%s1 + $0x418] sm:$0xff]
    %v863 = vld [vmem:[%s1 + $0x420] sm:$0xff]
    %v864 = vld [vmem:[%s1 + $0x428] sm:$0xff]
    %v865 = vld [vmem:[%s1 + $0x430] sm:$0xff]
    %v866 = vld [vmem:[%s1 + $0x438] sm:$0xff]
    %v867 = vld [vmem:[%s1 + $0x440] sm:$0xff]
    %v868 = vld [vmem:[%s1 + $0x448] sm:$0xff]
    %v869 = vld [vmem:[%s1 + $0x450] sm:$0xff]
    %v870 = vld [vmem:[%s1 + $0x458] sm:$0xff]
    %v871 = vld [vmem:[%s1 + $0x460] sm:$0xff]
    %v872 = vld [vmem:[%s1 + $0x468] sm:$0xff]
    %v873 = vld [vmem:[%s1 + $0x470] sm:$0xff]
    %v874 = vld [vmem:[%s1 + $0x478] sm:$0xff]
    %v875 = vmul.f32 %v851, %v859
    %v876 = vmul.f32 %v847, %v860
    %v877 = vmul.f32 %v843, %v861
    %v878 = vmul.f32 %v855, %v862
    %v879 = vmul.f32 %v852, %v863
    %v880 = vmul.f32 %v848, %v864
    %v881 = vmul.f32 %v844, %v865
    %v882 = vmul.f32 %v856, %v866
    %v883 = vmul.f32 %v853, %v867
    %v884 = vmul.f32 %v849, %v868
    %v885 = vmul.f32 %v845, %v869
    %v886 = vmul.f32 %v857, %v870
    %v887 = vmul.f32 %v854, %v871
    %v888 = vmul.f32 %v850, %v872
    %v889 = vmul.f32 %v846, %v873
    %v890 = vmul.f32 %v858, %v874
    %v891 = vpack.c.bf16 %v879, %v875
    %v892 = vpack.c.bf16 %v880, %v876
    %v893 = vpack.c.bf16 %v881, %v877
    %v894 = vpack.c.bf16 %v882, %v878
    %v895 = vpack.c.bf16 %v887, %v883
    %v896 = vpack.c.bf16 %v888, %v884
    %v897 = vpack.c.bf16 %v889, %v885
    %v898 = vpack.c.bf16 %v890, %v886
    %899 = vst [vmem:[#allocation2 + $0x200] sm:$0xff] %v891
    %900 = vst [vmem:[#allocation2 + $0x208] sm:$0xff] %v892
    %901 = vst [vmem:[#allocation2 + $0x210] sm:$0xff] %v893
    %902 = vst [vmem:[#allocation2 + $0x218] sm:$0xff] %v894
    %903 = vst [vmem:[#allocation2 + $0x220] sm:$0xff] %v895
    %904 = vst [vmem:[#allocation2 + $0x228] sm:$0xff] %v896
    %905 = vst [vmem:[#allocation2 + $0x230] sm:$0xff] %v897
    %906 = vst [vmem:[#allocation2 + $0x238] sm:$0xff] %v898
    %v907 = vld [vmem:[#allocation3] sm:$0xff]
    %v908 = vld [vmem:[#allocation3 + $0x8] sm:$0xf]
    %v909 = vld [vmem:[#allocation3 + $0xc] sm:$0xff]
    %v910 = vld [vmem:[#allocation3 + $0x14] sm:$0xf]
    %v911 = vld [vmem:[#allocation3 + $0x18] sm:$0xff]
    %v912 = vld [vmem:[#allocation3 + $0x20] sm:$0xf]
    %v913 = vld [vmem:[#allocation3 + $0x24] sm:$0xff]
    %v914 = vld [vmem:[#allocation3 + $0x2c] sm:$0xf]
    %v915 = vld [vmem:[#allocation3 + $0x30] sm:$0xff]
    %v916 = vld [vmem:[#allocation3 + $0x38] sm:$0xf]
    %v917 = vld [vmem:[#allocation3 + $0x3c] sm:$0xff]
    %v918 = vld [vmem:[#allocation3 + $0x44] sm:$0xf]
    %v919 = vld [vmem:[#allocation3 + $0x48] sm:$0xff]
    %v920 = vld [vmem:[#allocation3 + $0x50] sm:$0xf]
    %v921 = vld [vmem:[#allocation3 + $0x54] sm:$0xff]
    %v922 = vld [vmem:[#allocation3 + $0x5c] sm:$0xf]
    %v923 = vld [vmem:[#allocation3 + $0x60] sm:$0xff]
    %v924 = vld [vmem:[#allocation3 + $0x68] sm:$0xf]
    %v925 = vld [vmem:[#allocation3 + $0x6c] sm:$0xff]
    %v926 = vld [vmem:[#allocation3 + $0x74] sm:$0xf]
    %v927 = vld [vmem:[#allocation3 + $0x78] sm:$0xff]
    %v928 = vld [vmem:[#allocation3 + $0x80] sm:$0xf]
    %v929 = vld [vmem:[#allocation3 + $0x84] sm:$0xff]
    %v930 = vld [vmem:[#allocation3 + $0x8c] sm:$0xf]
    %v931 = vld [vmem:[#allocation2] sm:$0xff]
    %v932 = vld [vmem:[#allocation2 + $0x8] sm:$0xff]
    %v933 = vld [vmem:[#allocation2 + $0x10] sm:$0xff]
    %v934 = vld [vmem:[#allocation2 + $0x18] sm:$0xff]
    %v935 = vld [vmem:[#allocation2 + $0x20] sm:$0xff]
    %v936 = vld [vmem:[#allocation2 + $0x28] sm:$0xff]
    %v937 = vld [vmem:[#allocation2 + $0x30] sm:$0xff]
    %v938 = vld [vmem:[#allocation2 + $0x38] sm:$0xff]
    %v939 = vld [vmem:[#allocation2 + $0x40] sm:$0xff]
    %v940 = vld [vmem:[#allocation2 + $0x48] sm:$0xff]
    %v941 = vld [vmem:[#allocation2 + $0x50] sm:$0xff]
    %v942 = vld [vmem:[#allocation2 + $0x58] sm:$0xff]
    %v943 = vld [vmem:[#allocation2 + $0x60] sm:$0xff]
    %v944 = vld [vmem:[#allocation2 + $0x68] sm:$0xff]
    %v945 = vld [vmem:[#allocation2 + $0x70] sm:$0xff]
    %v946 = vld [vmem:[#allocation2 + $0x78] sm:$0xff]
    %v947 = vld [vmem:[#allocation2 + $0x80] sm:$0xff]
    %v948 = vld [vmem:[#allocation2 + $0x88] sm:$0xff]
    %v949 = vld [vmem:[#allocation2 + $0x90] sm:$0xff]
    %v950 = vld [vmem:[#allocation2 + $0x98] sm:$0xff]
    %v951 = vld [vmem:[#allocation2 + $0xa0] sm:$0xff]
    %v952 = vld [vmem:[#allocation2 + $0xa8] sm:$0xff]
    %v953 = vld [vmem:[#allocation2 + $0xb0] sm:$0xff]
    %v954 = vld [vmem:[#allocation2 + $0xb8] sm:$0xff]
    %v955 = vld [vmem:[#allocation2 + $0xc0] sm:$0xff]
    %v956 = vld [vmem:[#allocation2 + $0xc8] sm:$0xff]
    %v957 = vld [vmem:[#allocation2 + $0xd0] sm:$0xff]
    %v958 = vld [vmem:[#allocation2 + $0xd8] sm:$0xff]
    %v959 = vld [vmem:[#allocation2 + $0xe0] sm:$0xff]
    %v960 = vld [vmem:[#allocation2 + $0xe8] sm:$0xff]
    %v961 = vld [vmem:[#allocation2 + $0xf0] sm:$0xff]
    %v962 = vld [vmem:[#allocation2 + $0xf8] sm:$0xff]
    %v963 = vld [vmem:[#allocation2 + $0x100] sm:$0xff]
    %v964 = vld [vmem:[#allocation2 + $0x108] sm:$0xff]
    %v965 = vld [vmem:[#allocation2 + $0x110] sm:$0xff]
    %v966 = vld [vmem:[#allocation2 + $0x118] sm:$0xff]
    %v967 = vld [vmem:[#allocation2 + $0x120] sm:$0xff]
    %v968 = vld [vmem:[#allocation2 + $0x128] sm:$0xff]
    %v969 = vld [vmem:[#allocation2 + $0x130] sm:$0xff]
    %v970 = vld [vmem:[#allocation2 + $0x138] sm:$0xff]
    %v971 = vld [vmem:[#allocation2 + $0x140] sm:$0xff]
    %v972 = vld [vmem:[#allocation2 + $0x148] sm:$0xff]
    %v973 = vld [vmem:[#allocation2 + $0x150] sm:$0xff]
    %v974 = vld [vmem:[#allocation2 + $0x158] sm:$0xff]
    %v975 = vld [vmem:[#allocation2 + $0x160] sm:$0xff]
    %v976 = vld [vmem:[#allocation2 + $0x168] sm:$0xff]
    %v977 = vld [vmem:[#allocation2 + $0x170] sm:$0xff]
    %v978 = vld [vmem:[#allocation2 + $0x178] sm:$0xff]
    %v979 = vld [vmem:[#allocation2 + $0x180] sm:$0xff]
    %v980 = vld [vmem:[#allocation2 + $0x188] sm:$0xff]
    %v981 = vld [vmem:[#allocation2 + $0x190] sm:$0xff]
    %v982 = vld [vmem:[#allocation2 + $0x198] sm:$0xff]
    %v983 = vld [vmem:[#allocation2 + $0x1a0] sm:$0xff]
    %v984 = vld [vmem:[#allocation2 + $0x1a8] sm:$0xff]
    %v985 = vld [vmem:[#allocation2 + $0x1b0] sm:$0xff]
    %v986 = vld [vmem:[#allocation2 + $0x1b8] sm:$0xff]
    %v987 = vld [vmem:[#allocation2 + $0x1c0] sm:$0xff]
    %v988 = vld [vmem:[#allocation2 + $0x1c8] sm:$0xff]
    %v989 = vld [vmem:[#allocation2 + $0x1d0] sm:$0xff]
    %v990 = vld [vmem:[#allocation2 + $0x1d8] sm:$0xff]
    %v991 = vld [vmem:[#allocation2 + $0x1e0] sm:$0xff]
    %v992 = vld [vmem:[#allocation2 + $0x1e8] sm:$0xff]
    %v993 = vld [vmem:[#allocation2 + $0x1f0] sm:$0xff]
    %v994 = vld [vmem:[#allocation2 + $0x1f8] sm:$0xff]
    %v995 = vld [vmem:[#allocation2 + $0x200] sm:$0xff]
    %v996 = vld [vmem:[#allocation2 + $0x208] sm:$0xff]
    %v997 = vld [vmem:[#allocation2 + $0x210] sm:$0xff]
    %v998 = vld [vmem:[#allocation2 + $0x218] sm:$0xff]
    %v999 = vld [vmem:[#allocation2 + $0x220] sm:$0xff]
    %v1000 = vld [vmem:[#allocation2 + $0x228] sm:$0xff]
    %v1001 = vld [vmem:[#allocation2 + $0x230] sm:$0xff]
    %v1002 = vld [vmem:[#allocation2 + $0x238] sm:$0xff]
    %v1027 = vunpack.c.l.b16 %v907
    %v1028 = vunpack.c.h.b16 %v907
    %v1029 = vunpack.c.l.b16 %v908
    %v1030 = vunpack.c.l.b16 %v909
    %v1031 = vunpack.c.h.b16 %v909
    %v1032 = vunpack.c.l.b16 %v910
    %v1033 = vunpack.c.l.b16 %v911
    %v1034 = vunpack.c.h.b16 %v911
    %v1035 = vunpack.c.l.b16 %v912
    %v1036 = vunpack.c.l.b16 %v913
    %v1037 = vunpack.c.h.b16 %v913
    %v1038 = vunpack.c.l.b16 %v914
    %v1039 = vunpack.c.l.b16 %v915
    %v1040 = vunpack.c.h.b16 %v915
    %v1041 = vunpack.c.l.b16 %v916
    %v1042 = vunpack.c.l.b16 %v917
    %v1043 = vunpack.c.h.b16 %v917
    %v1044 = vunpack.c.l.b16 %v918
    %v1045 = vunpack.c.l.b16 %v919
    %v1046 = vunpack.c.h.b16 %v919
    %v1047 = vunpack.c.l.b16 %v920
    %v1048 = vunpack.c.l.b16 %v921
    %v1049 = vunpack.c.h.b16 %v921
    %v1050 = vunpack.c.l.b16 %v922
    %v1051 = vunpack.c.l.b16 %v923
    %v1052 = vunpack.c.h.b16 %v923
    %v1053 = vunpack.c.l.b16 %v924
    %v1054 = vunpack.c.l.b16 %v925
    %v1055 = vunpack.c.h.b16 %v925
    %v1056 = vunpack.c.l.b16 %v926
    %v1057 = vunpack.c.l.b16 %v927
    %v1058 = vunpack.c.h.b16 %v927
    %v1059 = vunpack.c.l.b16 %v928
    %v1060 = vunpack.c.l.b16 %v929
    %v1061 = vunpack.c.h.b16 %v929
    %v1062 = vunpack.c.l.b16 %v930
    %v1063 = vpack.c.b16 %v1030, %v1027
    %v1064 = vpack.c.b16 %v1031, %v1028
    %v1065 = vpack.c.b16 %v1032, %v1029
    %v1066 = vpack.c.b16 %v1036, %v1033
    %v1067 = vpack.c.b16 %v1037, %v1034
    %v1068 = vpack.c.b16 %v1038, %v1035
    %v1069 = vpack.c.b16 %v1042, %v1039
    %v1070 = vpack.c.b16 %v1043, %v1040
    %v1071 = vpack.c.b16 %v1044, %v1041
    %v1072 = vpack.c.b16 %v1048, %v1045
    %v1073 = vpack.c.b16 %v1049, %v1046
    %v1074 = vpack.c.b16 %v1050, %v1047
    %v1075 = vpack.c.b16 %v1054, %v1051
    %v1076 = vpack.c.b16 %v1055, %v1052
    %v1077 = vpack.c.b16 %v1056, %v1053
    %v1078 = vpack.c.b16 %v1060, %v1057
    %v1079 = vpack.c.b16 %v1061, %v1058
    %v1080 = vpack.c.b16 %v1062, %v1059
    %vm1093 = vcmask 261120
    %v1095 = vsel %vm1093, %v1065, 0
    %v1098 = vsel %vm1093, %v1068, 0
    %v1101 = vsel %vm1093, %v1071, 0
    %v1104 = vsel %vm1093, %v1074, 0
    %v1107 = vsel %vm1093, %v1077, 0
    %v1110 = vsel %vm1093, %v1080, 0
    %1112 = vmatprep.subr.bf16.mxu0 %v932
    %1113 = vmatpush1.bf16.msra.mxu0 %v931
    %1114 = vmatprep.subr.bf16.mxu0 %v936
    %1115 = vmatpush1.bf16.msra.mxu0 %v935
    %1116 = vmatprep.subr.bf16.mxu0 %v940
    %1117 = vmatpush1.bf16.msra.mxu0 %v939
    %1118 = vmatprep.subr.bf16.mxu0 %v944
    %1119 = vmatpush1.bf16.msra.mxu0 %v943
    %1120 = vmatprep.subr.bf16.mxu0 %v948
    %1121 = vmatpush1.bf16.msra.mxu0 %v947
    %1122 = vmatprep.subr.bf16.mxu0 %v952
    %1123 = vmatpush1.bf16.msra.mxu0 %v951
    %1124 = vmatprep.subr.bf16.mxu0 %v956
    %1125 = vmatpush1.bf16.msra.mxu0 %v955
    %1126 = vmatprep.subr.bf16.mxu0 %v960
    %1127 = vmatpush1.bf16.msra.mxu0 %v959
    %1128 = vmatprep.subr.bf16.mxu0 %v964
    %1129 = vmatpush1.bf16.msra.mxu0 %v963
    %1130 = vmatprep.subr.bf16.mxu0 %v968
    %1131 = vmatpush1.bf16.msra.mxu0 %v967
    %1132 = vmatprep.subr.bf16.mxu0 %v972
    %1133 = vmatpush1.bf16.msra.mxu0 %v971
    %1134 = vmatprep.subr.bf16.mxu0 %v976
    %1135 = vmatpush1.bf16.msra.mxu0 %v975
    %1136 = vmatprep.subr.bf16.mxu0 %v980
    %1137 = vmatpush1.bf16.msra.mxu0 %v979
    %1138 = vmatprep.subr.bf16.mxu0 %v984
    %1139 = vmatpush1.bf16.msra.mxu0 %v983
    %1140 = vmatprep.subr.bf16.mxu0 %v988
    %1141 = vmatpush1.bf16.msra.mxu0 %v987
    %1142 = vmatprep.subr.bf16.mxu0 %v992
    %1143 = vmatpush1.bf16.msra.mxu0 %v991
    %1144 = vmatprep.mubr.bf16.mxu0 %v1064
    %1145 = vmatmul.mubr.bf16.gmra.mrb[0].mxu0 %v1063
    %v1146 = vpop.f32.mrb[0].mxu0
    %v1147 = vadd.f32 0.0, %v1146
    %v1148 = vpop.f32.mrb[0].mxu0
    %v1149 = vadd.f32 0.0, %v1148
    %v1150 = vpop.f32.mrb[0].mxu0
    %v1151 = vadd.f32 0.0, %v1150
    %v1152 = vpop.f32.mrb[0].mxu0
    %v1153 = vadd.f32 0.0, %v1152
    %1154 = vmatprep.mubr.bf16.mxu0 %v1067
    %1155 = vmatmul.mubr.bf16.gmra.mrb[0].mxu0 %v1066
    %v1156 = vpop.f32.mrb[0].mxu0
    %v1157 = vadd.f32 0.0, %v1156
    %v1158 = vpop.f32.mrb[0].mxu0
    %v1159 = vadd.f32 0.0, %v1158
    %v1160 = vpop.f32.mrb[0].mxu0
    %v1161 = vadd.f32 0.0, %v1160
    %v1162 = vpop.f32.mrb[0].mxu0
    %v1163 = vadd.f32 0.0, %v1162
    %1164 = vmatprep.mubr.bf16.mxu0 %v1070
    %1165 = vmatmul.mubr.bf16.gmra.mrb[0].mxu0 %v1069
    %v1166 = vpop.f32.mrb[0].mxu0
    %v1167 = vadd.f32 0.0, %v1166
    %v1168 = vpop.f32.mrb[0].mxu0
    %v1169 = vadd.f32 0.0, %v1168
    %v1170 = vpop.f32.mrb[0].mxu0
    %v1171 = vadd.f32 0.0, %v1170
    %v1172 = vpop.f32.mrb[0].mxu0
    %v1173 = vadd.f32 0.0, %v1172
    %1174 = vmatprep.mubr.bf16.mxu0 %v1073
    %1175 = vmatmul.mubr.bf16.gmra.mrb[0].mxu0 %v1072
    %v1176 = vpop.f32.mrb[0].mxu0
    %v1177 = vadd.f32 0.0, %v1176
    %v1178 = vpop.f32.mrb[0].mxu0
    %v1179 = vadd.f32 0.0, %v1178
    %v1180 = vpop.f32.mrb[0].mxu0
    %v1181 = vadd.f32 0.0, %v1180
    %v1182 = vpop.f32.mrb[0].mxu0
    %v1183 = vadd.f32 0.0, %v1182
    %1184 = vmatprep.mubr.bf16.mxu0 %v1076
    %1185 = vmatmul.mubr.bf16.gmra.mrb[0].mxu0 %v1075
    %v1186 = vpop.f32.mrb[0].mxu0
    %v1187 = vadd.f32 0.0, %v1186
    %v1188 = vpop.f32.mrb[0].mxu0
    %v1189 = vadd.f32 0.0, %v1188
    %v1190 = vpop.f32.mrb[0].mxu0
    %v1191 = vadd.f32 0.0, %v1190
    %v1192 = vpop.f32.mrb[0].mxu0
    %v1193 = vadd.f32 0.0, %v1192
    %1194 = vmatprep.mubr.bf16.mxu0 %v1079
    %1195 = vmatmul.mubr.bf16.gmra.mrb[0].mxu0 %v1078
    %v1196 = vpop.f32.mrb[0].mxu0
    %v1197 = vadd.f32 0.0, %v1196
    %v1198 = vpop.f32.mrb[0].mxu0
    %v1199 = vadd.f32 0.0, %v1198
    %v1200 = vpop.f32.mrb[0].mxu0
    %v1201 = vadd.f32 0.0, %v1200
    %v1202 = vpop.f32.mrb[0].mxu0
    %v1203 = vadd.f32 0.0, %v1202
    %1204 = vdwg.mxu0
    %1205 = vmatprep.subr.bf16.mxu0 %v996
    %1206 = vmatpush1.bf16.msra.mxu0 %v995
    %1207 = vmatprep.subr.bf16.mxu0 %v1000
    %1208 = vmatpush1.bf16.msra.mxu0 %v999
    %1209 = vmatprep.subr.bf16.mxu0 0
    %1210 = vmatpush1.bf16.msra.mxu0 0
    %1211 = vmatprep.subr.bf16.mxu0 0
    %1212 = vmatpush1.bf16.msra.mxu0 0
    %1213 = vmatprep.subr.bf16.mxu0 0
    %1214 = vmatpush1.bf16.msra.mxu0 0
    %1215 = vmatprep.subr.bf16.mxu0 0
    %1216 = vmatpush1.bf16.msra.mxu0 0
    %1217 = vmatprep.subr.bf16.mxu0 0
    %1218 = vmatpush1.bf16.msra.mxu0 0
    %1219 = vmatprep.subr.bf16.mxu0 0
    %1220 = vmatpush1.bf16.msra.mxu0 0
    %1221 = vmatprep.subr.bf16.mxu0 0
    %1222 = vmatpush1.bf16.msra.mxu0 0
    %1223 = vmatprep.subr.bf16.mxu0 0
    %1224 = vmatpush1.bf16.msra.mxu0 0
    %1225 = vmatprep.subr.bf16.mxu0 0
    %1226 = vmatpush1.bf16.msra.mxu0 0
    %1227 = vmatprep.subr.bf16.mxu0 0
    %1228 = vmatpush1.bf16.msra.mxu0 0
    %1229 = vmatprep.subr.bf16.mxu0 0
    %1230 = vmatpush1.bf16.msra.mxu0 0
    %1231 = vmatprep.subr.bf16.mxu0 0
    %1232 = vmatpush1.bf16.msra.mxu0 0
    %1233 = vmatprep.subr.bf16.mxu0 0
    %1234 = vmatpush1.bf16.msra.mxu0 0
    %1235 = vmatprep.subr.bf16.mxu0 0
    %1236 = vmatpush1.bf16.msra.mxu0 0
    %1237 = vmatprep.mubr.bf16.mxu0 0
    %1238 = vmatmul.mubr.bf16.gmra.mrb[0].mxu0 %v1095
    %v1239 = vpop.f32.mrb[0].mxu0
    %v1240 = vadd.f32 %v1147, %v1239
    %v1241 = vpop.f32.mrb[0].mxu0
    %v1242 = vadd.f32 %v1149, %v1241
    %v1243 = vpop.f32.mrb[0].mxu0
    %v1244 = vadd.f32 %v1151, %v1243
    %v1245 = vpop.f32.mrb[0].mxu0
    %v1246 = vadd.f32 %v1153, %v1245
    %1247 = vmatprep.mubr.bf16.mxu0 0
    %1248 = vmatmul.mubr.bf16.gmra.mrb[0].mxu0 %v1098
    %v1249 = vpop.f32.mrb[0].mxu0
    %v1250 = vadd.f32 %v1157, %v1249
    %v1251 = vpop.f32.mrb[0].mxu0
    %v1252 = vadd.f32 %v1159, %v1251
    %v1253 = vpop.f32.mrb[0].mxu0
    %v1254 = vadd.f32 %v1161, %v1253
    %v1255 = vpop.f32.mrb[0].mxu0
    %v1256 = vadd.f32 %v1163, %v1255
    %1257 = vmatprep.mubr.bf16.mxu0 0
    %1258 = vmatmul.mubr.bf16.gmra.mrb[0].mxu0 %v1101
    %v1259 = vpop.f32.mrb[0].mxu0
    %v1260 = vadd.f32 %v1167, %v1259
    %v1261 = vpop.f32.mrb[0].mxu0
    %v1262 = vadd.f32 %v1169, %v1261
    %v1263 = vpop.f32.mrb[0].mxu0
    %v1264 = vadd.f32 %v1171, %v1263
    %v1265 = vpop.f32.mrb[0].mxu0
    %v1266 = vadd.f32 %v1173, %v1265
    %1267 = vmatprep.mubr.bf16.mxu0 0
    %1268 = vmatmul.mubr.bf16.gmra.mrb[0].mxu0 %v1104
    %v1269 = vpop.f32.mrb[0].mxu0
    %v1270 = vadd.f32 %v1177, %v1269
    %v1271 = vpop.f32.mrb[0].mxu0
    %v1272 = vadd.f32 %v1179, %v1271
    %v1273 = vpop.f32.mrb[0].mxu0
    %v1274 = vadd.f32 %v1181, %v1273
    %v1275 = vpop.f32.mrb[0].mxu0
    %v1276 = vadd.f32 %v1183, %v1275
    %1277 = vmatprep.mubr.bf16.mxu0 0
    %1278 = vmatmul.mubr.bf16.gmra.mrb[0].mxu0 %v1107
    %v1279 = vpop.f32.mrb[0].mxu0
    %v1280 = vadd.f32 %v1187, %v1279
    %v1281 = vpop.f32.mrb[0].mxu0
    %v1282 = vadd.f32 %v1189, %v1281
    %v1283 = vpop.f32.mrb[0].mxu0
    %v1284 = vadd.f32 %v1191, %v1283
    %v1285 = vpop.f32.mrb[0].mxu0
    %v1286 = vadd.f32 %v1193, %v1285
    %1287 = vmatprep.mubr.bf16.mxu0 0
    %1288 = vmatmul.mubr.bf16.gmra.mrb[0].mxu0 %v1110
    %v1289 = vpop.f32.mrb[0].mxu0
    %v1290 = vadd.f32 %v1197, %v1289
    %v1291 = vpop.f32.mrb[0].mxu0
    %v1292 = vadd.f32 %v1199, %v1291
    %v1293 = vpop.f32.mrb[0].mxu0
    %v1294 = vadd.f32 %v1201, %v1293
    %v1295 = vpop.f32.mrb[0].mxu0
    %v1296 = vadd.f32 %v1203, %v1295
    %1297 = vdwg.mxu0
    %1298 = vmatprep.subr.bf16.mxu0 %v934
    %1299 = vmatpush1.bf16.msra.mxu0 %v933
    %1300 = vmatprep.subr.bf16.mxu0 %v938
    %1301 = vmatpush1.bf16.msra.mxu0 %v937
    %1302 = vmatprep.subr.bf16.mxu0 %v942
    %1303 = vmatpush1.bf16.msra.mxu0 %v941
    %1304 = vmatprep.subr.bf16.mxu0 %v946
    %1305 = vmatpush1.bf16.msra.mxu0 %v945
    %1306 = vmatprep.subr.bf16.mxu0 %v950
    %1307 = vmatpush1.bf16.msra.mxu0 %v949
    %1308 = vmatprep.subr.bf16.mxu0 %v954
    %1309 = vmatpush1.bf16.msra.mxu0 %v953
    %1310 = vmatprep.subr.bf16.mxu0 %v958
    %1311 = vmatpush1.bf16.msra.mxu0 %v957
    %1312 = vmatprep.subr.bf16.mxu0 %v962
    %1313 = vmatpush1.bf16.msra.mxu0 %v961
    %1314 = vmatprep.subr.bf16.mxu0 %v966
    %1315 = vmatpush1.bf16.msra.mxu0 %v965
    %1316 = vmatprep.subr.bf16.mxu0 %v970
    %1317 = vmatpush1.bf16.msra.mxu0 %v969
    %1318 = vmatprep.subr.bf16.mxu0 %v974
    %1319 = vmatpush1.bf16.msra.mxu0 %v973
    %1320 = vmatprep.subr.bf16.mxu0 %v978
    %1321 = vmatpush1.bf16.msra.mxu0 %v977
    %1322 = vmatprep.subr.bf16.mxu0 %v982
    %1323 = vmatpush1.bf16.msra.mxu0 %v981
    %1324 = vmatprep.subr.bf16.mxu0 %v986
    %1325 = vmatpush1.bf16.msra.mxu0 %v985
    %1326 = vmatprep.subr.bf16.mxu0 %v990
    %1327 = vmatpush1.bf16.msra.mxu0 %v989
    %1328 = vmatprep.subr.bf16.mxu0 %v994
    %1329 = vmatpush1.bf16.msra.mxu0 %v993
    %1330 = vmatprep.mubr.bf16.mxu0 %v1064
    %1331 = vmatmul.mubr.bf16.gmra.mrb[0].mxu0 %v1063
    %v1332 = vpop.f32.mrb[0].mxu0
    %v1333 = vadd.f32 0.0, %v1332
    %v1334 = vpop.f32.mrb[0].mxu0
    %v1335 = vadd.f32 0.0, %v1334
    %v1336 = vpop.f32.mrb[0].mxu0
    %v1337 = vadd.f32 0.0, %v1336
    %v1338 = vpop.f32.mrb[0].mxu0
    %v1339 = vadd.f32 0.0, %v1338
    %1340 = vmatprep.mubr.bf16.mxu0 %v1067
    %1341 = vmatmul.mubr.bf16.gmra.mrb[0].mxu0 %v1066
    %v1342 = vpop.f32.mrb[0].mxu0
    %v1343 = vadd.f32 0.0, %v1342
    %v1344 = vpop.f32.mrb[0].mxu0
    %v1345 = vadd.f32 0.0, %v1344
    %v1346 = vpop.f32.mrb[0].mxu0
    %v1347 = vadd.f32 0.0, %v1346
    %v1348 = vpop.f32.mrb[0].mxu0
    %v1349 = vadd.f32 0.0, %v1348
    %1350 = vmatprep.mubr.bf16.mxu0 %v1070
    %1351 = vmatmul.mubr.bf16.gmra.mrb[0].mxu0 %v1069
    %v1352 = vpop.f32.mrb[0].mxu0
    %v1353 = vadd.f32 0.0, %v1352
    %v1354 = vpop.f32.mrb[0].mxu0
    %v1355 = vadd.f32 0.0, %v1354
    %v1356 = vpop.f32.mrb[0].mxu0
    %v1357 = vadd.f32 0.0, %v1356
    %v1358 = vpop.f32.mrb[0].mxu0
    %v1359 = vadd.f32 0.0, %v1358
    %1360 = vmatprep.mubr.bf16.mxu0 %v1073
    %1361 = vmatmul.mubr.bf16.gmra.mrb[0].mxu0 %v1072
    %v1362 = vpop.f32.mrb[0].mxu0
    %v1363 = vadd.f32 0.0, %v1362
    %v1364 = vpop.f32.mrb[0].mxu0
    %v1365 = vadd.f32 0.0, %v1364
    %v1366 = vpop.f32.mrb[0].mxu0
    %v1367 = vadd.f32 0.0, %v1366
    %v1368 = vpop.f32.mrb[0].mxu0
    %v1369 = vadd.f32 0.0, %v1368
    %1370 = vmatprep.mubr.bf16.mxu0 %v1076
    %1371 = vmatmul.mubr.bf16.gmra.mrb[0].mxu0 %v1075
    %v1372 = vpop.f32.mrb[0].mxu0
    %v1373 = vadd.f32 0.0, %v1372
    %v1374 = vpop.f32.mrb[0].mxu0
    %v1375 = vadd.f32 0.0, %v1374
    %v1376 = vpop.f32.mrb[0].mxu0
    %v1377 = vadd.f32 0.0, %v1376
    %v1378 = vpop.f32.mrb[0].mxu0
    %v1379 = vadd.f32 0.0, %v1378
    %1380 = vmatprep.mubr.bf16.mxu0 %v1079
    %1381 = vmatmul.mubr.bf16.gmra.mrb[0].mxu0 %v1078
    %v1382 = vpop.f32.mrb[0].mxu0
    %v1383 = vadd.f32 0.0, %v1382
    %v1384 = vpop.f32.mrb[0].mxu0
    %v1385 = vadd.f32 0.0, %v1384
    %v1386 = vpop.f32.mrb[0].mxu0
    %v1387 = vadd.f32 0.0, %v1386
    %v1388 = vpop.f32.mrb[0].mxu0
    %v1389 = vadd.f32 0.0, %v1388
    %1390 = vdwg.mxu0
    %1391 = vmatprep.subr.bf16.mxu0 %v998
    %1392 = vmatpush1.bf16.msra.mxu0 %v997
    %1393 = vmatprep.subr.bf16.mxu0 %v1002
    %1394 = vmatpush1.bf16.msra.mxu0 %v1001
    %1395 = vmatprep.subr.bf16.mxu0 0
    %1396 = vmatpush1.bf16.msra.mxu0 0
    %1397 = vmatprep.subr.bf16.mxu0 0
    %1398 = vmatpush1.bf16.msra.mxu0 0
    %1399 = vmatprep.subr.bf16.mxu0 0
    %1400 = vmatpush1.bf16.msra.mxu0 0
    %1401 = vmatprep.subr.bf16.mxu0 0
    %1402 = vmatpush1.bf16.msra.mxu0 0
    %1403 = vmatprep.subr.bf16.mxu0 0
    %1404 = vmatpush1.bf16.msra.mxu0 0
    %1405 = vmatprep.subr.bf16.mxu0 0
    %1406 = vmatpush1.bf16.msra.mxu0 0
    %1407 = vmatprep.subr.bf16.mxu0 0
    %1408 = vmatpush1.bf16.msra.mxu0 0
    %1409 = vmatprep.subr.bf16.mxu0 0
    %1410 = vmatpush1.bf16.msra.mxu0 0
    %1411 = vmatprep.subr.bf16.mxu0 0
    %1412 = vmatpush1.bf16.msra.mxu0 0
    %1413 = vmatprep.subr.bf16.mxu0 0
    %1414 = vmatpush1.bf16.msra.mxu0 0
    %1415 = vmatprep.subr.bf16.mxu0 0
    %1416 = vmatpush1.bf16.msra.mxu0 0
    %1417 = vmatprep.subr.bf16.mxu0 0
    %1418 = vmatpush1.bf16.msra.mxu0 0
    %1419 = vmatprep.subr.bf16.mxu0 0
    %1420 = vmatpush1.bf16.msra.mxu0 0
    %1421 = vmatprep.subr.bf16.mxu0 0
    %1422 = vmatpush1.bf16.msra.mxu0 0
    %1423 = vmatprep.mubr.bf16.mxu0 0
    %1424 = vmatmul.mubr.bf16.gmra.mrb[0].mxu0 %v1095
    %v1425 = vpop.f32.mrb[0].mxu0
    %v1426 = vadd.f32 %v1333, %v1425
    %v1427 = vpop.f32.mrb[0].mxu0
    %v1428 = vadd.f32 %v1335, %v1427
    %v1429 = vpop.f32.mrb[0].mxu0
    %v1430 = vadd.f32 %v1337, %v1429
    %v1431 = vpop.f32.mrb[0].mxu0
    %v1432 = vadd.f32 %v1339, %v1431
    %1433 = vmatprep.mubr.bf16.mxu0 0
    %1434 = vmatmul.mubr.bf16.gmra.mrb[0].mxu0 %v1098
    %v1435 = vpop.f32.mrb[0].mxu0
    %v1436 = vadd.f32 %v1343, %v1435
    %v1437 = vpop.f32.mrb[0].mxu0
    %v1438 = vadd.f32 %v1345, %v1437
    %v1439 = vpop.f32.mrb[0].mxu0
    %v1440 = vadd.f32 %v1347, %v1439
    %v1441 = vpop.f32.mrb[0].mxu0
    %v1442 = vadd.f32 %v1349, %v1441
    %1443 = vmatprep.mubr.bf16.mxu0 0
    %1444 = vmatmul.mubr.bf16.gmra.mrb[0].mxu0 %v1101
    %v1445 = vpop.f32.mrb[0].mxu0
    %v1446 = vadd.f32 %v1353, %v1445
    %v1447 = vpop.f32.mrb[0].mxu0
    %v1448 = vadd.f32 %v1355, %v1447
    %v1449 = vpop.f32.mrb[0].mxu0
    %v1450 = vadd.f32 %v1357, %v1449
    %v1451 = vpop.f32.mrb[0].mxu0
    %v1452 = vadd.f32 %v1359, %v1451
    %1453 = vmatprep.mubr.bf16.mxu0 0
    %1454 = vmatmul.mubr.bf16.gmra.mrb[0].mxu0 %v1104
    %v1455 = vpop.f32.mrb[0].mxu0
    %v1456 = vadd.f32 %v1363, %v1455
    %v1457 = vpop.f32.mrb[0].mxu0
    %v1458 = vadd.f32 %v1365, %v1457
    %v1459 = vpop.f32.mrb[0].mxu0
    %v1460 = vadd.f32 %v1367, %v1459
    %v1461 = vpop.f32.mrb[0].mxu0
    %v1462 = vadd.f32 %v1369, %v1461
    %1463 = vmatprep.mubr.bf16.mxu0 0
    %1464 = vmatmul.mubr.bf16.gmra.mrb[0].mxu0 %v1107
    %v1465 = vpop.f32.mrb[0].mxu0
    %v1466 = vadd.f32 %v1373, %v1465
    %v1467 = vpop.f32.mrb[0].mxu0
    %v1468 = vadd.f32 %v1375, %v1467
    %v1469 = vpop.f32.mrb[0].mxu0
    %v1470 = vadd.f32 %v1377, %v1469
    %v1471 = vpop.f32.mrb[0].mxu0
    %v1472 = vadd.f32 %v1379, %v1471
    %1473 = vmatprep.mubr.bf16.mxu0 0
    %1474 = vmatmul.mubr.bf16.gmra.mrb[0].mxu0 %v1110
    %v1475 = vpop.f32.mrb[0].mxu0
    %v1476 = vadd.f32 %v1383, %v1475
    %v1477 = vpop.f32.mrb[0].mxu0
    %v1478 = vadd.f32 %v1385, %v1477
    %v1479 = vpop.f32.mrb[0].mxu0
    %v1480 = vadd.f32 %v1387, %v1479
    %v1481 = vpop.f32.mrb[0].mxu0
    %v1482 = vadd.f32 %v1389, %v1481
    %1483 = vdwg.mxu0
    %1485 = vset.pattern.permute.xlu0 0
    %1486 = vperm.xlu0 %1485, %v101
    %v1487 = vpop.permute.xlu0 %1486
    %1490 = vset.pattern.permute.xlu0 0
    %1491 = vperm.xlu0 %1490, %v102
    %v1492 = vpop.permute.xlu0 %1491
    %v1494 = vadd.f32 %v1240, %v1487
    %v1495 = vadd.f32 %v1242, %v1487
    %v1496 = vadd.f32 %v1426, %v1487
    %v1497 = vadd.f32 %v1428, %v1487
    %v1498 = vadd.f32 %v1244, %v1492
    %v1499 = vadd.f32 %v1246, %v1492
    %v1500 = vadd.f32 %v1430, %v1492
    %v1501 = vadd.f32 %v1432, %v1492
    %vm1502 = vcmp.ge.f32.partialorder %v1494, 0.0
    %vm1503 = vcmp.ge.f32.partialorder %v1495, 0.0
    %vm1504 = vcmp.ge.f32.partialorder %v1496, 0.0
    %vm1505 = vcmp.ge.f32.partialorder %v1497, 0.0
    %vm1506 = vcmp.ge.f32.partialorder %v1498, 0.0
    %vm1507 = vcmp.ge.f32.partialorder %v1499, 0.0
    %vm1508 = vcmp.ge.f32.partialorder %v1500, 0.0
    %vm1509 = vcmp.ge.f32.partialorder %v1501, 0.0
    %v1510 = vmul.f32 %v1494, 0.2
    %v1511 = vmul.f32 %v1495, 0.2
    %v1512 = vmul.f32 %v1496, 0.2
    %v1513 = vmul.f32 %v1497, 0.2
    %v1514 = vmul.f32 %v1498, 0.2
    %v1515 = vmul.f32 %v1499, 0.2
    %v1516 = vmul.f32 %v1500, 0.2
    %v1517 = vmul.f32 %v1501, 0.2
    %v1518 = vsel %vm1502, %v1494, %v1510
    %v1519 = vsel %vm1503, %v1495, %v1511
    %v1520 = vsel %vm1504, %v1496, %v1512
    %v1521 = vsel %vm1505, %v1497, %v1513
    %v1522 = vsel %vm1506, %v1498, %v1514
    %v1523 = vsel %vm1507, %v1499, %v1515
    %v1524 = vsel %vm1508, %v1500, %v1516
    %v1525 = vsel %vm1509, %v1501, %v1517
    %1526 = vrot.lane.b32.xlu0 %v1518, 17
    %v1527 = vpop.permute.xlu0 %1526
    %1528 = vrot.lane.b32.xlu0 %v1522, 17
    %v1529 = vpop.permute.xlu0 %1528
    %1530 = vrot.lane.b32.xlu0 %v1519, 17
    %v1531 = vpop.permute.xlu0 %1530
    %1532 = vrot.lane.b32.xlu0 %v1523, 17
    %v1533 = vpop.permute.xlu0 %1532
    %1534 = vrot.lane.b32.xlu0 %v1520, 17
    %v1535 = vpop.permute.xlu0 %1534
    %1536 = vrot.lane.b32.xlu0 %v1524, 17
    %v1537 = vpop.permute.xlu0 %1536
    %1538 = vrot.lane.b32.xlu0 %v1521, 17
    %v1539 = vpop.permute.xlu0 %1538
    %1540 = vrot.lane.b32.xlu0 %v1525, 17
    %v1541 = vpop.permute.xlu0 %1540
    %v1542 = vsel %vm147, %v1535, %v1539
    %v1543 = vsel %vm147, %v1537, %v1541
    %v1544 = vsel %vm147, %v1531, %v1535
    %v1545 = vsel %vm147, %v1533, %v1537
    %v1546 = vsel %vm147, %v1527, %v1531
    %v1547 = vsel %vm147, %v1529, %v1533
    %v1548 = vsel %vm147, %v1539, %v1527
    %v1549 = vsel %vm147, %v1541, %v1529
    %v1550 = vld [vmem:[%s1] sm:$0xff]
    %v1551 = vld [vmem:[%s1 + $0x8] sm:$0xff]
    %v1552 = vld [vmem:[%s1 + $0x10] sm:$0xff]
    %v1553 = vld [vmem:[%s1 + $0x18] sm:$0xff]
    %v1554 = vld [vmem:[%s1 + $0x20] sm:$0xff]
    %v1555 = vld [vmem:[%s1 + $0x28] sm:$0xff]
    %v1556 = vld [vmem:[%s1 + $0x30] sm:$0xff]
    %v1557 = vld [vmem:[%s1 + $0x38] sm:$0xff]
    %v1558 = vmul.f32 %v1548, %v1550
    %v1559 = vmul.f32 %v1546, %v1551
    %v1560 = vmul.f32 %v1544, %v1552
    %v1561 = vmul.f32 %v1542, %v1553
    %v1562 = vmul.f32 %v1549, %v1554
    %v1563 = vmul.f32 %v1547, %v1555
    %v1564 = vmul.f32 %v1545, %v1556
    %v1565 = vmul.f32 %v1543, %v1557
    %v1566 = vpack.c.bf16 %v1562, %v1558
    %v1567 = vpack.c.bf16 %v1563, %v1559
    %v1568 = vpack.c.bf16 %v1564, %v1560
    %v1569 = vpack.c.bf16 %v1565, %v1561
    %1570 = vst [vmem:[#allocation2] sm:$0xff] %v1566
    %1571 = vst [vmem:[#allocation2 + $0x8] sm:$0xff] %v1567
    %1572 = vst [vmem:[#allocation2 + $0x10] sm:$0xff] %v1568
    %1573 = vst [vmem:[#allocation2 + $0x18] sm:$0xff] %v1569
    %1574 = vrot.lane.b32.xlu0 %v1518, 16
    %v1575 = vpop.permute.xlu0 %1574
    %1576 = vrot.lane.b32.xlu0 %v1522, 16
    %v1577 = vpop.permute.xlu0 %1576
    %1578 = vrot.lane.b32.xlu0 %v1519, 16
    %v1579 = vpop.permute.xlu0 %1578
    %1580 = vrot.lane.b32.xlu0 %v1523, 16
    %v1581 = vpop.permute.xlu0 %1580
    %1582 = vrot.lane.b32.xlu0 %v1520, 16
    %v1583 = vpop.permute.xlu0 %1582
    %1584 = vrot.lane.b32.xlu0 %v1524, 16
    %v1585 = vpop.permute.xlu0 %1584
    %1586 = vrot.lane.b32.xlu0 %v1521, 16
    %v1587 = vpop.permute.xlu0 %1586
    %1588 = vrot.lane.b32.xlu0 %v1525, 16
    %v1589 = vpop.permute.xlu0 %1588
    %v1590 = vsel %vm244, %v1583, %v1587
    %v1591 = vsel %vm244, %v1585, %v1589
    %v1592 = vsel %vm244, %v1579, %v1583
    %v1593 = vsel %vm244, %v1581, %v1585
    %v1594 = vsel %vm244, %v1575, %v1579
    %v1595 = vsel %vm244, %v1577, %v1581
    %v1596 = vsel %vm244, %v1587, %v1575
    %v1597 = vsel %vm244, %v1589, %v1577
    %v1598 = vld [vmem:[%s1 + $0x80] sm:$0xff]
    %v1599 = vld [vmem:[%s1 + $0x88] sm:$0xff]
    %v1600 = vld [vmem:[%s1 + $0x90] sm:$0xff]
    %v1601 = vld [vmem:[%s1 + $0x98] sm:$0xff]
    %v1602 = vld [vmem:[%s1 + $0xa0] sm:$0xff]
    %v1603 = vld [vmem:[%s1 + $0xa8] sm:$0xff]
    %v1604 = vld [vmem:[%s1 + $0xb0] sm:$0xff]
    %v1605 = vld [vmem:[%s1 + $0xb8] sm:$0xff]
    %v1606 = vmul.f32 %v1596, %v1598
    %v1607 = vmul.f32 %v1594, %v1599
    %v1608 = vmul.f32 %v1592, %v1600
    %v1609 = vmul.f32 %v1590, %v1601
    %v1610 = vmul.f32 %v1597, %v1602
    %v1611 = vmul.f32 %v1595, %v1603
    %v1612 = vmul.f32 %v1593, %v1604
    %v1613 = vmul.f32 %v1591, %v1605
    %v1614 = vpack.c.bf16 %v1610, %v1606
    %v1615 = vpack.c.bf16 %v1611, %v1607
    %v1616 = vpack.c.bf16 %v1612, %v1608
    %v1617 = vpack.c.bf16 %v1613, %v1609
    %1618 = vst [vmem:[#allocation2 + $0x20] sm:$0xff] %v1614
    %1619 = vst [vmem:[#allocation2 + $0x28] sm:$0xff] %v1615
    %1620 = vst [vmem:[#allocation2 + $0x30] sm:$0xff] %v1616
    %1621 = vst [vmem:[#allocation2 + $0x38] sm:$0xff] %v1617
    %1622 = vrot.lane.b32.xlu0 %v1518, 15
    %v1623 = vpop.permute.xlu0 %1622
    %1624 = vrot.lane.b32.xlu0 %v1522, 15
    %v1625 = vpop.permute.xlu0 %1624
    %1626 = vrot.lane.b32.xlu0 %v1519, 15
    %v1627 = vpop.permute.xlu0 %1626
    %1628 = vrot.lane.b32.xlu0 %v1523, 15
    %v1629 = vpop.permute.xlu0 %1628
    %1630 = vrot.lane.b32.xlu0 %v1520, 15
    %v1631 = vpop.permute.xlu0 %1630
    %1632 = vrot.lane.b32.xlu0 %v1524, 15
    %v1633 = vpop.permute.xlu0 %1632
    %1634 = vrot.lane.b32.xlu0 %v1521, 15
    %v1635 = vpop.permute.xlu0 %1634
    %1636 = vrot.lane.b32.xlu0 %v1525, 15
    %v1637 = vpop.permute.xlu0 %1636
    %v1638 = vsel %vm341, %v1631, %v1635
    %v1639 = vsel %vm341, %v1633, %v1637
    %v1640 = vsel %vm341, %v1627, %v1631
    %v1641 = vsel %vm341, %v1629, %v1633
    %v1642 = vsel %vm341, %v1623, %v1627
    %v1643 = vsel %vm341, %v1625, %v1629
    %v1644 = vsel %vm341, %v1635, %v1623
    %v1645 = vsel %vm341, %v1637, %v1625
    %v1646 = vld [vmem:[%s1 + $0x100] sm:$0xff]
    %v1647 = vld [vmem:[%s1 + $0x108] sm:$0xff]
    %v1648 = vld [vmem:[%s1 + $0x110] sm:$0xff]
    %v1649 = vld [vmem:[%s1 + $0x118] sm:$0xff]
    %v1650 = vld [vmem:[%s1 + $0x120] sm:$0xff]
    %v1651 = vld [vmem:[%s1 + $0x128] sm:$0xff]
    %v1652 = vld [vmem:[%s1 + $0x130] sm:$0xff]
    %v1653 = vld [vmem:[%s1 + $0x138] sm:$0xff]
    %v1654 = vmul.f32 %v1644, %v1646
    %v1655 = vmul.f32 %v1642, %v1647
    %v1656 = vmul.f32 %v1640, %v1648
    %v1657 = vmul.f32 %v1638, %v1649
    %v1658 = vmul.f32 %v1645, %v1650
    %v1659 = vmul.f32 %v1643, %v1651
    %v1660 = vmul.f32 %v1641, %v1652
    %v1661 = vmul.f32 %v1639, %v1653
    %v1662 = vpack.c.bf16 %v1658, %v1654
    %v1663 = vpack.c.bf16 %v1659, %v1655
    %v1664 = vpack.c.bf16 %v1660, %v1656
    %v1665 = vpack.c.bf16 %v1661, %v1657
    %1666 = vst [vmem:[#allocation2 + $0x40] sm:$0xff] %v1662
    %1667 = vst [vmem:[#allocation2 + $0x48] sm:$0xff] %v1663
    %1668 = vst [vmem:[#allocation2 + $0x50] sm:$0xff] %v1664
    %1669 = vst [vmem:[#allocation2 + $0x58] sm:$0xff] %v1665
    %1670 = vrot.lane.b32.xlu0 %v1518, 1
    %v1671 = vpop.permute.xlu0 %1670
    %1672 = vrot.lane.b32.xlu0 %v1522, 1
    %v1673 = vpop.permute.xlu0 %1672
    %1674 = vrot.lane.b32.xlu0 %v1519, 1
    %v1675 = vpop.permute.xlu0 %1674
    %1676 = vrot.lane.b32.xlu0 %v1523, 1
    %v1677 = vpop.permute.xlu0 %1676
    %1678 = vrot.lane.b32.xlu0 %v1520, 1
    %v1679 = vpop.permute.xlu0 %1678
    %1680 = vrot.lane.b32.xlu0 %v1524, 1
    %v1681 = vpop.permute.xlu0 %1680
    %1682 = vrot.lane.b32.xlu0 %v1521, 1
    %v1683 = vpop.permute.xlu0 %1682
    %1684 = vrot.lane.b32.xlu0 %v1525, 1
    %v1685 = vpop.permute.xlu0 %1684
    %v1686 = vsel %vm438, %v1679, %v1683
    %v1687 = vsel %vm438, %v1681, %v1685
    %v1688 = vsel %vm438, %v1675, %v1679
    %v1689 = vsel %vm438, %v1677, %v1681
    %v1690 = vsel %vm438, %v1671, %v1675
    %v1691 = vsel %vm438, %v1673, %v1677
    %v1692 = vsel %vm438, %v1683, %v1671
    %v1693 = vsel %vm438, %v1685, %v1673
    %v1694 = vld [vmem:[%s1 + $0x180] sm:$0xff]
    %v1695 = vld [vmem:[%s1 + $0x188] sm:$0xff]
    %v1696 = vld [vmem:[%s1 + $0x190] sm:$0xff]
    %v1697 = vld [vmem:[%s1 + $0x198] sm:$0xff]
    %v1698 = vld [vmem:[%s1 + $0x1a0] sm:$0xff]
    %v1699 = vld [vmem:[%s1 + $0x1a8] sm:$0xff]
    %v1700 = vld [vmem:[%s1 + $0x1b0] sm:$0xff]
    %v1701 = vld [vmem:[%s1 + $0x1b8] sm:$0xff]
    %v1702 = vmul.f32 %v1692, %v1694
    %v1703 = vmul.f32 %v1690, %v1695
    %v1704 = vmul.f32 %v1688, %v1696
    %v1705 = vmul.f32 %v1686, %v1697
    %v1706 = vmul.f32 %v1693, %v1698
    %v1707 = vmul.f32 %v1691, %v1699
    %v1708 = vmul.f32 %v1689, %v1700
    %v1709 = vmul.f32 %v1687, %v1701
    %v1710 = vpack.c.bf16 %v1706, %v1702
    %v1711 = vpack.c.bf16 %v1707, %v1703
    %v1712 = vpack.c.bf16 %v1708, %v1704
    %v1713 = vpack.c.bf16 %v1709, %v1705
    %1714 = vst [vmem:[#allocation2 + $0x60] sm:$0xff] %v1710
    %1715 = vst [vmem:[#allocation2 + $0x68] sm:$0xff] %v1711
    %1716 = vst [vmem:[#allocation2 + $0x70] sm:$0xff] %v1712
    %1717 = vst [vmem:[#allocation2 + $0x78] sm:$0xff] %v1713
    %v1718 = vpack.c.bf16 %v1522, %v1518
    %v1719 = vpack.c.bf16 %v1523, %v1519
    %v1720 = vpack.c.bf16 %v1524, %v1520
    %v1721 = vpack.c.bf16 %v1525, %v1521
    %1722 = vst [vmem:[#allocation2 + $0x80] sm:$0xff] %v1718
    %1723 = vst [vmem:[#allocation2 + $0x88] sm:$0xff] %v1719
    %1724 = vst [vmem:[#allocation2 + $0x90] sm:$0xff] %v1720
    %1725 = vst [vmem:[#allocation2 + $0x98] sm:$0xff] %v1721
    %1726 = vrot.lane.b32.xlu0 %v1518, 127
    %v1727 = vpop.permute.xlu0 %1726
    %1728 = vrot.lane.b32.xlu0 %v1522, 127
    %v1729 = vpop.permute.xlu0 %1728
    %1730 = vrot.lane.b32.xlu0 %v1519, 127
    %v1731 = vpop.permute.xlu0 %1730
    %1732 = vrot.lane.b32.xlu0 %v1523, 127
    %v1733 = vpop.permute.xlu0 %1732
    %1734 = vrot.lane.b32.xlu0 %v1520, 127
    %v1735 = vpop.permute.xlu0 %1734
    %1736 = vrot.lane.b32.xlu0 %v1524, 127
    %v1737 = vpop.permute.xlu0 %1736
    %1738 = vrot.lane.b32.xlu0 %v1521, 127
    %v1739 = vpop.permute.xlu0 %1738
    %1740 = vrot.lane.b32.xlu0 %v1525, 127
    %v1741 = vpop.permute.xlu0 %1740
    %v1742 = vsel %vm551, %v1735, %v1739
    %v1743 = vsel %vm551, %v1737, %v1741
    %v1744 = vsel %vm551, %v1731, %v1735
    %v1745 = vsel %vm551, %v1733, %v1737
    %v1746 = vsel %vm551, %v1727, %v1731
    %v1747 = vsel %vm551, %v1729, %v1733
    %v1748 = vsel %vm551, %v1739, %v1727
    %v1749 = vsel %vm551, %v1741, %v1729
    %v1750 = vld [vmem:[%s1 + $0x280] sm:$0xff]
    %v1751 = vld [vmem:[%s1 + $0x288] sm:$0xff]
    %v1752 = vld [vmem:[%s1 + $0x290] sm:$0xff]
    %v1753 = vld [vmem:[%s1 + $0x298] sm:$0xff]
    %v1754 = vld [vmem:[%s1 + $0x2a0] sm:$0xff]
    %v1755 = vld [vmem:[%s1 + $0x2a8] sm:$0xff]
    %v1756 = vld [vmem:[%s1 + $0x2b0] sm:$0xff]
    %v1757 = vld [vmem:[%s1 + $0x2b8] sm:$0xff]
    %v1758 = vmul.f32 %v1746, %v1750
    %v1759 = vmul.f32 %v1744, %v1751
    %v1760 = vmul.f32 %v1742, %v1752
    %v1761 = vmul.f32 %v1748, %v1753
    %v1762 = vmul.f32 %v1747, %v1754
    %v1763 = vmul.f32 %v1745, %v1755
    %v1764 = vmul.f32 %v1743, %v1756
    %v1765 = vmul.f32 %v1749, %v1757
    %v1766 = vpack.c.bf16 %v1762, %v1758
    %v1767 = vpack.c.bf16 %v1763, %v1759
    %v1768 = vpack.c.bf16 %v1764, %v1760
    %v1769 = vpack.c.bf16 %v1765, %v1761
    %1770 = vst [vmem:[#allocation2 + $0xa0] sm:$0xff] %v1766
    %1771 = vst [vmem:[#allocation2 + $0xa8] sm:$0xff] %v1767
    %1772 = vst [vmem:[#allocation2 + $0xb0] sm:$0xff] %v1768
    %1773 = vst [vmem:[#allocation2 + $0xb8] sm:$0xff] %v1769
    %1774 = vrot.lane.b32.xlu0 %v1518, 113
    %v1775 = vpop.permute.xlu0 %1774
    %1776 = vrot.lane.b32.xlu0 %v1522, 113
    %v1777 = vpop.permute.xlu0 %1776
    %1778 = vrot.lane.b32.xlu0 %v1519, 113
    %v1779 = vpop.permute.xlu0 %1778
    %1780 = vrot.lane.b32.xlu0 %v1523, 113
    %v1781 = vpop.permute.xlu0 %1780
    %1782 = vrot.lane.b32.xlu0 %v1520, 113
    %v1783 = vpop.permute.xlu0 %1782
    %1784 = vrot.lane.b32.xlu0 %v1524, 113
    %v1785 = vpop.permute.xlu0 %1784
    %1786 = vrot.lane.b32.xlu0 %v1521, 113
    %v1787 = vpop.permute.xlu0 %1786
    %1788 = vrot.lane.b32.xlu0 %v1525, 113
    %v1789 = vpop.permute.xlu0 %1788
    %v1790 = vsel %vm648, %v1783, %v1787
    %v1791 = vsel %vm648, %v1785, %v1789
    %v1792 = vsel %vm648, %v1779, %v1783
    %v1793 = vsel %vm648, %v1781, %v1785
    %v1794 = vsel %vm648, %v1775, %v1779
    %v1795 = vsel %vm648, %v1777, %v1781
    %v1796 = vsel %vm648, %v1787, %v1775
    %v1797 = vsel %vm648, %v1789, %v1777
    %v1798 = vld [vmem:[%s1 + $0x300] sm:$0xff]
    %v1799 = vld [vmem:[%s1 + $0x308] sm:$0xff]
    %v1800 = vld [vmem:[%s1 + $0x310] sm:$0xff]
    %v1801 = vld [vmem:[%s1 + $0x318] sm:$0xff]
    %v1802 = vld [vmem:[%s1 + $0x320] sm:$0xff]
    %v1803 = vld [vmem:[%s1 + $0x328] sm:$0xff]
    %v1804 = vld [vmem:[%s1 + $0x330] sm:$0xff]
    %v1805 = vld [vmem:[%s1 + $0x338] sm:$0xff]
    %v1806 = vmul.f32 %v1794, %v1798
    %v1807 = vmul.f32 %v1792, %v1799
    %v1808 = vmul.f32 %v1790, %v1800
    %v1809 = vmul.f32 %v1796, %v1801
    %v1810 = vmul.f32 %v1795, %v1802
    %v1811 = vmul.f32 %v1793, %v1803
    %v1812 = vmul.f32 %v1791, %v1804
    %v1813 = vmul.f32 %v1797, %v1805
    %v1814 = vpack.c.bf16 %v1810, %v1806
    %v1815 = vpack.c.bf16 %v1811, %v1807
    %v1816 = vpack.c.bf16 %v1812, %v1808
    %v1817 = vpack.c.bf16 %v1813, %v1809
    %1818 = vst [vmem:[#allocation2 + $0xc0] sm:$0xff] %v1814
    %1819 = vst [vmem:[#allocation2 + $0xc8] sm:$0xff] %v1815
    %1820 = vst [vmem:[#allocation2 + $0xd0] sm:$0xff] %v1816
    %1821 = vst [vmem:[#allocation2 + $0xd8] sm:$0xff] %v1817
    %1822 = vrot.lane.b32.xlu0 %v1518, 112
    %v1823 = vpop.permute.xlu0 %1822
    %1824 = vrot.lane.b32.xlu0 %v1522, 112
    %v1825 = vpop.permute.xlu0 %1824
    %1826 = vrot.lane.b32.xlu0 %v1519, 112
    %v1827 = vpop.permute.xlu0 %1826
    %1828 = vrot.lane.b32.xlu0 %v1523, 112
    %v1829 = vpop.permute.xlu0 %1828
    %1830 = vrot.lane.b32.xlu0 %v1520, 112
    %v1831 = vpop.permute.xlu0 %1830
    %1832 = vrot.lane.b32.xlu0 %v1524, 112
    %v1833 = vpop.permute.xlu0 %1832
    %1834 = vrot.lane.b32.xlu0 %v1521, 112
    %v1835 = vpop.permute.xlu0 %1834
    %1836 = vrot.lane.b32.xlu0 %v1525, 112
    %v1837 = vpop.permute.xlu0 %1836
    %v1838 = vsel %vm745, %v1831, %v1835
    %v1839 = vsel %vm745, %v1833, %v1837
    %v1840 = vsel %vm745, %v1827, %v1831
    %v1841 = vsel %vm745, %v1829, %v1833
    %v1842 = vsel %vm745, %v1823, %v1827
    %v1843 = vsel %vm745, %v1825, %v1829
    %v1844 = vsel %vm745, %v1835, %v1823
    %v1845 = vsel %vm745, %v1837, %v1825
    %v1846 = vld [vmem:[%s1 + $0x380] sm:$0xff]
    %v1847 = vld [vmem:[%s1 + $0x388] sm:$0xff]
    %v1848 = vld [vmem:[%s1 + $0x390] sm:$0xff]
    %v1849 = vld [vmem:[%s1 + $0x398] sm:$0xff]
    %v1850 = vld [vmem:[%s1 + $0x3a0] sm:$0xff]
    %v1851 = vld [vmem:[%s1 + $0x3a8] sm:$0xff]
    %v1852 = vld [vmem:[%s1 + $0x3b0] sm:$0xff]
    %v1853 = vld [vmem:[%s1 + $0x3b8] sm:$0xff]
    %v1854 = vmul.f32 %v1842, %v1846
    %v1855 = vmul.f32 %v1840, %v1847
    %v1856 = vmul.f32 %v1838, %v1848
    %v1857 = vmul.f32 %v1844, %v1849
    %v1858 = vmul.f32 %v1843, %v1850
    %v1859 = vmul.f32 %v1841, %v1851
    %v1860 = vmul.f32 %v1839, %v1852
    %v1861 = vmul.f32 %v1845, %v1853
    %v1862 = vpack.c.bf16 %v1858, %v1854
    %v1863 = vpack.c.bf16 %v1859, %v1855
    %v1864 = vpack.c.bf16 %v1860, %v1856
    %v1865 = vpack.c.bf16 %v1861, %v1857
    %1866 = vst [vmem:[#allocation2 + $0xe0] sm:$0xff] %v1862
    %1867 = vst [vmem:[#allocation2 + $0xe8] sm:$0xff] %v1863
    %1868 = vst [vmem:[#allocation2 + $0xf0] sm:$0xff] %v1864
    %1869 = vst [vmem:[#allocation2 + $0xf8] sm:$0xff] %v1865
    %1870 = vrot.lane.b32.xlu0 %v1518, 111
    %v1871 = vpop.permute.xlu0 %1870
    %1872 = vrot.lane.b32.xlu0 %v1522, 111
    %v1873 = vpop.permute.xlu0 %1872
    %1874 = vrot.lane.b32.xlu0 %v1519, 111
    %v1875 = vpop.permute.xlu0 %1874
    %1876 = vrot.lane.b32.xlu0 %v1523, 111
    %v1877 = vpop.permute.xlu0 %1876
    %1878 = vrot.lane.b32.xlu0 %v1520, 111
    %v1879 = vpop.permute.xlu0 %1878
    %1880 = vrot.lane.b32.xlu0 %v1524, 111
    %v1881 = vpop.permute.xlu0 %1880
    %1882 = vrot.lane.b32.xlu0 %v1521, 111
    %v1883 = vpop.permute.xlu0 %1882
    %1884 = vrot.lane.b32.xlu0 %v1525, 111
    %v1885 = vpop.permute.xlu0 %1884
    %v1886 = vsel %vm842, %v1879, %v1883
    %v1887 = vsel %vm842, %v1881, %v1885
    %v1888 = vsel %vm842, %v1875, %v1879
    %v1889 = vsel %vm842, %v1877, %v1881
    %v1890 = vsel %vm842, %v1871, %v1875
    %v1891 = vsel %vm842, %v1873, %v1877
    %v1892 = vsel %vm842, %v1883, %v1871
    %v1893 = vsel %vm842, %v1885, %v1873
    %v1894 = vld [vmem:[%s1 + $0x400] sm:$0xff]
    %v1895 = vld [vmem:[%s1 + $0x408] sm:$0xff]
    %v1896 = vld [vmem:[%s1 + $0x410] sm:$0xff]
    %v1897 = vld [vmem:[%s1 + $0x418] sm:$0xff]
    %v1898 = vld [vmem:[%s1 + $0x420] sm:$0xff]
    %v1899 = vld [vmem:[%s1 + $0x428] sm:$0xff]
    %v1900 = vld [vmem:[%s1 + $0x430] sm:$0xff]
    %v1901 = vld [vmem:[%s1 + $0x438] sm:$0xff]
    %v1902 = vmul.f32 %v1890, %v1894
    %v1903 = vmul.f32 %v1888, %v1895
    %v1904 = vmul.f32 %v1886, %v1896
    %v1905 = vmul.f32 %v1892, %v1897
    %v1906 = vmul.f32 %v1891, %v1898
    %v1907 = vmul.f32 %v1889, %v1899
    %v1908 = vmul.f32 %v1887, %v1900
    %v1909 = vmul.f32 %v1893, %v1901
    %v1910 = vpack.c.bf16 %v1906, %v1902
    %v1911 = vpack.c.bf16 %v1907, %v1903
    %v1912 = vpack.c.bf16 %v1908, %v1904
    %v1913 = vpack.c.bf16 %v1909, %v1905
    %1914 = vst [vmem:[#allocation2 + $0x100] sm:$0xff] %v1910
    %1915 = vst [vmem:[#allocation2 + $0x108] sm:$0xff] %v1911
    %1916 = vst [vmem:[#allocation2 + $0x110] sm:$0xff] %v1912
    %1917 = vst [vmem:[#allocation2 + $0x118] sm:$0xff] %v1913
    %v1918 = vld [vmem:[%s3] sm:$0xff]
    %v1919 = vld [vmem:[%s3 + $0x8] sm:$0xff]
    %v1920 = vld [vmem:[%s3 + $0x10] sm:$0xff]
    %v1921 = vld [vmem:[%s3 + $0x18] sm:$0xff]
    %v1922 = vld [vmem:[%s3 + $0x20] sm:$0xff]
    %v1923 = vld [vmem:[%s3 + $0x28] sm:$0xff]
    %v1924 = vld [vmem:[%s3 + $0x30] sm:$0xff]
    %v1925 = vld [vmem:[%s3 + $0x38] sm:$0xff]
    %v1926 = vld [vmem:[%s3 + $0x40] sm:$0xff]
    %v1927 = vld [vmem:[%s3 + $0x48] sm:$0xff]
    %v1928 = vld [vmem:[#allocation2] sm:$0xff]
    %v1929 = vld [vmem:[#allocation2 + $0x8] sm:$0xff]
    %v1930 = vld [vmem:[#allocation2 + $0x10] sm:$0xff]
    %v1931 = vld [vmem:[#allocation2 + $0x18] sm:$0xff]
    %v1932 = vld [vmem:[#allocation2 + $0x20] sm:$0xff]
    %v1933 = vld [vmem:[#allocation2 + $0x28] sm:$0xff]
    %v1934 = vld [vmem:[#allocation2 + $0x30] sm:$0xff]
    %v1935 = vld [vmem:[#allocation2 + $0x38] sm:$0xff]
    %v1936 = vld [vmem:[#allocation2 + $0x40] sm:$0xff]
    %v1937 = vld [vmem:[#allocation2 + $0x48] sm:$0xff]
    %v1938 = vld [vmem:[#allocation2 + $0x50] sm:$0xff]
    %v1939 = vld [vmem:[#allocation2 + $0x58] sm:$0xff]
    %v1940 = vld [vmem:[#allocation2 + $0x60] sm:$0xff]
    %v1941 = vld [vmem:[#allocation2 + $0x68] sm:$0xff]
    %v1942 = vld [vmem:[#allocation2 + $0x70] sm:$0xff]
    %v1943 = vld [vmem:[#allocation2 + $0x78] sm:$0xff]
    %v1944 = vld [vmem:[#allocation2 + $0x80] sm:$0xff]
    %v1945 = vld [vmem:[#allocation2 + $0x88] sm:$0xff]
    %v1946 = vld [vmem:[#allocation2 + $0x90] sm:$0xff]
    %v1947 = vld [vmem:[#allocation2 + $0x98] sm:$0xff]
    %v1948 = vld [vmem:[#allocation2 + $0xa0] sm:$0xff]
    %v1949 = vld [vmem:[#allocation2 + $0xa8] sm:$0xff]
    %v1950 = vld [vmem:[#allocation2 + $0xb0] sm:$0xff]
    %v1951 = vld [vmem:[#allocation2 + $0xb8] sm:$0xff]
    %v1952 = vld [vmem:[#allocation2 + $0xc0] sm:$0xff]
    %v1953 = vld [vmem:[#allocation2 + $0xc8] sm:$0xff]
    %v1954 = vld [vmem:[#allocation2 + $0xd0] sm:$0xff]
    %v1955 = vld [vmem:[#allocation2 + $0xd8] sm:$0xff]
    %v1956 = vld [vmem:[#allocation2 + $0xe0] sm:$0xff]
    %v1957 = vld [vmem:[#allocation2 + $0xe8] sm:$0xff]
    %v1958 = vld [vmem:[#allocation2 + $0xf0] sm:$0xff]
    %v1959 = vld [vmem:[#allocation2 + $0xf8] sm:$0xff]
    %v1960 = vld [vmem:[#allocation2 + $0x100] sm:$0xff]
    %v1961 = vld [vmem:[#allocation2 + $0x108] sm:$0xff]
    %v1962 = vld [vmem:[#allocation2 + $0x110] sm:$0xff]
    %v1963 = vld [vmem:[#allocation2 + $0x118] sm:$0xff]
    %v1974 = vunpack.c.l.b16 %v1918
    %v1975 = vunpack.c.h.b16 %v1918
    %v1976 = vunpack.c.l.b16 %v1919
    %v1977 = vunpack.c.h.b16 %v1919
    %v1978 = vunpack.c.l.b16 %v1920
    %v1979 = vunpack.c.h.b16 %v1920
    %v1980 = vunpack.c.l.b16 %v1921
    %v1981 = vunpack.c.h.b16 %v1921
    %v1982 = vunpack.c.l.b16 %v1922
    %v1983 = vunpack.c.h.b16 %v1922
    %v1984 = vunpack.c.l.b16 %v1923
    %v1985 = vunpack.c.h.b16 %v1923
    %v1986 = vunpack.c.l.b16 %v1924
    %v1987 = vunpack.c.h.b16 %v1924
    %v1988 = vunpack.c.l.b16 %v1925
    %v1989 = vunpack.c.h.b16 %v1925
    %v1990 = vunpack.c.l.b16 %v1926
    %v1991 = vunpack.c.h.b16 %v1926
    %v1992 = vunpack.c.l.b16 %v1927
    %v1993 = vunpack.c.h.b16 %v1927
    %v1994 = vpack.c.b16 %v1976, %v1974
    %v1995 = vpack.c.b16 %v1977, %v1975
    %v1996 = vpack.c.b16 %v1980, %v1978
    %v1997 = vpack.c.b16 %v1981, %v1979
    %v1998 = vpack.c.b16 %v1984, %v1982
    %v1999 = vpack.c.b16 %v1985, %v1983
    %v2000 = vpack.c.b16 %v1988, %v1986
    %v2001 = vpack.c.b16 %v1989, %v1987
    %v2002 = vpack.c.b16 %v1992, %v1990
    %v2003 = vpack.c.b16 %v1993, %v1991
    %vm2009 = vcmask 130048
    %v2011 = vsel %vm2009, %v1995, 0
    %v2014 = vsel %vm2009, %v1997, 0
    %v2017 = vsel %vm2009, %v1999, 0
    %v2020 = vsel %vm2009, %v2001, 0
    %v2023 = vsel %vm2009, %v2003, 0
    %2025 = vmatprep.subr.bf16.mxu0 %v1929
    %2026 = vmatpush1.bf16.msra.mxu0 %v1928
    %2027 = vmatprep.subr.bf16.mxu0 %v1933
    %2028 = vmatpush1.bf16.msra.mxu0 %v1932
    %2029 = vmatprep.subr.bf16.mxu0 %v1937
    %2030 = vmatpush1.bf16.msra.mxu0 %v1936
    %2031 = vmatprep.subr.bf16.mxu0 %v1941
    %2032 = vmatpush1.bf16.msra.mxu0 %v1940
    %2033 = vmatprep.subr.bf16.mxu0 %v1945
    %2034 = vmatpush1.bf16.msra.mxu0 %v1944
    %2035 = vmatprep.subr.bf16.mxu0 %v1949
    %2036 = vmatpush1.bf16.msra.mxu0 %v1948
    %2037 = vmatprep.subr.bf16.mxu0 %v1953
    %2038 = vmatpush1.bf16.msra.mxu0 %v1952
    %2039 = vmatprep.subr.bf16.mxu0 %v1957
    %2040 = vmatpush1.bf16.msra.mxu0 %v1956
    %2041 = vmatprep.subr.bf16.mxu0 %v1961
    %2042 = vmatpush1.bf16.msra.mxu0 %v1960
    %2043 = vmatprep.subr.bf16.mxu0 0
    %2044 = vmatpush1.bf16.msra.mxu0 0
    %2045 = vmatprep.subr.bf16.mxu0 0
    %2046 = vmatpush1.bf16.msra.mxu0 0
    %2047 = vmatprep.subr.bf16.mxu0 0
    %2048 = vmatpush1.bf16.msra.mxu0 0
    %2049 = vmatprep.subr.bf16.mxu0 0
    %2050 = vmatpush1.bf16.msra.mxu0 0
    %2051 = vmatprep.subr.bf16.mxu0 0
    %2052 = vmatpush1.bf16.msra.mxu0 0
    %2053 = vmatprep.subr.bf16.mxu0 0
    %2054 = vmatpush1.bf16.msra.mxu0 0
    %2055 = vmatprep.subr.bf16.mxu0 0
    %2056 = vmatpush1.bf16.msra.mxu0 0
    %2057 = vmatprep.mubr.bf16.mxu0 %v2011
    %2058 = vmatmul.mubr.bf16.gmra.mrb[0].mxu0 %v1994
    %v2059 = vpop.f32.mrb[0].mxu0
    %v2060 = vadd.f32 0.0, %v2059
    %v2061 = vpop.f32.mrb[0].mxu0
    %v2062 = vadd.f32 0.0, %v2061
    %v2063 = vpop.f32.mrb[0].mxu0
    %v2064 = vadd.f32 0.0, %v2063
    %v2065 = vpop.f32.mrb[0].mxu0
    %v2066 = vadd.f32 0.0, %v2065
    %2067 = vmatprep.mubr.bf16.mxu0 %v2014
    %2068 = vmatmul.mubr.bf16.gmra.mrb[0].mxu0 %v1996
    %v2069 = vpop.f32.mrb[0].mxu0
    %v2070 = vadd.f32 0.0, %v2069
    %v2071 = vpop.f32.mrb[0].mxu0
    %v2072 = vadd.f32 0.0, %v2071
    %v2073 = vpop.f32.mrb[0].mxu0
    %v2074 = vadd.f32 0.0, %v2073
    %v2075 = vpop.f32.mrb[0].mxu0
    %v2076 = vadd.f32 0.0, %v2075
    %2077 = vmatprep.mubr.bf16.mxu0 %v2017
    %2078 = vmatmul.mubr.bf16.gmra.mrb[0].mxu0 %v1998
    %v2079 = vpop.f32.mrb[0].mxu0
    %v2080 = vadd.f32 0.0, %v2079
    %v2081 = vpop.f32.mrb[0].mxu0
    %v2082 = vadd.f32 0.0, %v2081
    %v2083 = vpop.f32.mrb[0].mxu0
    %v2084 = vadd.f32 0.0, %v2083
    %v2085 = vpop.f32.mrb[0].mxu0
    %v2086 = vadd.f32 0.0, %v2085
    %2087 = vmatprep.mubr.bf16.mxu0 %v2020
    %2088 = vmatmul.mubr.bf16.gmra.mrb[0].mxu0 %v2000
    %v2089 = vpop.f32.mrb[0].mxu0
    %v2090 = vadd.f32 0.0, %v2089
    %v2091 = vpop.f32.mrb[0].mxu0
    %v2092 = vadd.f32 0.0, %v2091
    %v2093 = vpop.f32.mrb[0].mxu0
    %v2094 = vadd.f32 0.0, %v2093
    %v2095 = vpop.f32.mrb[0].mxu0
    %v2096 = vadd.f32 0.0, %v2095
    %2097 = vmatprep.mubr.bf16.mxu0 %v2023
    %2098 = vmatmul.mubr.bf16.gmra.mrb[0].mxu0 %v2002
    %v2099 = vpop.f32.mrb[0].mxu0
    %v2100 = vadd.f32 0.0, %v2099
    %v2101 = vpop.f32.mrb[0].mxu0
    %v2102 = vadd.f32 0.0, %v2101
    %v2103 = vpop.f32.mrb[0].mxu0
    %v2104 = vadd.f32 0.0, %v2103
    %v2105 = vpop.f32.mrb[0].mxu0
    %v2106 = vadd.f32 0.0, %v2105
    %2107 = vdwg.mxu0
    %2108 = vmatprep.subr.bf16.mxu0 %v1931
    %2109 = vmatpush1.bf16.msra.mxu0 %v1930
    %2110 = vmatprep.subr.bf16.mxu0 %v1935
    %2111 = vmatpush1.bf16.msra.mxu0 %v1934
    %2112 = vmatprep.subr.bf16.mxu0 %v1939
    %2113 = vmatpush1.bf16.msra.mxu0 %v1938
    %2114 = vmatprep.subr.bf16.mxu0 %v1943
    %2115 = vmatpush1.bf16.msra.mxu0 %v1942
    %2116 = vmatprep.subr.bf16.mxu0 %v1947
    %2117 = vmatpush1.bf16.msra.mxu0 %v1946
    %2118 = vmatprep.subr.bf16.mxu0 %v1951
    %2119 = vmatpush1.bf16.msra.mxu0 %v1950
    %2120 = vmatprep.subr.bf16.mxu0 %v1955
    %2121 = vmatpush1.bf16.msra.mxu0 %v1954
    %2122 = vmatprep.subr.bf16.mxu0 %v1959
    %2123 = vmatpush1.bf16.msra.mxu0 %v1958
    %2124 = vmatprep.subr.bf16.mxu0 %v1963
    %2125 = vmatpush1.bf16.msra.mxu0 %v1962
    %2126 = vmatprep.subr.bf16.mxu0 0
    %2127 = vmatpush1.bf16.msra.mxu0 0
    %2128 = vmatprep.subr.bf16.mxu0 0
    %2129 = vmatpush1.bf16.msra.mxu0 0
    %2130 = vmatprep.subr.bf16.mxu0 0
    %2131 = vmatpush1.bf16.msra.mxu0 0
    %2132 = vmatprep.subr.bf16.mxu0 0
    %2133 = vmatpush1.bf16.msra.mxu0 0
    %2134 = vmatprep.subr.bf16.mxu0 0
    %2135 = vmatpush1.bf16.msra.mxu0 0
    %2136 = vmatprep.subr.bf16.mxu0 0
    %2137 = vmatpush1.bf16.msra.mxu0 0
    %2138 = vmatprep.subr.bf16.mxu0 0
    %2139 = vmatpush1.bf16.msra.mxu0 0
    %2140 = vmatprep.mubr.bf16.mxu0 %v2011
    %2141 = vmatmul.mubr.bf16.gmra.mrb[0].mxu0 %v1994
    %v2142 = vpop.f32.mrb[0].mxu0
    %v2143 = vadd.f32 0.0, %v2142
    %v2144 = vpop.f32.mrb[0].mxu0
    %v2145 = vadd.f32 0.0, %v2144
    %v2146 = vpop.f32.mrb[0].mxu0
    %v2147 = vadd.f32 0.0, %v2146
    %v2148 = vpop.f32.mrb[0].mxu0
    %v2149 = vadd.f32 0.0, %v2148
    %2150 = vmatprep.mubr.bf16.mxu0 %v2014
    %2151 = vmatmul.mubr.bf16.gmra.mrb[0].mxu0 %v1996
    %v2152 = vpop.f32.mrb[0].mxu0
    %v2153 = vadd.f32 0.0, %v2152
    %v2154 = vpop.f32.mrb[0].mxu0
    %v2155 = vadd.f32 0.0, %v2154
    %v2156 = vpop.f32.mrb[0].mxu0
    %v2157 = vadd.f32 0.0, %v2156
    %v2158 = vpop.f32.mrb[0].mxu0
    %v2159 = vadd.f32 0.0, %v2158
    %2160 = vmatprep.mubr.bf16.mxu0 %v2017
    %2161 = vmatmul.mubr.bf16.gmra.mrb[0].mxu0 %v1998
    %v2162 = vpop.f32.mrb[0].mxu0
    %v2163 = vadd.f32 0.0, %v2162
    %v2164 = vpop.f32.mrb[0].mxu0
    %v2165 = vadd.f32 0.0, %v2164
    %v2166 = vpop.f32.mrb[0].mxu0
    %v2167 = vadd.f32 0.0, %v2166
    %v2168 = vpop.f32.mrb[0].mxu0
    %v2169 = vadd.f32 0.0, %v2168
    %2170 = vmatprep.mubr.bf16.mxu0 %v2020
    %2171 = vmatmul.mubr.bf16.gmra.mrb[0].mxu0 %v2000
    %v2172 = vpop.f32.mrb[0].mxu0
    %v2173 = vadd.f32 0.0, %v2172
    %v2174 = vpop.f32.mrb[0].mxu0
    %v2175 = vadd.f32 0.0, %v2174
    %v2176 = vpop.f32.mrb[0].mxu0
    %v2177 = vadd.f32 0.0, %v2176
    %v2178 = vpop.f32.mrb[0].mxu0
    %v2179 = vadd.f32 0.0, %v2178
    %2180 = vmatprep.mubr.bf16.mxu0 %v2023
    %2181 = vmatmul.mubr.bf16.gmra.mrb[0].mxu0 %v2002
    %v2182 = vpop.f32.mrb[0].mxu0
    %v2183 = vadd.f32 0.0, %v2182
    %v2184 = vpop.f32.mrb[0].mxu0
    %v2185 = vadd.f32 0.0, %v2184
    %v2186 = vpop.f32.mrb[0].mxu0
    %v2187 = vadd.f32 0.0, %v2186
    %v2188 = vpop.f32.mrb[0].mxu0
    %v2189 = vadd.f32 0.0, %v2188
    %2190 = vdwg.mxu0
    %v2191 = vadd.f32 %v1250, %v2060
    %v2192 = vadd.f32 %v1252, %v2062
    %v2193 = vadd.f32 %v1436, %v2143
    %v2194 = vadd.f32 %v1438, %v2145
    %v2195 = vadd.f32 %v1254, %v2064
    %v2196 = vadd.f32 %v1256, %v2066
    %v2197 = vadd.f32 %v1440, %v2147
    %v2198 = vadd.f32 %v1442, %v2149
    %2200 = vset.pattern.permute.xlu0 0
    %2201 = vperm.xlu0 %2200, %v103
    %v2202 = vpop.permute.xlu0 %2201
    %2205 = vset.pattern.permute.xlu0 0
    %2206 = vperm.xlu0 %2205, %v104
    %v2207 = vpop.permute.xlu0 %2206
    %v2209 = vadd.f32 %v2191, %v2202
    %v2210 = vadd.f32 %v2192, %v2202
    %v2211 = vadd.f32 %v2193, %v2202
    %v2212 = vadd.f32 %v2194, %v2202
    %v2213 = vadd.f32 %v2195, %v2207
    %v2214 = vadd.f32 %v2196, %v2207
    %v2215 = vadd.f32 %v2197, %v2207
    %v2216 = vadd.f32 %v2198, %v2207
    %vm2217 = vcmp.ge.f32.partialorder %v2209, 0.0
    %vm2218 = vcmp.ge.f32.partialorder %v2210, 0.0
    %vm2219 = vcmp.ge.f32.partialorder %v2211, 0.0
    %vm2220 = vcmp.ge.f32.partialorder %v2212, 0.0
    %vm2221 = vcmp.ge.f32.partialorder %v2213, 0.0
    %vm2222 = vcmp.ge.f32.partialorder %v2214, 0.0
    %vm2223 = vcmp.ge.f32.partialorder %v2215, 0.0
    %vm2224 = vcmp.ge.f32.partialorder %v2216, 0.0
    %v2225 = vmul.f32 %v2209, 0.2
    %v2226 = vmul.f32 %v2210, 0.2
    %v2227 = vmul.f32 %v2211, 0.2
    %v2228 = vmul.f32 %v2212, 0.2
    %v2229 = vmul.f32 %v2213, 0.2
    %v2230 = vmul.f32 %v2214, 0.2
    %v2231 = vmul.f32 %v2215, 0.2
    %v2232 = vmul.f32 %v2216, 0.2
    %v2233 = vsel %vm2217, %v2209, %v2225
    %v2234 = vsel %vm2218, %v2210, %v2226
    %v2235 = vsel %vm2219, %v2211, %v2227
    %v2236 = vsel %vm2220, %v2212, %v2228
    %v2237 = vsel %vm2221, %v2213, %v2229
    %v2238 = vsel %vm2222, %v2214, %v2230
    %v2239 = vsel %vm2223, %v2215, %v2231
    %v2240 = vsel %vm2224, %v2216, %v2232
    %2241 = vrot.lane.b32.xlu0 %v2233, 17
    %v2242 = vpop.permute.xlu0 %2241
    %2243 = vrot.lane.b32.xlu0 %v2237, 17
    %v2244 = vpop.permute.xlu0 %2243
    %2245 = vrot.lane.b32.xlu0 %v2234, 17
    %v2246 = vpop.permute.xlu0 %2245
    %2247 = vrot.lane.b32.xlu0 %v2238, 17
    %v2248 = vpop.permute.xlu0 %2247
    %2249 = vrot.lane.b32.xlu0 %v2235, 17
    %v2250 = vpop.permute.xlu0 %2249
    %2251 = vrot.lane.b32.xlu0 %v2239, 17
    %v2252 = vpop.permute.xlu0 %2251
    %2253 = vrot.lane.b32.xlu0 %v2236, 17
    %v2254 = vpop.permute.xlu0 %2253
    %2255 = vrot.lane.b32.xlu0 %v2240, 17
    %v2256 = vpop.permute.xlu0 %2255
    %v2257 = vsel %vm147, %v2250, %v2254
    %v2258 = vsel %vm147, %v2252, %v2256
    %v2259 = vsel %vm147, %v2246, %v2250
    %v2260 = vsel %vm147, %v2248, %v2252
    %v2261 = vsel %vm147, %v2242, %v2246
    %v2262 = vsel %vm147, %v2244, %v2248
    %v2263 = vsel %vm147, %v2254, %v2242
    %v2264 = vsel %vm147, %v2256, %v2244
    %v2265 = vld [vmem:[%s1] sm:$0xff]
    %v2266 = vld [vmem:[%s1 + $0x8] sm:$0xff]
    %v2267 = vld [vmem:[%s1 + $0x10] sm:$0xff]
    %v2268 = vld [vmem:[%s1 + $0x18] sm:$0xff]
    %v2269 = vld [vmem:[%s1 + $0x20] sm:$0xff]
    %v2270 = vld [vmem:[%s1 + $0x28] sm:$0xff]
    %v2271 = vld [vmem:[%s1 + $0x30] sm:$0xff]
    %v2272 = vld [vmem:[%s1 + $0x38] sm:$0xff]
    %v2273 = vmul.f32 %v2263, %v2265
    %v2274 = vmul.f32 %v2261, %v2266
    %v2275 = vmul.f32 %v2259, %v2267
    %v2276 = vmul.f32 %v2257, %v2268
    %v2277 = vmul.f32 %v2264, %v2269
    %v2278 = vmul.f32 %v2262, %v2270
    %v2279 = vmul.f32 %v2260, %v2271
    %v2280 = vmul.f32 %v2258, %v2272
    %v2281 = vpack.c.bf16 %v2277, %v2273
    %v2282 = vpack.c.bf16 %v2278, %v2274
    %v2283 = vpack.c.bf16 %v2279, %v2275
    %v2284 = vpack.c.bf16 %v2280, %v2276
    %2285 = vst [vmem:[#allocation2] sm:$0xff] %v2281
    %2286 = vst [vmem:[#allocation2 + $0x8] sm:$0xff] %v2282
    %2287 = vst [vmem:[#allocation2 + $0x10] sm:$0xff] %v2283
    %2288 = vst [vmem:[#allocation2 + $0x18] sm:$0xff] %v2284
    %2289 = vrot.lane.b32.xlu0 %v2233, 16
    %v2290 = vpop.permute.xlu0 %2289
    %2291 = vrot.lane.b32.xlu0 %v2237, 16
    %v2292 = vpop.permute.xlu0 %2291
    %2293 = vrot.lane.b32.xlu0 %v2234, 16
    %v2294 = vpop.permute.xlu0 %2293
    %2295 = vrot.lane.b32.xlu0 %v2238, 16
    %v2296 = vpop.permute.xlu0 %2295
    %2297 = vrot.lane.b32.xlu0 %v2235, 16
    %v2298 = vpop.permute.xlu0 %2297
    %2299 = vrot.lane.b32.xlu0 %v2239, 16
    %v2300 = vpop.permute.xlu0 %2299
    %2301 = vrot.lane.b32.xlu0 %v2236, 16
    %v2302 = vpop.permute.xlu0 %2301
    %2303 = vrot.lane.b32.xlu0 %v2240, 16
    %v2304 = vpop.permute.xlu0 %2303
    %v2305 = vsel %vm244, %v2298, %v2302
    %v2306 = vsel %vm244, %v2300, %v2304
    %v2307 = vsel %vm244, %v2294, %v2298
    %v2308 = vsel %vm244, %v2296, %v2300
    %v2309 = vsel %vm244, %v2290, %v2294
    %v2310 = vsel %vm244, %v2292, %v2296
    %v2311 = vsel %vm244, %v2302, %v2290
    %v2312 = vsel %vm244, %v2304, %v2292
    %v2313 = vld [vmem:[%s1 + $0x80] sm:$0xff]
    %v2314 = vld [vmem:[%s1 + $0x88] sm:$0xff]
    %v2315 = vld [vmem:[%s1 + $0x90] sm:$0xff]
    %v2316 = vld [vmem:[%s1 + $0x98] sm:$0xff]
    %v2317 = vld [vmem:[%s1 + $0xa0] sm:$0xff]
    %v2318 = vld [vmem:[%s1 + $0xa8] sm:$0xff]
    %v2319 = vld [vmem:[%s1 + $0xb0] sm:$0xff]
    %v2320 = vld [vmem:[%s1 + $0xb8] sm:$0xff]
    %v2321 = vmul.f32 %v2311, %v2313
    %v2322 = vmul.f32 %v2309, %v2314
    %v2323 = vmul.f32 %v2307, %v2315
    %v2324 = vmul.f32 %v2305, %v2316
    %v2325 = vmul.f32 %v2312, %v2317
    %v2326 = vmul.f32 %v2310, %v2318
    %v2327 = vmul.f32 %v2308, %v2319
    %v2328 = vmul.f32 %v2306, %v2320
    %v2329 = vpack.c.bf16 %v2325, %v2321
    %v2330 = vpack.c.bf16 %v2326, %v2322
    %v2331 = vpack.c.bf16 %v2327, %v2323
    %v2332 = vpack.c.bf16 %v2328, %v2324
    %2333 = vst [vmem:[#allocation2 + $0x20] sm:$0xff] %v2329
    %2334 = vst [vmem:[#allocation2 + $0x28] sm:$0xff] %v2330
    %2335 = vst [vmem:[#allocation2 + $0x30] sm:$0xff] %v2331
    %2336 = vst [vmem:[#allocation2 + $0x38] sm:$0xff] %v2332
    %2337 = vrot.lane.b32.xlu0 %v2233, 15
    %v2338 = vpop.permute.xlu0 %2337
    %2339 = vrot.lane.b32.xlu0 %v2237, 15
    %v2340 = vpop.permute.xlu0 %2339
    %2341 = vrot.lane.b32.xlu0 %v2234, 15
    %v2342 = vpop.permute.xlu0 %2341
    %2343 = vrot.lane.b32.xlu0 %v2238, 15
    %v2344 = vpop.permute.xlu0 %2343
    %2345 = vrot.lane.b32.xlu0 %v2235, 15
    %v2346 = vpop.permute.xlu0 %2345
    %2347 = vrot.lane.b32.xlu0 %v2239, 15
    %v2348 = vpop.permute.xlu0 %2347
    %2349 = vrot.lane.b32.xlu0 %v2236, 15
    %v2350 = vpop.permute.xlu0 %2349
    %2351 = vrot.lane.b32.xlu0 %v2240, 15
    %v2352 = vpop.permute.xlu0 %2351
    %v2353 = vsel %vm341, %v2346, %v2350
    %v2354 = vsel %vm341, %v2348, %v2352
    %v2355 = vsel %vm341, %v2342, %v2346
    %v2356 = vsel %vm341, %v2344, %v2348
    %v2357 = vsel %vm341, %v2338, %v2342
    %v2358 = vsel %vm341, %v2340, %v2344
    %v2359 = vsel %vm341, %v2350, %v2338
    %v2360 = vsel %vm341, %v2352, %v2340
    %v2361 = vld [vmem:[%s1 + $0x100] sm:$0xff]
    %v2362 = vld [vmem:[%s1 + $0x108] sm:$0xff]
    %v2363 = vld [vmem:[%s1 + $0x110] sm:$0xff]
    %v2364 = vld [vmem:[%s1 + $0x118] sm:$0xff]
    %v2365 = vld [vmem:[%s1 + $0x120] sm:$0xff]
    %v2366 = vld [vmem:[%s1 + $0x128] sm:$0xff]
    %v2367 = vld [vmem:[%s1 + $0x130] sm:$0xff]
    %v2368 = vld [vmem:[%s1 + $0x138] sm:$0xff]
    %v2369 = vmul.f32 %v2359, %v2361
    %v2370 = vmul.f32 %v2357, %v2362
    %v2371 = vmul.f32 %v2355, %v2363
    %v2372 = vmul.f32 %v2353, %v2364
    %v2373 = vmul.f32 %v2360, %v2365
    %v2374 = vmul.f32 %v2358, %v2366
    %v2375 = vmul.f32 %v2356, %v2367
    %v2376 = vmul.f32 %v2354, %v2368
    %v2377 = vpack.c.bf16 %v2373, %v2369
    %v2378 = vpack.c.bf16 %v2374, %v2370
    %v2379 = vpack.c.bf16 %v2375, %v2371
    %v2380 = vpack.c.bf16 %v2376, %v2372
    %2381 = vst [vmem:[#allocation2 + $0x40] sm:$0xff] %v2377
    %2382 = vst [vmem:[#allocation2 + $0x48] sm:$0xff] %v2378
    %2383 = vst [vmem:[#allocation2 + $0x50] sm:$0xff] %v2379
    %2384 = vst [vmem:[#allocation2 + $0x58] sm:$0xff] %v2380
    %2385 = vrot.lane.b32.xlu0 %v2233, 1
    %v2386 = vpop.permute.xlu0 %2385
    %2387 = vrot.lane.b32.xlu0 %v2237, 1
    %v2388 = vpop.permute.xlu0 %2387
    %2389 = vrot.lane.b32.xlu0 %v2234, 1
    %v2390 = vpop.permute.xlu0 %2389
    %2391 = vrot.lane.b32.xlu0 %v2238, 1
    %v2392 = vpop.permute.xlu0 %2391
    %2393 = vrot.lane.b32.xlu0 %v2235, 1
    %v2394 = vpop.permute.xlu0 %2393
    %2395 = vrot.lane.b32.xlu0 %v2239, 1
    %v2396 = vpop.permute.xlu0 %2395
    %2397 = vrot.lane.b32.xlu0 %v2236, 1
    %v2398 = vpop.permute.xlu0 %2397
    %2399 = vrot.lane.b32.xlu0 %v2240, 1
    %v2400 = vpop.permute.xlu0 %2399
    %v2401 = vsel %vm438, %v2394, %v2398
    %v2402 = vsel %vm438, %v2396, %v2400
    %v2403 = vsel %vm438, %v2390, %v2394
    %v2404 = vsel %vm438, %v2392, %v2396
    %v2405 = vsel %vm438, %v2386, %v2390
    %v2406 = vsel %vm438, %v2388, %v2392
    %v2407 = vsel %vm438, %v2398, %v2386
    %v2408 = vsel %vm438, %v2400, %v2388
    %v2409 = vld [vmem:[%s1 + $0x180] sm:$0xff]
    %v2410 = vld [vmem:[%s1 + $0x188] sm:$0xff]
    %v2411 = vld [vmem:[%s1 + $0x190] sm:$0xff]
    %v2412 = vld [vmem:[%s1 + $0x198] sm:$0xff]
    %v2413 = vld [vmem:[%s1 + $0x1a0] sm:$0xff]
    %v2414 = vld [vmem:[%s1 + $0x1a8] sm:$0xff]
    %v2415 = vld [vmem:[%s1 + $0x1b0] sm:$0xff]
    %v2416 = vld [vmem:[%s1 + $0x1b8] sm:$0xff]
    %v2417 = vmul.f32 %v2407, %v2409
    %v2418 = vmul.f32 %v2405, %v2410
    %v2419 = vmul.f32 %v2403, %v2411
    %v2420 = vmul.f32 %v2401, %v2412
    %v2421 = vmul.f32 %v2408, %v2413
    %v2422 = vmul.f32 %v2406, %v2414
    %v2423 = vmul.f32 %v2404, %v2415
    %v2424 = vmul.f32 %v2402, %v2416
    %v2425 = vpack.c.bf16 %v2421, %v2417
    %v2426 = vpack.c.bf16 %v2422, %v2418
    %v2427 = vpack.c.bf16 %v2423, %v2419
    %v2428 = vpack.c.bf16 %v2424, %v2420
    %2429 = vst [vmem:[#allocation2 + $0x60] sm:$0xff] %v2425
    %2430 = vst [vmem:[#allocation2 + $0x68] sm:$0xff] %v2426
    %2431 = vst [vmem:[#allocation2 + $0x70] sm:$0xff] %v2427
    %2432 = vst [vmem:[#allocation2 + $0x78] sm:$0xff] %v2428
    %v2433 = vpack.c.bf16 %v2237, %v2233
    %v2434 = vpack.c.bf16 %v2238, %v2234
    %v2435 = vpack.c.bf16 %v2239, %v2235
    %v2436 = vpack.c.bf16 %v2240, %v2236
    %2437 = vst [vmem:[#allocation2 + $0x80] sm:$0xff] %v2433
    %2438 = vst [vmem:[#allocation2 + $0x88] sm:$0xff] %v2434
    %2439 = vst [vmem:[#allocation2 + $0x90] sm:$0xff] %v2435
    %2440 = vst [vmem:[#allocation2 + $0x98] sm:$0xff] %v2436
    %2441 = vrot.lane.b32.xlu0 %v2233, 127
    %v2442 = vpop.permute.xlu0 %2441
    %2443 = vrot.lane.b32.xlu0 %v2237, 127
    %v2444 = vpop.permute.xlu0 %2443
    %2445 = vrot.lane.b32.xlu0 %v2234, 127
    %v2446 = vpop.permute.xlu0 %2445
    %2447 = vrot.lane.b32.xlu0 %v2238, 127
    %v2448 = vpop.permute.xlu0 %2447
    %2449 = vrot.lane.b32.xlu0 %v2235, 127
    %v2450 = vpop.permute.xlu0 %2449
    %2451 = vrot.lane.b32.xlu0 %v2239, 127
    %v2452 = vpop.permute.xlu0 %2451
    %2453 = vrot.lane.b32.xlu0 %v2236, 127
    %v2454 = vpop.permute.xlu0 %2453
    %2455 = vrot.lane.b32.xlu0 %v2240, 127
    %v2456 = vpop.permute.xlu0 %2455
    %v2457 = vsel %vm551, %v2450, %v2454
    %v2458 = vsel %vm551, %v2452, %v2456
    %v2459 = vsel %vm551, %v2446, %v2450
    %v2460 = vsel %vm551, %v2448, %v2452
    %v2461 = vsel %vm551, %v2442, %v2446
    %v2462 = vsel %vm551, %v2444, %v2448
    %v2463 = vsel %vm551, %v2454, %v2442
    %v2464 = vsel %vm551, %v2456, %v2444
    %v2465 = vld [vmem:[%s1 + $0x280] sm:$0xff]
    %v2466 = vld [vmem:[%s1 + $0x288] sm:$0xff]
    %v2467 = vld [vmem:[%s1 + $0x290] sm:$0xff]
    %v2468 = vld [vmem:[%s1 + $0x298] sm:$0xff]
    %v2469 = vld [vmem:[%s1 + $0x2a0] sm:$0xff]
    %v2470 = vld [vmem:[%s1 + $0x2a8] sm:$0xff]
    %v2471 = vld [vmem:[%s1 + $0x2b0] sm:$0xff]
    %v2472 = vld [vmem:[%s1 + $0x2b8] sm:$0xff]
    %v2473 = vmul.f32 %v2461, %v2465
    %v2474 = vmul.f32 %v2459, %v2466
    %v2475 = vmul.f32 %v2457, %v2467
    %v2476 = vmul.f32 %v2463, %v2468
    %v2477 = vmul.f32 %v2462, %v2469
    %v2478 = vmul.f32 %v2460, %v2470
    %v2479 = vmul.f32 %v2458, %v2471
    %v2480 = vmul.f32 %v2464, %v2472
    %v2481 = vpack.c.bf16 %v2477, %v2473
    %v2482 = vpack.c.bf16 %v2478, %v2474
    %v2483 = vpack.c.bf16 %v2479, %v2475
    %v2484 = vpack.c.bf16 %v2480, %v2476
    %2485 = vst [vmem:[#allocation2 + $0xa0] sm:$0xff] %v2481
    %2486 = vst [vmem:[#allocation2 + $0xa8] sm:$0xff] %v2482
    %2487 = vst [vmem:[#allocation2 + $0xb0] sm:$0xff] %v2483
    %2488 = vst [vmem:[#allocation2 + $0xb8] sm:$0xff] %v2484
    %2489 = vrot.lane.b32.xlu0 %v2233, 113
    %v2490 = vpop.permute.xlu0 %2489
    %2491 = vrot.lane.b32.xlu0 %v2237, 113
    %v2492 = vpop.permute.xlu0 %2491
    %2493 = vrot.lane.b32.xlu0 %v2234, 113
    %v2494 = vpop.permute.xlu0 %2493
    %2495 = vrot.lane.b32.xlu0 %v2238, 113
    %v2496 = vpop.permute.xlu0 %2495
    %2497 = vrot.lane.b32.xlu0 %v2235, 113
    %v2498 = vpop.permute.xlu0 %2497
    %2499 = vrot.lane.b32.xlu0 %v2239, 113
    %v2500 = vpop.permute.xlu0 %2499
    %2501 = vrot.lane.b32.xlu0 %v2236, 113
    %v2502 = vpop.permute.xlu0 %2501
    %2503 = vrot.lane.b32.xlu0 %v2240, 113
    %v2504 = vpop.permute.xlu0 %2503
    %v2505 = vsel %vm648, %v2498, %v2502
    %v2506 = vsel %vm648, %v2500, %v2504
    %v2507 = vsel %vm648, %v2494, %v2498
    %v2508 = vsel %vm648, %v2496, %v2500
    %v2509 = vsel %vm648, %v2490, %v2494
    %v2510 = vsel %vm648, %v2492, %v2496
    %v2511 = vsel %vm648, %v2502, %v2490
    %v2512 = vsel %vm648, %v2504, %v2492
    %v2513 = vld [vmem:[%s1 + $0x300] sm:$0xff]
    %v2514 = vld [vmem:[%s1 + $0x308] sm:$0xff]
    %v2515 = vld [vmem:[%s1 + $0x310] sm:$0xff]
    %v2516 = vld [vmem:[%s1 + $0x318] sm:$0xff]
    %v2517 = vld [vmem:[%s1 + $0x320] sm:$0xff]
    %v2518 = vld [vmem:[%s1 + $0x328] sm:$0xff]
    %v2519 = vld [vmem:[%s1 + $0x330] sm:$0xff]
    %v2520 = vld [vmem:[%s1 + $0x338] sm:$0xff]
    %v2521 = vmul.f32 %v2509, %v2513
    %v2522 = vmul.f32 %v2507, %v2514
    %v2523 = vmul.f32 %v2505, %v2515
    %v2524 = vmul.f32 %v2511, %v2516
    %v2525 = vmul.f32 %v2510, %v2517
    %v2526 = vmul.f32 %v2508, %v2518
    %v2527 = vmul.f32 %v2506, %v2519
    %v2528 = vmul.f32 %v2512, %v2520
    %v2529 = vpack.c.bf16 %v2525, %v2521
    %v2530 = vpack.c.bf16 %v2526, %v2522
    %v2531 = vpack.c.bf16 %v2527, %v2523
    %v2532 = vpack.c.bf16 %v2528, %v2524
    %2533 = vst [vmem:[#allocation2 + $0xc0] sm:$0xff] %v2529
    %2534 = vst [vmem:[#allocation2 + $0xc8] sm:$0xff] %v2530
    %2535 = vst [vmem:[#allocation2 + $0xd0] sm:$0xff] %v2531
    %2536 = vst [vmem:[#allocation2 + $0xd8] sm:$0xff] %v2532
    %2537 = vrot.lane.b32.xlu0 %v2233, 112
    %v2538 = vpop.permute.xlu0 %2537
    %2539 = vrot.lane.b32.xlu0 %v2237, 112
    %v2540 = vpop.permute.xlu0 %2539
    %2541 = vrot.lane.b32.xlu0 %v2234, 112
    %v2542 = vpop.permute.xlu0 %2541
    %2543 = vrot.lane.b32.xlu0 %v2238, 112
    %v2544 = vpop.permute.xlu0 %2543
    %2545 = vrot.lane.b32.xlu0 %v2235, 112
    %v2546 = vpop.permute.xlu0 %2545
    %2547 = vrot.lane.b32.xlu0 %v2239, 112
    %v2548 = vpop.permute.xlu0 %2547
    %2549 = vrot.lane.b32.xlu0 %v2236, 112
    %v2550 = vpop.permute.xlu0 %2549
    %2551 = vrot.lane.b32.xlu0 %v2240, 112
    %v2552 = vpop.permute.xlu0 %2551
    %v2553 = vsel %vm745, %v2546, %v2550
    %v2554 = vsel %vm745, %v2548, %v2552
    %v2555 = vsel %vm745, %v2542, %v2546
    %v2556 = vsel %vm745, %v2544, %v2548
    %v2557 = vsel %vm745, %v2538, %v2542
    %v2558 = vsel %vm745, %v2540, %v2544
    %v2559 = vsel %vm745, %v2550, %v2538
    %v2560 = vsel %vm745, %v2552, %v2540
    %v2561 = vld [vmem:[%s1 + $0x380] sm:$0xff]
    %v2562 = vld [vmem:[%s1 + $0x388] sm:$0xff]
    %v2563 = vld [vmem:[%s1 + $0x390] sm:$0xff]
    %v2564 = vld [vmem:[%s1 + $0x398] sm:$0xff]
    %v2565 = vld [vmem:[%s1 + $0x3a0] sm:$0xff]
    %v2566 = vld [vmem:[%s1 + $0x3a8] sm:$0xff]
    %v2567 = vld [vmem:[%s1 + $0x3b0] sm:$0xff]
    %v2568 = vld [vmem:[%s1 + $0x3b8] sm:$0xff]
    %v2569 = vmul.f32 %v2557, %v2561
    %v2570 = vmul.f32 %v2555, %v2562
    %v2571 = vmul.f32 %v2553, %v2563
    %v2572 = vmul.f32 %v2559, %v2564
    %v2573 = vmul.f32 %v2558, %v2565
    %v2574 = vmul.f32 %v2556, %v2566
    %v2575 = vmul.f32 %v2554, %v2567
    %v2576 = vmul.f32 %v2560, %v2568
    %v2577 = vpack.c.bf16 %v2573, %v2569
    %v2578 = vpack.c.bf16 %v2574, %v2570
    %v2579 = vpack.c.bf16 %v2575, %v2571
    %v2580 = vpack.c.bf16 %v2576, %v2572
    %2581 = vst [vmem:[#allocation2 + $0xe0] sm:$0xff] %v2577
    %2582 = vst [vmem:[#allocation2 + $0xe8] sm:$0xff] %v2578
    %2583 = vst [vmem:[#allocation2 + $0xf0] sm:$0xff] %v2579
    %2584 = vst [vmem:[#allocation2 + $0xf8] sm:$0xff] %v2580
    %2585 = vrot.lane.b32.xlu0 %v2233, 111
    %v2586 = vpop.permute.xlu0 %2585
    %2587 = vrot.lane.b32.xlu0 %v2237, 111
    %v2588 = vpop.permute.xlu0 %2587
    %2589 = vrot.lane.b32.xlu0 %v2234, 111
    %v2590 = vpop.permute.xlu0 %2589
    %2591 = vrot.lane.b32.xlu0 %v2238, 111
    %v2592 = vpop.permute.xlu0 %2591
    %2593 = vrot.lane.b32.xlu0 %v2235, 111
    %v2594 = vpop.permute.xlu0 %2593
    %2595 = vrot.lane.b32.xlu0 %v2239, 111
    %v2596 = vpop.permute.xlu0 %2595
    %2597 = vrot.lane.b32.xlu0 %v2236, 111
    %v2598 = vpop.permute.xlu0 %2597
    %2599 = vrot.lane.b32.xlu0 %v2240, 111
    %v2600 = vpop.permute.xlu0 %2599
    %v2601 = vsel %vm842, %v2594, %v2598
    %v2602 = vsel %vm842, %v2596, %v2600
    %v2603 = vsel %vm842, %v2590, %v2594
    %v2604 = vsel %vm842, %v2592, %v2596
    %v2605 = vsel %vm842, %v2586, %v2590
    %v2606 = vsel %vm842, %v2588, %v2592
    %v2607 = vsel %vm842, %v2598, %v2586
    %v2608 = vsel %vm842, %v2600, %v2588
    %v2609 = vld [vmem:[%s1 + $0x400] sm:$0xff]
    %v2610 = vld [vmem:[%s1 + $0x408] sm:$0xff]
    %v2611 = vld [vmem:[%s1 + $0x410] sm:$0xff]
    %v2612 = vld [vmem:[%s1 + $0x418] sm:$0xff]
    %v2613 = vld [vmem:[%s1 + $0x420] sm:$0xff]
    %v2614 = vld [vmem:[%s1 + $0x428] sm:$0xff]
    %v2615 = vld [vmem:[%s1 + $0x430] sm:$0xff]
    %v2616 = vld [vmem:[%s1 + $0x438] sm:$0xff]
    %v2617 = vmul.f32 %v2605, %v2609
    %v2618 = vmul.f32 %v2603, %v2610
    %v2619 = vmul.f32 %v2601, %v2611
    %v2620 = vmul.f32 %v2607, %v2612
    %v2621 = vmul.f32 %v2606, %v2613
    %v2622 = vmul.f32 %v2604, %v2614
    %v2623 = vmul.f32 %v2602, %v2615
    %v2624 = vmul.f32 %v2608, %v2616
    %v2625 = vpack.c.bf16 %v2621, %v2617
    %v2626 = vpack.c.bf16 %v2622, %v2618
    %v2627 = vpack.c.bf16 %v2623, %v2619
    %v2628 = vpack.c.bf16 %v2624, %v2620
    %2629 = vst [vmem:[#allocation2 + $0x100] sm:$0xff] %v2625
    %2630 = vst [vmem:[#allocation2 + $0x108] sm:$0xff] %v2626
    %2631 = vst [vmem:[#allocation2 + $0x110] sm:$0xff] %v2627
    %2632 = vst [vmem:[#allocation2 + $0x118] sm:$0xff] %v2628
    %v2633 = vld [vmem:[#allocation5] sm:$0xff]
    %v2634 = vld [vmem:[#allocation5 + $0x8] sm:$0xff]
    %v2635 = vld [vmem:[#allocation5 + $0x10] sm:$0xff]
    %v2636 = vld [vmem:[#allocation5 + $0x18] sm:$0xff]
    %v2637 = vld [vmem:[#allocation5 + $0x20] sm:$0xff]
    %v2638 = vld [vmem:[#allocation5 + $0x28] sm:$0xff]
    %v2639 = vld [vmem:[#allocation5 + $0x30] sm:$0xff]
    %v2640 = vld [vmem:[#allocation5 + $0x38] sm:$0xff]
    %v2641 = vld [vmem:[#allocation2] sm:$0xff]
    %v2642 = vld [vmem:[#allocation2 + $0x8] sm:$0xff]
    %v2643 = vld [vmem:[#allocation2 + $0x10] sm:$0xff]
    %v2644 = vld [vmem:[#allocation2 + $0x18] sm:$0xff]
    %v2645 = vld [vmem:[#allocation2 + $0x20] sm:$0xff]
    %v2646 = vld [vmem:[#allocation2 + $0x28] sm:$0xff]
    %v2647 = vld [vmem:[#allocation2 + $0x30] sm:$0xff]
    %v2648 = vld [vmem:[#allocation2 + $0x38] sm:$0xff]
    %v2649 = vld [vmem:[#allocation2 + $0x40] sm:$0xff]
    %v2650 = vld [vmem:[#allocation2 + $0x48] sm:$0xff]
    %v2651 = vld [vmem:[#allocation2 + $0x50] sm:$0xff]
    %v2652 = vld [vmem:[#allocation2 + $0x58] sm:$0xff]
    %v2653 = vld [vmem:[#allocation2 + $0x60] sm:$0xff]
    %v2654 = vld [vmem:[#allocation2 + $0x68] sm:$0xff]
    %v2655 = vld [vmem:[#allocation2 + $0x70] sm:$0xff]
    %v2656 = vld [vmem:[#allocation2 + $0x78] sm:$0xff]
    %v2657 = vld [vmem:[#allocation2 + $0x80] sm:$0xff]
    %v2658 = vld [vmem:[#allocation2 + $0x88] sm:$0xff]
    %v2659 = vld [vmem:[#allocation2 + $0x90] sm:$0xff]
    %v2660 = vld [vmem:[#allocation2 + $0x98] sm:$0xff]
    %v2661 = vld [vmem:[#allocation2 + $0xa0] sm:$0xff]
    %v2662 = vld [vmem:[#allocation2 + $0xa8] sm:$0xff]
    %v2663 = vld [vmem:[#allocation2 + $0xb0] sm:$0xff]
    %v2664 = vld [vmem:[#allocation2 + $0xb8] sm:$0xff]
    %v2665 = vld [vmem:[#allocation2 + $0xc0] sm:$0xff]
    %v2666 = vld [vmem:[#allocation2 + $0xc8] sm:$0xff]
    %v2667 = vld [vmem:[#allocation2 + $0xd0] sm:$0xff]
    %v2668 = vld [vmem:[#allocation2 + $0xd8] sm:$0xff]
    %v2669 = vld [vmem:[#allocation2 + $0xe0] sm:$0xff]
    %v2670 = vld [vmem:[#allocation2 + $0xe8] sm:$0xff]
    %v2671 = vld [vmem:[#allocation2 + $0xf0] sm:$0xff]
    %v2672 = vld [vmem:[#allocation2 + $0xf8] sm:$0xff]
    %v2673 = vld [vmem:[#allocation2 + $0x100] sm:$0xff]
    %v2674 = vld [vmem:[#allocation2 + $0x108] sm:$0xff]
    %v2675 = vld [vmem:[#allocation2 + $0x110] sm:$0xff]
    %v2676 = vld [vmem:[#allocation2 + $0x118] sm:$0xff]
    %v2685 = vunpack.c.l.b16 %v2633
    %v2686 = vunpack.c.h.b16 %v2633
    %v2687 = vunpack.c.l.b16 %v2634
    %v2688 = vunpack.c.h.b16 %v2634
    %v2689 = vunpack.c.l.b16 %v2635
    %v2690 = vunpack.c.h.b16 %v2635
    %v2691 = vunpack.c.l.b16 %v2636
    %v2692 = vunpack.c.h.b16 %v2636
    %v2693 = vunpack.c.l.b16 %v2637
    %v2694 = vunpack.c.h.b16 %v2637
    %v2695 = vunpack.c.l.b16 %v2638
    %v2696 = vunpack.c.h.b16 %v2638
    %v2697 = vunpack.c.l.b16 %v2639
    %v2698 = vunpack.c.h.b16 %v2639
    %v2699 = vunpack.c.l.b16 %v2640
    %v2700 = vunpack.c.h.b16 %v2640
    %v2701 = vpack.c.b16 %v2687, %v2685
    %v2702 = vpack.c.b16 %v2688, %v2686
    %v2703 = vpack.c.b16 %v2691, %v2689
    %v2704 = vpack.c.b16 %v2692, %v2690
    %v2705 = vpack.c.b16 %v2695, %v2693
    %v2706 = vpack.c.b16 %v2696, %v2694
    %v2707 = vpack.c.b16 %v2699, %v2697
    %v2708 = vpack.c.b16 %v2700, %v2698
    %v2714 = vsel %vm2009, %v2702, 0
    %v2717 = vsel %vm2009, %v2704, 0
    %v2720 = vsel %vm2009, %v2706, 0
    %v2723 = vsel %vm2009, %v2708, 0
    %2725 = vmatprep.subr.bf16.mxu0 %v2642
    %2726 = vmatpush1.bf16.msra.mxu0 %v2641
    %2727 = vmatprep.subr.bf16.mxu0 %v2646
    %2728 = vmatpush1.bf16.msra.mxu0 %v2645
    %2729 = vmatprep.subr.bf16.mxu0 %v2650
    %2730 = vmatpush1.bf16.msra.mxu0 %v2649
    %2731 = vmatprep.subr.bf16.mxu0 %v2654
    %2732 = vmatpush1.bf16.msra.mxu0 %v2653
    %2733 = vmatprep.subr.bf16.mxu0 %v2658
    %2734 = vmatpush1.bf16.msra.mxu0 %v2657
    %2735 = vmatprep.subr.bf16.mxu0 %v2662
    %2736 = vmatpush1.bf16.msra.mxu0 %v2661
    %2737 = vmatprep.subr.bf16.mxu0 %v2666
    %2738 = vmatpush1.bf16.msra.mxu0 %v2665
    %2739 = vmatprep.subr.bf16.mxu0 %v2670
    %2740 = vmatpush1.bf16.msra.mxu0 %v2669
    %2741 = vmatprep.subr.bf16.mxu0 %v2674
    %2742 = vmatpush1.bf16.msra.mxu0 %v2673
    %2743 = vmatprep.subr.bf16.mxu0 0
    %2744 = vmatpush1.bf16.msra.mxu0 0
    %2745 = vmatprep.subr.bf16.mxu0 0
    %2746 = vmatpush1.bf16.msra.mxu0 0
    %2747 = vmatprep.subr.bf16.mxu0 0
    %2748 = vmatpush1.bf16.msra.mxu0 0
    %2749 = vmatprep.subr.bf16.mxu0 0
    %2750 = vmatpush1.bf16.msra.mxu0 0
    %2751 = vmatprep.subr.bf16.mxu0 0
    %2752 = vmatpush1.bf16.msra.mxu0 0
    %2753 = vmatprep.subr.bf16.mxu0 0
    %2754 = vmatpush1.bf16.msra.mxu0 0
    %2755 = vmatprep.subr.bf16.mxu0 0
    %2756 = vmatpush1.bf16.msra.mxu0 0
    %2757 = vmatprep.mubr.bf16.mxu0 %v2714
    %2758 = vmatmul.mubr.bf16.gmra.mrb[0].mxu0 %v2701
    %v2759 = vpop.f32.mrb[0].mxu0
    %v2760 = vadd.f32 0.0, %v2759
    %v2761 = vpop.f32.mrb[0].mxu0
    %v2762 = vadd.f32 0.0, %v2761
    %v2763 = vpop.f32.mrb[0].mxu0
    %v2764 = vadd.f32 0.0, %v2763
    %v2765 = vpop.f32.mrb[0].mxu0
    %v2766 = vadd.f32 0.0, %v2765
    %2767 = vmatprep.mubr.bf16.mxu0 %v2717
    %2768 = vmatmul.mubr.bf16.gmra.mrb[0].mxu0 %v2703
    %v2769 = vpop.f32.mrb[0].mxu0
    %v2770 = vadd.f32 0.0, %v2769
    %v2771 = vpop.f32.mrb[0].mxu0
    %v2772 = vadd.f32 0.0, %v2771
    %v2773 = vpop.f32.mrb[0].mxu0
    %v2774 = vadd.f32 0.0, %v2773
    %v2775 = vpop.f32.mrb[0].mxu0
    %v2776 = vadd.f32 0.0, %v2775
    %2777 = vmatprep.mubr.bf16.mxu0 %v2720
    %2778 = vmatmul.mubr.bf16.gmra.mrb[0].mxu0 %v2705
    %v2779 = vpop.f32.mrb[0].mxu0
    %v2780 = vadd.f32 0.0, %v2779
    %v2781 = vpop.f32.mrb[0].mxu0
    %v2782 = vadd.f32 0.0, %v2781
    %v2783 = vpop.f32.mrb[0].mxu0
    %v2784 = vadd.f32 0.0, %v2783
    %v2785 = vpop.f32.mrb[0].mxu0
    %v2786 = vadd.f32 0.0, %v2785
    %2787 = vmatprep.mubr.bf16.mxu0 %v2723
    %2788 = vmatmul.mubr.bf16.gmra.mrb[0].mxu0 %v2707
    %v2789 = vpop.f32.mrb[0].mxu0
    %v2790 = vadd.f32 0.0, %v2789
    %v2791 = vpop.f32.mrb[0].mxu0
    %v2792 = vadd.f32 0.0, %v2791
    %v2793 = vpop.f32.mrb[0].mxu0
    %v2794 = vadd.f32 0.0, %v2793
    %v2795 = vpop.f32.mrb[0].mxu0
    %v2796 = vadd.f32 0.0, %v2795
    %2797 = vdwg.mxu0
    %2798 = vmatprep.subr.bf16.mxu0 %v2644
    %2799 = vmatpush1.bf16.msra.mxu0 %v2643
    %2800 = vmatprep.subr.bf16.mxu0 %v2648
    %2801 = vmatpush1.bf16.msra.mxu0 %v2647
    %2802 = vmatprep.subr.bf16.mxu0 %v2652
    %2803 = vmatpush1.bf16.msra.mxu0 %v2651
    %2804 = vmatprep.subr.bf16.mxu0 %v2656
    %2805 = vmatpush1.bf16.msra.mxu0 %v2655
    %2806 = vmatprep.subr.bf16.mxu0 %v2660
    %2807 = vmatpush1.bf16.msra.mxu0 %v2659
    %2808 = vmatprep.subr.bf16.mxu0 %v2664
    %2809 = vmatpush1.bf16.msra.mxu0 %v2663
    %2810 = vmatprep.subr.bf16.mxu0 %v2668
    %2811 = vmatpush1.bf16.msra.mxu0 %v2667
    %2812 = vmatprep.subr.bf16.mxu0 %v2672
    %2813 = vmatpush1.bf16.msra.mxu0 %v2671
    %2814 = vmatprep.subr.bf16.mxu0 %v2676
    %2815 = vmatpush1.bf16.msra.mxu0 %v2675
    %2816 = vmatprep.subr.bf16.mxu0 0
    %2817 = vmatpush1.bf16.msra.mxu0 0
    %2818 = vmatprep.subr.bf16.mxu0 0
    %2819 = vmatpush1.bf16.msra.mxu0 0
    %2820 = vmatprep.subr.bf16.mxu0 0
    %2821 = vmatpush1.bf16.msra.mxu0 0
    %2822 = vmatprep.subr.bf16.mxu0 0
    %2823 = vmatpush1.bf16.msra.mxu0 0
    %2824 = vmatprep.subr.bf16.mxu0 0
    %2825 = vmatpush1.bf16.msra.mxu0 0
    %2826 = vmatprep.subr.bf16.mxu0 0
    %2827 = vmatpush1.bf16.msra.mxu0 0
    %2828 = vmatprep.subr.bf16.mxu0 0
    %2829 = vmatpush1.bf16.msra.mxu0 0
    %2830 = vmatprep.mubr.bf16.mxu0 %v2714
    %2831 = vmatmul.mubr.bf16.gmra.mrb[0].mxu0 %v2701
    %v2832 = vpop.f32.mrb[0].mxu0
    %v2833 = vadd.f32 0.0, %v2832
    %v2834 = vpop.f32.mrb[0].mxu0
    %v2835 = vadd.f32 0.0, %v2834
    %v2836 = vpop.f32.mrb[0].mxu0
    %v2837 = vadd.f32 0.0, %v2836
    %v2838 = vpop.f32.mrb[0].mxu0
    %v2839 = vadd.f32 0.0, %v2838
    %2840 = vmatprep.mubr.bf16.mxu0 %v2717
    %2841 = vmatmul.mubr.bf16.gmra.mrb[0].mxu0 %v2703
    %v2842 = vpop.f32.mrb[0].mxu0
    %v2843 = vadd.f32 0.0, %v2842
    %v2844 = vpop.f32.mrb[0].mxu0
    %v2845 = vadd.f32 0.0, %v2844
    %v2846 = vpop.f32.mrb[0].mxu0
    %v2847 = vadd.f32 0.0, %v2846
    %v2848 = vpop.f32.mrb[0].mxu0
    %v2849 = vadd.f32 0.0, %v2848
    %2850 = vmatprep.mubr.bf16.mxu0 %v2720
    %2851 = vmatmul.mubr.bf16.gmra.mrb[0].mxu0 %v2705
    %v2852 = vpop.f32.mrb[0].mxu0
    %v2853 = vadd.f32 0.0, %v2852
    %v2854 = vpop.f32.mrb[0].mxu0
    %v2855 = vadd.f32 0.0, %v2854
    %v2856 = vpop.f32.mrb[0].mxu0
    %v2857 = vadd.f32 0.0, %v2856
    %v2858 = vpop.f32.mrb[0].mxu0
    %v2859 = vadd.f32 0.0, %v2858
    %2860 = vmatprep.mubr.bf16.mxu0 %v2723
    %2861 = vmatmul.mubr.bf16.gmra.mrb[0].mxu0 %v2707
    %v2862 = vpop.f32.mrb[0].mxu0
    %v2863 = vadd.f32 0.0, %v2862
    %v2864 = vpop.f32.mrb[0].mxu0
    %v2865 = vadd.f32 0.0, %v2864
    %v2866 = vpop.f32.mrb[0].mxu0
    %v2867 = vadd.f32 0.0, %v2866
    %v2868 = vpop.f32.mrb[0].mxu0
    %v2869 = vadd.f32 0.0, %v2868
    %2870 = vdwg.mxu0
    %v2871 = vadd.f32 %v1260, %v2070
    %v2872 = vadd.f32 %v1262, %v2072
    %v2873 = vadd.f32 %v1446, %v2153
    %v2874 = vadd.f32 %v1448, %v2155
    %v2875 = vadd.f32 %v1264, %v2074
    %v2876 = vadd.f32 %v1266, %v2076
    %v2877 = vadd.f32 %v1450, %v2157
    %v2878 = vadd.f32 %v1452, %v2159
    %v2879 = vadd.f32 %v2871, %v2760
    %v2880 = vadd.f32 %v2872, %v2762
    %v2881 = vadd.f32 %v2873, %v2833
    %v2882 = vadd.f32 %v2874, %v2835
    %v2883 = vadd.f32 %v2875, %v2764
    %v2884 = vadd.f32 %v2876, %v2766
    %v2885 = vadd.f32 %v2877, %v2837
    %v2886 = vadd.f32 %v2878, %v2839
    %2888 = vset.pattern.permute.xlu0 0
    %2889 = vperm.xlu0 %2888, %v105
    %v2890 = vpop.permute.xlu0 %2889
    %2893 = vset.pattern.permute.xlu0 0
    %2894 = vperm.xlu0 %2893, %v106
    %v2895 = vpop.permute.xlu0 %2894
    %v2897 = vadd.f32 %v2879, %v2890
    %v2898 = vadd.f32 %v2880, %v2890
    %v2899 = vadd.f32 %v2881, %v2890
    %v2900 = vadd.f32 %v2882, %v2890
    %v2901 = vadd.f32 %v2883, %v2895
    %v2902 = vadd.f32 %v2884, %v2895
    %v2903 = vadd.f32 %v2885, %v2895
    %v2904 = vadd.f32 %v2886, %v2895
    %vm2905 = vcmp.ge.f32.partialorder %v2897, 0.0
    %vm2906 = vcmp.ge.f32.partialorder %v2898, 0.0
    %vm2907 = vcmp.ge.f32.partialorder %v2899, 0.0
    %vm2908 = vcmp.ge.f32.partialorder %v2900, 0.0
    %vm2909 = vcmp.ge.f32.partialorder %v2901, 0.0
    %vm2910 = vcmp.ge.f32.partialorder %v2902, 0.0
    %vm2911 = vcmp.ge.f32.partialorder %v2903, 0.0
    %vm2912 = vcmp.ge.f32.partialorder %v2904, 0.0
    %v2913 = vmul.f32 %v2897, 0.2
    %v2914 = vmul.f32 %v2898, 0.2
    %v2915 = vmul.f32 %v2899, 0.2
    %v2916 = vmul.f32 %v2900, 0.2
    %v2917 = vmul.f32 %v2901, 0.2
    %v2918 = vmul.f32 %v2902, 0.2
    %v2919 = vmul.f32 %v2903, 0.2
    %v2920 = vmul.f32 %v2904, 0.2
    %v2921 = vsel %vm2905, %v2897, %v2913
    %v2922 = vsel %vm2906, %v2898, %v2914
    %v2923 = vsel %vm2907, %v2899, %v2915
    %v2924 = vsel %vm2908, %v2900, %v2916
    %v2925 = vsel %vm2909, %v2901, %v2917
    %v2926 = vsel %vm2910, %v2902, %v2918
    %v2927 = vsel %vm2911, %v2903, %v2919
    %v2928 = vsel %vm2912, %v2904, %v2920
    %2929 = vrot.lane.b32.xlu0 %v2921, 17
    %v2930 = vpop.permute.xlu0 %2929
    %2931 = vrot.lane.b32.xlu0 %v2925, 17
    %v2932 = vpop.permute.xlu0 %2931
    %2933 = vrot.lane.b32.xlu0 %v2922, 17
    %v2934 = vpop.permute.xlu0 %2933
    %2935 = vrot.lane.b32.xlu0 %v2926, 17
    %v2936 = vpop.permute.xlu0 %2935
    %2937 = vrot.lane.b32.xlu0 %v2923, 17
    %v2938 = vpop.permute.xlu0 %2937
    %2939 = vrot.lane.b32.xlu0 %v2927, 17
    %v2940 = vpop.permute.xlu0 %2939
    %2941 = vrot.lane.b32.xlu0 %v2924, 17
    %v2942 = vpop.permute.xlu0 %2941
    %2943 = vrot.lane.b32.xlu0 %v2928, 17
    %v2944 = vpop.permute.xlu0 %2943
    %v2945 = vsel %vm147, %v2938, %v2942
    %v2946 = vsel %vm147, %v2940, %v2944
    %v2947 = vsel %vm147, %v2934, %v2938
    %v2948 = vsel %vm147, %v2936, %v2940
    %v2949 = vsel %vm147, %v2930, %v2934
    %v2950 = vsel %vm147, %v2932, %v2936
    %v2951 = vsel %vm147, %v2942, %v2930
    %v2952 = vsel %vm147, %v2944, %v2932
    %v2953 = vld [vmem:[%s1] sm:$0xff]
    %v2954 = vld [vmem:[%s1 + $0x8] sm:$0xff]
    %v2955 = vld [vmem:[%s1 + $0x10] sm:$0xff]
    %v2956 = vld [vmem:[%s1 + $0x18] sm:$0xff]
    %v2957 = vld [vmem:[%s1 + $0x20] sm:$0xff]
    %v2958 = vld [vmem:[%s1 + $0x28] sm:$0xff]
    %v2959 = vld [vmem:[%s1 + $0x30] sm:$0xff]
    %v2960 = vld [vmem:[%s1 + $0x38] sm:$0xff]
    %v2961 = vmul.f32 %v2951, %v2953
    %v2962 = vmul.f32 %v2949, %v2954
    %v2963 = vmul.f32 %v2947, %v2955
    %v2964 = vmul.f32 %v2945, %v2956
    %v2965 = vmul.f32 %v2952, %v2957
    %v2966 = vmul.f32 %v2950, %v2958
    %v2967 = vmul.f32 %v2948, %v2959
    %v2968 = vmul.f32 %v2946, %v2960
    %v2969 = vpack.c.bf16 %v2965, %v2961
    %v2970 = vpack.c.bf16 %v2966, %v2962
    %v2971 = vpack.c.bf16 %v2967, %v2963
    %v2972 = vpack.c.bf16 %v2968, %v2964
    %2973 = vst [vmem:[#allocation2] sm:$0xff] %v2969
    %2974 = vst [vmem:[#allocation2 + $0x8] sm:$0xff] %v2970
    %2975 = vst [vmem:[#allocation2 + $0x10] sm:$0xff] %v2971
    %2976 = vst [vmem:[#allocation2 + $0x18] sm:$0xff] %v2972
    %2977 = vrot.lane.b32.xlu0 %v2921, 16
    %v2978 = vpop.permute.xlu0 %2977
    %2979 = vrot.lane.b32.xlu0 %v2925, 16
    %v2980 = vpop.permute.xlu0 %2979
    %2981 = vrot.lane.b32.xlu0 %v2922, 16
    %v2982 = vpop.permute.xlu0 %2981
    %2983 = vrot.lane.b32.xlu0 %v2926, 16
    %v2984 = vpop.permute.xlu0 %2983
    %2985 = vrot.lane.b32.xlu0 %v2923, 16
    %v2986 = vpop.permute.xlu0 %2985
    %2987 = vrot.lane.b32.xlu0 %v2927, 16
    %v2988 = vpop.permute.xlu0 %2987
    %2989 = vrot.lane.b32.xlu0 %v2924, 16
    %v2990 = vpop.permute.xlu0 %2989
    %2991 = vrot.lane.b32.xlu0 %v2928, 16
    %v2992 = vpop.permute.xlu0 %2991
    %v2993 = vsel %vm244, %v2986, %v2990
    %v2994 = vsel %vm244, %v2988, %v2992
    %v2995 = vsel %vm244, %v2982, %v2986
    %v2996 = vsel %vm244, %v2984, %v2988
    %v2997 = vsel %vm244, %v2978, %v2982
    %v2998 = vsel %vm244, %v2980, %v2984
    %v2999 = vsel %vm244, %v2990, %v2978
    %v3000 = vsel %vm244, %v2992, %v2980
    %v3001 = vld [vmem:[%s1 + $0x80] sm:$0xff]
    %v3002 = vld [vmem:[%s1 + $0x88] sm:$0xff]
    %v3003 = vld [vmem:[%s1 + $0x90] sm:$0xff]
    %v3004 = vld [vmem:[%s1 + $0x98] sm:$0xff]
    %v3005 = vld [vmem:[%s1 + $0xa0] sm:$0xff]
    %v3006 = vld [vmem:[%s1 + $0xa8] sm:$0xff]
    %v3007 = vld [vmem:[%s1 + $0xb0] sm:$0xff]
    %v3008 = vld [vmem:[%s1 + $0xb8] sm:$0xff]
    %v3009 = vmul.f32 %v2999, %v3001
    %v3010 = vmul.f32 %v2997, %v3002
    %v3011 = vmul.f32 %v2995, %v3003
    %v3012 = vmul.f32 %v2993, %v3004
    %v3013 = vmul.f32 %v3000, %v3005
    %v3014 = vmul.f32 %v2998, %v3006
    %v3015 = vmul.f32 %v2996, %v3007
    %v3016 = vmul.f32 %v2994, %v3008
    %v3017 = vpack.c.bf16 %v3013, %v3009
    %v3018 = vpack.c.bf16 %v3014, %v3010
    %v3019 = vpack.c.bf16 %v3015, %v3011
    %v3020 = vpack.c.bf16 %v3016, %v3012
    %3021 = vst [vmem:[#allocation2 + $0x20] sm:$0xff] %v3017
    %3022 = vst [vmem:[#allocation2 + $0x28] sm:$0xff] %v3018
    %3023 = vst [vmem:[#allocation2 + $0x30] sm:$0xff] %v3019
    %3024 = vst [vmem:[#allocation2 + $0x38] sm:$0xff] %v3020
    %3025 = vrot.lane.b32.xlu0 %v2921, 15
    %v3026 = vpop.permute.xlu0 %3025
    %3027 = vrot.lane.b32.xlu0 %v2925, 15
    %v3028 = vpop.permute.xlu0 %3027
    %3029 = vrot.lane.b32.xlu0 %v2922, 15
    %v3030 = vpop.permute.xlu0 %3029
    %3031 = vrot.lane.b32.xlu0 %v2926, 15
    %v3032 = vpop.permute.xlu0 %3031
    %3033 = vrot.lane.b32.xlu0 %v2923, 15
    %v3034 = vpop.permute.xlu0 %3033
    %3035 = vrot.lane.b32.xlu0 %v2927, 15
    %v3036 = vpop.permute.xlu0 %3035
    %3037 = vrot.lane.b32.xlu0 %v2924, 15
    %v3038 = vpop.permute.xlu0 %3037
    %3039 = vrot.lane.b32.xlu0 %v2928, 15
    %v3040 = vpop.permute.xlu0 %3039
    %v3041 = vsel %vm341, %v3034, %v3038
    %v3042 = vsel %vm341, %v3036, %v3040
    %v3043 = vsel %vm341, %v3030, %v3034
    %v3044 = vsel %vm341, %v3032, %v3036
    %v3045 = vsel %vm341, %v3026, %v3030
    %v3046 = vsel %vm341, %v3028, %v3032
    %v3047 = vsel %vm341, %v3038, %v3026
    %v3048 = vsel %vm341, %v3040, %v3028
    %v3049 = vld [vmem:[%s1 + $0x100] sm:$0xff]
    %v3050 = vld [vmem:[%s1 + $0x108] sm:$0xff]
    %v3051 = vld [vmem:[%s1 + $0x110] sm:$0xff]
    %v3052 = vld [vmem:[%s1 + $0x118] sm:$0xff]
    %v3053 = vld [vmem:[%s1 + $0x120] sm:$0xff]
    %v3054 = vld [vmem:[%s1 + $0x128] sm:$0xff]
    %v3055 = vld [vmem:[%s1 + $0x130] sm:$0xff]
    %v3056 = vld [vmem:[%s1 + $0x138] sm:$0xff]
    %v3057 = vmul.f32 %v3047, %v3049
    %v3058 = vmul.f32 %v3045, %v3050
    %v3059 = vmul.f32 %v3043, %v3051
    %v3060 = vmul.f32 %v3041, %v3052
    %v3061 = vmul.f32 %v3048, %v3053
    %v3062 = vmul.f32 %v3046, %v3054
    %v3063 = vmul.f32 %v3044, %v3055
    %v3064 = vmul.f32 %v3042, %v3056
    %v3065 = vpack.c.bf16 %v3061, %v3057
    %v3066 = vpack.c.bf16 %v3062, %v3058
    %v3067 = vpack.c.bf16 %v3063, %v3059
    %v3068 = vpack.c.bf16 %v3064, %v3060
    %3069 = vst [vmem:[#allocation2 + $0x40] sm:$0xff] %v3065
    %3070 = vst [vmem:[#allocation2 + $0x48] sm:$0xff] %v3066
    %3071 = vst [vmem:[#allocation2 + $0x50] sm:$0xff] %v3067
    %3072 = vst [vmem:[#allocation2 + $0x58] sm:$0xff] %v3068
    %3073 = vrot.lane.b32.xlu0 %v2921, 1
    %v3074 = vpop.permute.xlu0 %3073
    %3075 = vrot.lane.b32.xlu0 %v2925, 1
    %v3076 = vpop.permute.xlu0 %3075
    %3077 = vrot.lane.b32.xlu0 %v2922, 1
    %v3078 = vpop.permute.xlu0 %3077
    %3079 = vrot.lane.b32.xlu0 %v2926, 1
    %v3080 = vpop.permute.xlu0 %3079
    %3081 = vrot.lane.b32.xlu0 %v2923, 1
    %v3082 = vpop.permute.xlu0 %3081
    %3083 = vrot.lane.b32.xlu0 %v2927, 1
    %v3084 = vpop.permute.xlu0 %3083
    %3085 = vrot.lane.b32.xlu0 %v2924, 1
    %v3086 = vpop.permute.xlu0 %3085
    %3087 = vrot.lane.b32.xlu0 %v2928, 1
    %v3088 = vpop.permute.xlu0 %3087
    %v3089 = vsel %vm438, %v3082, %v3086
    %v3090 = vsel %vm438, %v3084, %v3088
    %v3091 = vsel %vm438, %v3078, %v3082
    %v3092 = vsel %vm438, %v3080, %v3084
    %v3093 = vsel %vm438, %v3074, %v3078
    %v3094 = vsel %vm438, %v3076, %v3080
    %v3095 = vsel %vm438, %v3086, %v3074
    %v3096 = vsel %vm438, %v3088, %v3076
    %v3097 = vld [vmem:[%s1 + $0x180] sm:$0xff]
    %v3098 = vld [vmem:[%s1 + $0x188] sm:$0xff]
    %v3099 = vld [vmem:[%s1 + $0x190] sm:$0xff]
    %v3100 = vld [vmem:[%s1 + $0x198] sm:$0xff]
    %v3101 = vld [vmem:[%s1 + $0x1a0] sm:$0xff]
    %v3102 = vld [vmem:[%s1 + $0x1a8] sm:$0xff]
    %v3103 = vld [vmem:[%s1 + $0x1b0] sm:$0xff]
    %v3104 = vld [vmem:[%s1 + $0x1b8] sm:$0xff]
    %v3105 = vmul.f32 %v3095, %v3097
    %v3106 = vmul.f32 %v3093, %v3098
    %v3107 = vmul.f32 %v3091, %v3099
    %v3108 = vmul.f32 %v3089, %v3100
    %v3109 = vmul.f32 %v3096, %v3101
    %v3110 = vmul.f32 %v3094, %v3102
    %v3111 = vmul.f32 %v3092, %v3103
    %v3112 = vmul.f32 %v3090, %v3104
    %v3113 = vpack.c.bf16 %v3109, %v3105
    %v3114 = vpack.c.bf16 %v3110, %v3106
    %v3115 = vpack.c.bf16 %v3111, %v3107
    %v3116 = vpack.c.bf16 %v3112, %v3108
    %3117 = vst [vmem:[#allocation2 + $0x60] sm:$0xff] %v3113
    %3118 = vst [vmem:[#allocation2 + $0x68] sm:$0xff] %v3114
    %3119 = vst [vmem:[#allocation2 + $0x70] sm:$0xff] %v3115
    %3120 = vst [vmem:[#allocation2 + $0x78] sm:$0xff] %v3116
    %v3121 = vpack.c.bf16 %v2925, %v2921
    %v3122 = vpack.c.bf16 %v2926, %v2922
    %v3123 = vpack.c.bf16 %v2927, %v2923
    %v3124 = vpack.c.bf16 %v2928, %v2924
    %3125 = vst [vmem:[#allocation2 + $0x80] sm:$0xff] %v3121
    %3126 = vst [vmem:[#allocation2 + $0x88] sm:$0xff] %v3122
    %3127 = vst [vmem:[#allocation2 + $0x90] sm:$0xff] %v3123
    %3128 = vst [vmem:[#allocation2 + $0x98] sm:$0xff] %v3124
    %3129 = vrot.lane.b32.xlu0 %v2921, 127
    %v3130 = vpop.permute.xlu0 %3129
    %3131 = vrot.lane.b32.xlu0 %v2925, 127
    %v3132 = vpop.permute.xlu0 %3131
    %3133 = vrot.lane.b32.xlu0 %v2922, 127
    %v3134 = vpop.permute.xlu0 %3133
    %3135 = vrot.lane.b32.xlu0 %v2926, 127
    %v3136 = vpop.permute.xlu0 %3135
    %3137 = vrot.lane.b32.xlu0 %v2923, 127
    %v3138 = vpop.permute.xlu0 %3137
    %3139 = vrot.lane.b32.xlu0 %v2927, 127
    %v3140 = vpop.permute.xlu0 %3139
    %3141 = vrot.lane.b32.xlu0 %v2924, 127
    %v3142 = vpop.permute.xlu0 %3141
    %3143 = vrot.lane.b32.xlu0 %v2928, 127
    %v3144 = vpop.permute.xlu0 %3143
    %v3145 = vsel %vm551, %v3138, %v3142
    %v3146 = vsel %vm551, %v3140, %v3144
    %v3147 = vsel %vm551, %v3134, %v3138
    %v3148 = vsel %vm551, %v3136, %v3140
    %v3149 = vsel %vm551, %v3130, %v3134
    %v3150 = vsel %vm551, %v3132, %v3136
    %v3151 = vsel %vm551, %v3142, %v3130
    %v3152 = vsel %vm551, %v3144, %v3132
    %v3153 = vld [vmem:[%s1 + $0x280] sm:$0xff]
    %v3154 = vld [vmem:[%s1 + $0x288] sm:$0xff]
    %v3155 = vld [vmem:[%s1 + $0x290] sm:$0xff]
    %v3156 = vld [vmem:[%s1 + $0x298] sm:$0xff]
    %v3157 = vld [vmem:[%s1 + $0x2a0] sm:$0xff]
    %v3158 = vld [vmem:[%s1 + $0x2a8] sm:$0xff]
    %v3159 = vld [vmem:[%s1 + $0x2b0] sm:$0xff]
    %v3160 = vld [vmem:[%s1 + $0x2b8] sm:$0xff]
    %v3161 = vmul.f32 %v3149, %v3153
    %v3162 = vmul.f32 %v3147, %v3154
    %v3163 = vmul.f32 %v3145, %v3155
    %v3164 = vmul.f32 %v3151, %v3156
    %v3165 = vmul.f32 %v3150, %v3157
    %v3166 = vmul.f32 %v3148, %v3158
    %v3167 = vmul.f32 %v3146, %v3159
    %v3168 = vmul.f32 %v3152, %v3160
    %v3169 = vpack.c.bf16 %v3165, %v3161
    %v3170 = vpack.c.bf16 %v3166, %v3162
    %v3171 = vpack.c.bf16 %v3167, %v3163
    %v3172 = vpack.c.bf16 %v3168, %v3164
    %3173 = vst [vmem:[#allocation2 + $0xa0] sm:$0xff] %v3169
    %3174 = vst [vmem:[#allocation2 + $0xa8] sm:$0xff] %v3170
    %3175 = vst [vmem:[#allocation2 + $0xb0] sm:$0xff] %v3171
    %3176 = vst [vmem:[#allocation2 + $0xb8] sm:$0xff] %v3172
    %3177 = vrot.lane.b32.xlu0 %v2921, 113
    %v3178 = vpop.permute.xlu0 %3177
    %3179 = vrot.lane.b32.xlu0 %v2925, 113
    %v3180 = vpop.permute.xlu0 %3179
    %3181 = vrot.lane.b32.xlu0 %v2922, 113
    %v3182 = vpop.permute.xlu0 %3181
    %3183 = vrot.lane.b32.xlu0 %v2926, 113
    %v3184 = vpop.permute.xlu0 %3183
    %3185 = vrot.lane.b32.xlu0 %v2923, 113
    %v3186 = vpop.permute.xlu0 %3185
    %3187 = vrot.lane.b32.xlu0 %v2927, 113
    %v3188 = vpop.permute.xlu0 %3187
    %3189 = vrot.lane.b32.xlu0 %v2924, 113
    %v3190 = vpop.permute.xlu0 %3189
    %3191 = vrot.lane.b32.xlu0 %v2928, 113
    %v3192 = vpop.permute.xlu0 %3191
    %v3193 = vsel %vm648, %v3186, %v3190
    %v3194 = vsel %vm648, %v3188, %v3192
    %v3195 = vsel %vm648, %v3182, %v3186
    %v3196 = vsel %vm648, %v3184, %v3188
    %v3197 = vsel %vm648, %v3178, %v3182
    %v3198 = vsel %vm648, %v3180, %v3184
    %v3199 = vsel %vm648, %v3190, %v3178
    %v3200 = vsel %vm648, %v3192, %v3180
    %v3201 = vld [vmem:[%s1 + $0x300] sm:$0xff]
    %v3202 = vld [vmem:[%s1 + $0x308] sm:$0xff]
    %v3203 = vld [vmem:[%s1 + $0x310] sm:$0xff]
    %v3204 = vld [vmem:[%s1 + $0x318] sm:$0xff]
    %v3205 = vld [vmem:[%s1 + $0x320] sm:$0xff]
    %v3206 = vld [vmem:[%s1 + $0x328] sm:$0xff]
    %v3207 = vld [vmem:[%s1 + $0x330] sm:$0xff]
    %v3208 = vld [vmem:[%s1 + $0x338] sm:$0xff]
    %v3209 = vmul.f32 %v3197, %v3201
    %v3210 = vmul.f32 %v3195, %v3202
    %v3211 = vmul.f32 %v3193, %v3203
    %v3212 = vmul.f32 %v3199, %v3204
    %v3213 = vmul.f32 %v3198, %v3205
    %v3214 = vmul.f32 %v3196, %v3206
    %v3215 = vmul.f32 %v3194, %v3207
    %v3216 = vmul.f32 %v3200, %v3208
    %v3217 = vpack.c.bf16 %v3213, %v3209
    %v3218 = vpack.c.bf16 %v3214, %v3210
    %v3219 = vpack.c.bf16 %v3215, %v3211
    %v3220 = vpack.c.bf16 %v3216, %v3212
    %3221 = vst [vmem:[#allocation2 + $0xc0] sm:$0xff] %v3217
    %3222 = vst [vmem:[#allocation2 + $0xc8] sm:$0xff] %v3218
    %3223 = vst [vmem:[#allocation2 + $0xd0] sm:$0xff] %v3219
    %3224 = vst [vmem:[#allocation2 + $0xd8] sm:$0xff] %v3220
    %3225 = vrot.lane.b32.xlu0 %v2921, 112
    %v3226 = vpop.permute.xlu0 %3225
    %3227 = vrot.lane.b32.xlu0 %v2925, 112
    %v3228 = vpop.permute.xlu0 %3227
    %3229 = vrot.lane.b32.xlu0 %v2922, 112
    %v3230 = vpop.permute.xlu0 %3229
    %3231 = vrot.lane.b32.xlu0 %v2926, 112
    %v3232 = vpop.permute.xlu0 %3231
    %3233 = vrot.lane.b32.xlu0 %v2923, 112
    %v3234 = vpop.permute.xlu0 %3233
    %3235 = vrot.lane.b32.xlu0 %v2927, 112
    %v3236 = vpop.permute.xlu0 %3235
    %3237 = vrot.lane.b32.xlu0 %v2924, 112
    %v3238 = vpop.permute.xlu0 %3237
    %3239 = vrot.lane.b32.xlu0 %v2928, 112
    %v3240 = vpop.permute.xlu0 %3239
    %v3241 = vsel %vm745, %v3234, %v3238
    %v3242 = vsel %vm745, %v3236, %v3240
    %v3243 = vsel %vm745, %v3230, %v3234
    %v3244 = vsel %vm745, %v3232, %v3236
    %v3245 = vsel %vm745, %v3226, %v3230
    %v3246 = vsel %vm745, %v3228, %v3232
    %v3247 = vsel %vm745, %v3238, %v3226
    %v3248 = vsel %vm745, %v3240, %v3228
    %v3249 = vld [vmem:[%s1 + $0x380] sm:$0xff]
    %v3250 = vld [vmem:[%s1 + $0x388] sm:$0xff]
    %v3251 = vld [vmem:[%s1 + $0x390] sm:$0xff]
    %v3252 = vld [vmem:[%s1 + $0x398] sm:$0xff]
    %v3253 = vld [vmem:[%s1 + $0x3a0] sm:$0xff]
    %v3254 = vld [vmem:[%s1 + $0x3a8] sm:$0xff]
    %v3255 = vld [vmem:[%s1 + $0x3b0] sm:$0xff]
    %v3256 = vld [vmem:[%s1 + $0x3b8] sm:$0xff]
    %v3257 = vmul.f32 %v3245, %v3249
    %v3258 = vmul.f32 %v3243, %v3250
    %v3259 = vmul.f32 %v3241, %v3251
    %v3260 = vmul.f32 %v3247, %v3252
    %v3261 = vmul.f32 %v3246, %v3253
    %v3262 = vmul.f32 %v3244, %v3254
    %v3263 = vmul.f32 %v3242, %v3255
    %v3264 = vmul.f32 %v3248, %v3256
    %v3265 = vpack.c.bf16 %v3261, %v3257
    %v3266 = vpack.c.bf16 %v3262, %v3258
    %v3267 = vpack.c.bf16 %v3263, %v3259
    %v3268 = vpack.c.bf16 %v3264, %v3260
    %3269 = vst [vmem:[#allocation2 + $0xe0] sm:$0xff] %v3265
    %3270 = vst [vmem:[#allocation2 + $0xe8] sm:$0xff] %v3266
    %3271 = vst [vmem:[#allocation2 + $0xf0] sm:$0xff] %v3267
    %3272 = vst [vmem:[#allocation2 + $0xf8] sm:$0xff] %v3268
    %3273 = vrot.lane.b32.xlu0 %v2921, 111
    %v3274 = vpop.permute.xlu0 %3273
    %3275 = vrot.lane.b32.xlu0 %v2925, 111
    %v3276 = vpop.permute.xlu0 %3275
    %3277 = vrot.lane.b32.xlu0 %v2922, 111
    %v3278 = vpop.permute.xlu0 %3277
    %3279 = vrot.lane.b32.xlu0 %v2926, 111
    %v3280 = vpop.permute.xlu0 %3279
    %3281 = vrot.lane.b32.xlu0 %v2923, 111
    %v3282 = vpop.permute.xlu0 %3281
    %3283 = vrot.lane.b32.xlu0 %v2927, 111
    %v3284 = vpop.permute.xlu0 %3283
    %3285 = vrot.lane.b32.xlu0 %v2924, 111
    %v3286 = vpop.permute.xlu0 %3285
    %3287 = vrot.lane.b32.xlu0 %v2928, 111
    %v3288 = vpop.permute.xlu0 %3287
    %v3289 = vsel %vm842, %v3282, %v3286
    %v3290 = vsel %vm842, %v3284, %v3288
    %v3291 = vsel %vm842, %v3278, %v3282
    %v3292 = vsel %vm842, %v3280, %v3284
    %v3293 = vsel %vm842, %v3274, %v3278
    %v3294 = vsel %vm842, %v3276, %v3280
    %v3295 = vsel %vm842, %v3286, %v3274
    %v3296 = vsel %vm842, %v3288, %v3276
    %v3297 = vld [vmem:[%s1 + $0x400] sm:$0xff]
    %v3298 = vld [vmem:[%s1 + $0x408] sm:$0xff]
    %v3299 = vld [vmem:[%s1 + $0x410] sm:$0xff]
    %v3300 = vld [vmem:[%s1 + $0x418] sm:$0xff]
    %v3301 = vld [vmem:[%s1 + $0x420] sm:$0xff]
    %v3302 = vld [vmem:[%s1 + $0x428] sm:$0xff]
    %v3303 = vld [vmem:[%s1 + $0x430] sm:$0xff]
    %v3304 = vld [vmem:[%s1 + $0x438] sm:$0xff]
    %v3305 = vmul.f32 %v3293, %v3297
    %v3306 = vmul.f32 %v3291, %v3298
    %v3307 = vmul.f32 %v3289, %v3299
    %v3308 = vmul.f32 %v3295, %v3300
    %v3309 = vmul.f32 %v3294, %v3301
    %v3310 = vmul.f32 %v3292, %v3302
    %v3311 = vmul.f32 %v3290, %v3303
    %v3312 = vmul.f32 %v3296, %v3304
    %v3313 = vpack.c.bf16 %v3309, %v3305
    %v3314 = vpack.c.bf16 %v3310, %v3306
    %v3315 = vpack.c.bf16 %v3311, %v3307
    %v3316 = vpack.c.bf16 %v3312, %v3308
    %3317 = vst [vmem:[#allocation2 + $0x100] sm:$0xff] %v3313
    %3318 = vst [vmem:[#allocation2 + $0x108] sm:$0xff] %v3314
    %3319 = vst [vmem:[#allocation2 + $0x110] sm:$0xff] %v3315
    %3320 = vst [vmem:[#allocation2 + $0x118] sm:$0xff] %v3316
    %v3321 = vld [vmem:[#allocation7] sm:$0xff]
    %v3322 = vld [vmem:[#allocation7 + $0x8] sm:$0xff]
    %v3323 = vld [vmem:[#allocation7 + $0x10] sm:$0xff]
    %v3324 = vld [vmem:[#allocation7 + $0x18] sm:$0xff]
    %v3325 = vld [vmem:[#allocation7 + $0x20] sm:$0xff]
    %v3326 = vld [vmem:[#allocation7 + $0x28] sm:$0xff]
    %v3327 = vld [vmem:[#allocation2] sm:$0xff]
    %v3328 = vld [vmem:[#allocation2 + $0x8] sm:$0xff]
    %v3329 = vld [vmem:[#allocation2 + $0x10] sm:$0xff]
    %v3330 = vld [vmem:[#allocation2 + $0x18] sm:$0xff]
    %v3331 = vld [vmem:[#allocation2 + $0x20] sm:$0xff]
    %v3332 = vld [vmem:[#allocation2 + $0x28] sm:$0xff]
    %v3333 = vld [vmem:[#allocation2 + $0x30] sm:$0xff]
    %v3334 = vld [vmem:[#allocation2 + $0x38] sm:$0xff]
    %v3335 = vld [vmem:[#allocation2 + $0x40] sm:$0xff]
    %v3336 = vld [vmem:[#allocation2 + $0x48] sm:$0xff]
    %v3337 = vld [vmem:[#allocation2 + $0x50] sm:$0xff]
    %v3338 = vld [vmem:[#allocation2 + $0x58] sm:$0xff]
    %v3339 = vld [vmem:[#allocation2 + $0x60] sm:$0xff]
    %v3340 = vld [vmem:[#allocation2 + $0x68] sm:$0xff]
    %v3341 = vld [vmem:[#allocation2 + $0x70] sm:$0xff]
    %v3342 = vld [vmem:[#allocation2 + $0x78] sm:$0xff]
    %v3343 = vld [vmem:[#allocation2 + $0x80] sm:$0xff]
    %v3344 = vld [vmem:[#allocation2 + $0x88] sm:$0xff]
    %v3345 = vld [vmem:[#allocation2 + $0x90] sm:$0xff]
    %v3346 = vld [vmem:[#allocation2 + $0x98] sm:$0xff]
    %v3347 = vld [vmem:[#allocation2 + $0xa0] sm:$0xff]
    %v3348 = vld [vmem:[#allocation2 + $0xa8] sm:$0xff]
    %v3349 = vld [vmem:[#allocation2 + $0xb0] sm:$0xff]
    %v3350 = vld [vmem:[#allocation2 + $0xb8] sm:$0xff]
    %v3351 = vld [vmem:[#allocation2 + $0xc0] sm:$0xff]
    %v3352 = vld [vmem:[#allocation2 + $0xc8] sm:$0xff]
    %v3353 = vld [vmem:[#allocation2 + $0xd0] sm:$0xff]
    %v3354 = vld [vmem:[#allocation2 + $0xd8] sm:$0xff]
    %v3355 = vld [vmem:[#allocation2 + $0xe0] sm:$0xff]
    %v3356 = vld [vmem:[#allocation2 + $0xe8] sm:$0xff]
    %v3357 = vld [vmem:[#allocation2 + $0xf0] sm:$0xff]
    %v3358 = vld [vmem:[#allocation2 + $0xf8] sm:$0xff]
    %v3359 = vld [vmem:[#allocation2 + $0x100] sm:$0xff]
    %v3360 = vld [vmem:[#allocation2 + $0x108] sm:$0xff]
    %v3361 = vld [vmem:[#allocation2 + $0x110] sm:$0xff]
    %v3362 = vld [vmem:[#allocation2 + $0x118] sm:$0xff]
    %v3369 = vunpack.c.l.b16 %v3321
    %v3370 = vunpack.c.h.b16 %v3321
    %v3371 = vunpack.c.l.b16 %v3322
    %v3372 = vunpack.c.h.b16 %v3322
    %v3373 = vunpack.c.l.b16 %v3323
    %v3374 = vunpack.c.h.b16 %v3323
    %v3375 = vunpack.c.l.b16 %v3324
    %v3376 = vunpack.c.h.b16 %v3324
    %v3377 = vunpack.c.l.b16 %v3325
    %v3378 = vunpack.c.h.b16 %v3325
    %v3379 = vunpack.c.l.b16 %v3326
    %v3380 = vunpack.c.h.b16 %v3326
    %v3381 = vpack.c.b16 %v3371, %v3369
    %v3382 = vpack.c.b16 %v3372, %v3370
    %v3383 = vpack.c.b16 %v3375, %v3373
    %v3384 = vpack.c.b16 %v3376, %v3374
    %v3385 = vpack.c.b16 %v3379, %v3377
    %v3386 = vpack.c.b16 %v3380, %v3378
    %v3391 = vsel %vm2009, %v3382, 0
    %v3394 = vsel %vm2009, %v3384, 0
    %v3397 = vsel %vm2009, %v3386, 0
    %3399 = vmatprep.subr.bf16.mxu0 %v3328
    %3400 = vmatpush1.bf16.msra.mxu0 %v3327
    %3401 = vmatprep.subr.bf16.mxu0 %v3332
    %3402 = vmatpush1.bf16.msra.mxu0 %v3331
    %3403 = vmatprep.subr.bf16.mxu0 %v3336
    %3404 = vmatpush1.bf16.msra.mxu0 %v3335
    %3405 = vmatprep.subr.bf16.mxu0 %v3340
    %3406 = vmatpush1.bf16.msra.mxu0 %v3339
    %3407 = vmatprep.subr.bf16.mxu0 %v3344
    %3408 = vmatpush1.bf16.msra.mxu0 %v3343
    %3409 = vmatprep.subr.bf16.mxu0 %v3348
    %3410 = vmatpush1.bf16.msra.mxu0 %v3347
    %3411 = vmatprep.subr.bf16.mxu0 %v3352
    %3412 = vmatpush1.bf16.msra.mxu0 %v3351
    %3413 = vmatprep.subr.bf16.mxu0 %v3356
    %3414 = vmatpush1.bf16.msra.mxu0 %v3355
    %3415 = vmatprep.subr.bf16.mxu0 %v3360
    %3416 = vmatpush1.bf16.msra.mxu0 %v3359
    %3417 = vmatprep.subr.bf16.mxu0 0
    %3418 = vmatpush1.bf16.msra.mxu0 0
    %3419 = vmatprep.subr.bf16.mxu0 0
    %3420 = vmatpush1.bf16.msra.mxu0 0
    %3421 = vmatprep.subr.bf16.mxu0 0
    %3422 = vmatpush1.bf16.msra.mxu0 0
    %3423 = vmatprep.subr.bf16.mxu0 0
    %3424 = vmatpush1.bf16.msra.mxu0 0
    %3425 = vmatprep.subr.bf16.mxu0 0
    %3426 = vmatpush1.bf16.msra.mxu0 0
    %3427 = vmatprep.subr.bf16.mxu0 0
    %3428 = vmatpush1.bf16.msra.mxu0 0
    %3429 = vmatprep.subr.bf16.mxu0 0
    %3430 = vmatpush1.bf16.msra.mxu0 0
    %3431 = vmatprep.mubr.bf16.mxu0 %v3391
    %3432 = vmatmul.mubr.bf16.gmra.mrb[0].mxu0 %v3381
    %v3433 = vpop.f32.mrb[0].mxu0
    %v3434 = vadd.f32 0.0, %v3433
    %v3435 = vpop.f32.mrb[0].mxu0
    %v3436 = vadd.f32 0.0, %v3435
    %v3437 = vpop.f32.mrb[0].mxu0
    %v3438 = vadd.f32 0.0, %v3437
    %v3439 = vpop.f32.mrb[0].mxu0
    %v3440 = vadd.f32 0.0, %v3439
    %3441 = vmatprep.mubr.bf16.mxu0 %v3394
    %3442 = vmatmul.mubr.bf16.gmra.mrb[0].mxu0 %v3383
    %v3443 = vpop.f32.mrb[0].mxu0
    %v3444 = vadd.f32 0.0, %v3443
    %v3445 = vpop.f32.mrb[0].mxu0
    %v3446 = vadd.f32 0.0, %v3445
    %v3447 = vpop.f32.mrb[0].mxu0
    %v3448 = vadd.f32 0.0, %v3447
    %v3449 = vpop.f32.mrb[0].mxu0
    %v3450 = vadd.f32 0.0, %v3449
    %3451 = vmatprep.mubr.bf16.mxu0 %v3397
    %3452 = vmatmul.mubr.bf16.gmra.mrb[0].mxu0 %v3385
    %v3453 = vpop.f32.mrb[0].mxu0
    %v3454 = vadd.f32 0.0, %v3453
    %v3455 = vpop.f32.mrb[0].mxu0
    %v3456 = vadd.f32 0.0, %v3455
    %v3457 = vpop.f32.mrb[0].mxu0
    %v3458 = vadd.f32 0.0, %v3457
    %v3459 = vpop.f32.mrb[0].mxu0
    %v3460 = vadd.f32 0.0, %v3459
    %3461 = vdwg.mxu0
    %3462 = vmatprep.subr.bf16.mxu0 %v3330
    %3463 = vmatpush1.bf16.msra.mxu0 %v3329
    %3464 = vmatprep.subr.bf16.mxu0 %v3334
    %3465 = vmatpush1.bf16.msra.mxu0 %v3333
    %3466 = vmatprep.subr.bf16.mxu0 %v3338
    %3467 = vmatpush1.bf16.msra.mxu0 %v3337
    %3468 = vmatprep.subr.bf16.mxu0 %v3342
    %3469 = vmatpush1.bf16.msra.mxu0 %v3341
    %3470 = vmatprep.subr.bf16.mxu0 %v3346
    %3471 = vmatpush1.bf16.msra.mxu0 %v3345
    %3472 = vmatprep.subr.bf16.mxu0 %v3350
    %3473 = vmatpush1.bf16.msra.mxu0 %v3349
    %3474 = vmatprep.subr.bf16.mxu0 %v3354
    %3475 = vmatpush1.bf16.msra.mxu0 %v3353
    %3476 = vmatprep.subr.bf16.mxu0 %v3358
    %3477 = vmatpush1.bf16.msra.mxu0 %v3357
    %3478 = vmatprep.subr.bf16.mxu0 %v3362
    %3479 = vmatpush1.bf16.msra.mxu0 %v3361
    %3480 = vmatprep.subr.bf16.mxu0 0
    %3481 = vmatpush1.bf16.msra.mxu0 0
    %3482 = vmatprep.subr.bf16.mxu0 0
    %3483 = vmatpush1.bf16.msra.mxu0 0
    %3484 = vmatprep.subr.bf16.mxu0 0
    %3485 = vmatpush1.bf16.msra.mxu0 0
    %3486 = vmatprep.subr.bf16.mxu0 0
    %3487 = vmatpush1.bf16.msra.mxu0 0
    %3488 = vmatprep.subr.bf16.mxu0 0
    %3489 = vmatpush1.bf16.msra.mxu0 0
    %3490 = vmatprep.subr.bf16.mxu0 0
    %3491 = vmatpush1.bf16.msra.mxu0 0
    %3492 = vmatprep.subr.bf16.mxu0 0
    %3493 = vmatpush1.bf16.msra.mxu0 0
    %3494 = vmatprep.mubr.bf16.mxu0 %v3391
    %3495 = vmatmul.mubr.bf16.gmra.mrb[0].mxu0 %v3381
    %v3496 = vpop.f32.mrb[0].mxu0
    %v3497 = vadd.f32 0.0, %v3496
    %v3498 = vpop.f32.mrb[0].mxu0
    %v3499 = vadd.f32 0.0, %v3498
    %v3500 = vpop.f32.mrb[0].mxu0
    %v3501 = vadd.f32 0.0, %v3500
    %v3502 = vpop.f32.mrb[0].mxu0
    %v3503 = vadd.f32 0.0, %v3502
    %3504 = vmatprep.mubr.bf16.mxu0 %v3394
    %3505 = vmatmul.mubr.bf16.gmra.mrb[0].mxu0 %v3383
    %v3506 = vpop.f32.mrb[0].mxu0
    %v3507 = vadd.f32 0.0, %v3506
    %v3508 = vpop.f32.mrb[0].mxu0
    %v3509 = vadd.f32 0.0, %v3508
    %v3510 = vpop.f32.mrb[0].mxu0
    %v3511 = vadd.f32 0.0, %v3510
    %v3512 = vpop.f32.mrb[0].mxu0
    %v3513 = vadd.f32 0.0, %v3512
    %3514 = vmatprep.mubr.bf16.mxu0 %v3397
    %3515 = vmatmul.mubr.bf16.gmra.mrb[0].mxu0 %v3385
    %v3516 = vpop.f32.mrb[0].mxu0
    %v3517 = vadd.f32 0.0, %v3516
    %v3518 = vpop.f32.mrb[0].mxu0
    %v3519 = vadd.f32 0.0, %v3518
    %v3520 = vpop.f32.mrb[0].mxu0
    %v3521 = vadd.f32 0.0, %v3520
    %v3522 = vpop.f32.mrb[0].mxu0
    %v3523 = vadd.f32 0.0, %v3522
    %3524 = vdwg.mxu0
    %v3525 = vadd.f32 %v1270, %v2080
    %v3526 = vadd.f32 %v1272, %v2082
    %v3527 = vadd.f32 %v1456, %v2163
    %v3528 = vadd.f32 %v1458, %v2165
    %v3529 = vadd.f32 %v1274, %v2084
    %v3530 = vadd.f32 %v1276, %v2086
    %v3531 = vadd.f32 %v1460, %v2167
    %v3532 = vadd.f32 %v1462, %v2169
    %v3533 = vadd.f32 %v3525, %v2770
    %v3534 = vadd.f32 %v3526, %v2772
    %v3535 = vadd.f32 %v3527, %v2843
    %v3536 = vadd.f32 %v3528, %v2845
    %v3537 = vadd.f32 %v3529, %v2774
    %v3538 = vadd.f32 %v3530, %v2776
    %v3539 = vadd.f32 %v3531, %v2847
    %v3540 = vadd.f32 %v3532, %v2849
    %v3541 = vadd.f32 %v3533, %v3434
    %v3542 = vadd.f32 %v3534, %v3436
    %v3543 = vadd.f32 %v3535, %v3497
    %v3544 = vadd.f32 %v3536, %v3499
    %v3545 = vadd.f32 %v3537, %v3438
    %v3546 = vadd.f32 %v3538, %v3440
    %v3547 = vadd.f32 %v3539, %v3501
    %v3548 = vadd.f32 %v3540, %v3503
    %3550 = vset.pattern.permute.xlu0 0
    %3551 = vperm.xlu0 %3550, %v107
    %v3552 = vpop.permute.xlu0 %3551
    %3555 = vset.pattern.permute.xlu0 0
    %3556 = vperm.xlu0 %3555, %v108
    %v3557 = vpop.permute.xlu0 %3556
    %v3559 = vadd.f32 %v3541, %v3552
    %v3560 = vadd.f32 %v3542, %v3552
    %v3561 = vadd.f32 %v3543, %v3552
    %v3562 = vadd.f32 %v3544, %v3552
    %v3563 = vadd.f32 %v3545, %v3557
    %v3564 = vadd.f32 %v3546, %v3557
    %v3565 = vadd.f32 %v3547, %v3557
    %v3566 = vadd.f32 %v3548, %v3557
    %vm3567 = vcmp.ge.f32.partialorder %v3559, 0.0
    %vm3568 = vcmp.ge.f32.partialorder %v3560, 0.0
    %vm3569 = vcmp.ge.f32.partialorder %v3561, 0.0
    %vm3570 = vcmp.ge.f32.partialorder %v3562, 0.0
    %vm3571 = vcmp.ge.f32.partialorder %v3563, 0.0
    %vm3572 = vcmp.ge.f32.partialorder %v3564, 0.0
    %vm3573 = vcmp.ge.f32.partialorder %v3565, 0.0
    %vm3574 = vcmp.ge.f32.partialorder %v3566, 0.0
    %v3575 = vmul.f32 %v3559, 0.2
    %v3576 = vmul.f32 %v3560, 0.2
    %v3577 = vmul.f32 %v3561, 0.2
    %v3578 = vmul.f32 %v3562, 0.2
    %v3579 = vmul.f32 %v3563, 0.2
    %v3580 = vmul.f32 %v3564, 0.2
    %v3581 = vmul.f32 %v3565, 0.2
    %v3582 = vmul.f32 %v3566, 0.2
    %v3583 = vsel %vm3567, %v3559, %v3575
    %v3584 = vsel %vm3568, %v3560, %v3576
    %v3585 = vsel %vm3569, %v3561, %v3577
    %v3586 = vsel %vm3570, %v3562, %v3578
    %v3587 = vsel %vm3571, %v3563, %v3579
    %v3588 = vsel %vm3572, %v3564, %v3580
    %v3589 = vsel %vm3573, %v3565, %v3581
    %v3590 = vsel %vm3574, %v3566, %v3582
    %3591 = vrot.lane.b32.xlu0 %v3583, 17
    %v3592 = vpop.permute.xlu0 %3591
    %3593 = vrot.lane.b32.xlu0 %v3587, 17
    %v3594 = vpop.permute.xlu0 %3593
    %3595 = vrot.lane.b32.xlu0 %v3584, 17
    %v3596 = vpop.permute.xlu0 %3595
    %3597 = vrot.lane.b32.xlu0 %v3588, 17
    %v3598 = vpop.permute.xlu0 %3597
    %3599 = vrot.lane.b32.xlu0 %v3585, 17
    %v3600 = vpop.permute.xlu0 %3599
    %3601 = vrot.lane.b32.xlu0 %v3589, 17
    %v3602 = vpop.permute.xlu0 %3601
    %3603 = vrot.lane.b32.xlu0 %v3586, 17
    %v3604 = vpop.permute.xlu0 %3603
    %3605 = vrot.lane.b32.xlu0 %v3590, 17
    %v3606 = vpop.permute.xlu0 %3605
    %v3607 = vsel %vm147, %v3600, %v3604
    %v3608 = vsel %vm147, %v3602, %v3606
    %v3609 = vsel %vm147, %v3596, %v3600
    %v3610 = vsel %vm147, %v3598, %v3602
    %v3611 = vsel %vm147, %v3592, %v3596
    %v3612 = vsel %vm147, %v3594, %v3598
    %v3613 = vsel %vm147, %v3604, %v3592
    %v3614 = vsel %vm147, %v3606, %v3594
    %v3615 = vld [vmem:[%s1] sm:$0xff]
    %v3616 = vld [vmem:[%s1 + $0x8] sm:$0xff]
    %v3617 = vld [vmem:[%s1 + $0x10] sm:$0xff]
    %v3618 = vld [vmem:[%s1 + $0x18] sm:$0xff]
    %v3619 = vld [vmem:[%s1 + $0x20] sm:$0xff]
    %v3620 = vld [vmem:[%s1 + $0x28] sm:$0xff]
    %v3621 = vld [vmem:[%s1 + $0x30] sm:$0xff]
    %v3622 = vld [vmem:[%s1 + $0x38] sm:$0xff]
    %v3623 = vmul.f32 %v3613, %v3615
    %v3624 = vmul.f32 %v3611, %v3616
    %v3625 = vmul.f32 %v3609, %v3617
    %v3626 = vmul.f32 %v3607, %v3618
    %v3627 = vmul.f32 %v3614, %v3619
    %v3628 = vmul.f32 %v3612, %v3620
    %v3629 = vmul.f32 %v3610, %v3621
    %v3630 = vmul.f32 %v3608, %v3622
    %v3631 = vpack.c.bf16 %v3627, %v3623
    %v3632 = vpack.c.bf16 %v3628, %v3624
    %v3633 = vpack.c.bf16 %v3629, %v3625
    %v3634 = vpack.c.bf16 %v3630, %v3626
    %3635 = vst [vmem:[#allocation2] sm:$0xff] %v3631
    %3636 = vst [vmem:[#allocation2 + $0x8] sm:$0xff] %v3632
    %3637 = vst [vmem:[#allocation2 + $0x10] sm:$0xff] %v3633
    %3638 = vst [vmem:[#allocation2 + $0x18] sm:$0xff] %v3634
    %3639 = vrot.lane.b32.xlu0 %v3583, 16
    %v3640 = vpop.permute.xlu0 %3639
    %3641 = vrot.lane.b32.xlu0 %v3587, 16
    %v3642 = vpop.permute.xlu0 %3641
    %3643 = vrot.lane.b32.xlu0 %v3584, 16
    %v3644 = vpop.permute.xlu0 %3643
    %3645 = vrot.lane.b32.xlu0 %v3588, 16
    %v3646 = vpop.permute.xlu0 %3645
    %3647 = vrot.lane.b32.xlu0 %v3585, 16
    %v3648 = vpop.permute.xlu0 %3647
    %3649 = vrot.lane.b32.xlu0 %v3589, 16
    %v3650 = vpop.permute.xlu0 %3649
    %3651 = vrot.lane.b32.xlu0 %v3586, 16
    %v3652 = vpop.permute.xlu0 %3651
    %3653 = vrot.lane.b32.xlu0 %v3590, 16
    %v3654 = vpop.permute.xlu0 %3653
    %v3655 = vsel %vm244, %v3648, %v3652
    %v3656 = vsel %vm244, %v3650, %v3654
    %v3657 = vsel %vm244, %v3644, %v3648
    %v3658 = vsel %vm244, %v3646, %v3650
    %v3659 = vsel %vm244, %v3640, %v3644
    %v3660 = vsel %vm244, %v3642, %v3646
    %v3661 = vsel %vm244, %v3652, %v3640
    %v3662 = vsel %vm244, %v3654, %v3642
    %v3663 = vld [vmem:[%s1 + $0x80] sm:$0xff]
    %v3664 = vld [vmem:[%s1 + $0x88] sm:$0xff]
    %v3665 = vld [vmem:[%s1 + $0x90] sm:$0xff]
    %v3666 = vld [vmem:[%s1 + $0x98] sm:$0xff]
    %v3667 = vld [vmem:[%s1 + $0xa0] sm:$0xff]
    %v3668 = vld [vmem:[%s1 + $0xa8] sm:$0xff]
    %v3669 = vld [vmem:[%s1 + $0xb0] sm:$0xff]
    %v3670 = vld [vmem:[%s1 + $0xb8] sm:$0xff]
    %v3671 = vmul.f32 %v3661, %v3663
    %v3672 = vmul.f32 %v3659, %v3664
    %v3673 = vmul.f32 %v3657, %v3665
    %v3674 = vmul.f32 %v3655, %v3666
    %v3675 = vmul.f32 %v3662, %v3667
    %v3676 = vmul.f32 %v3660, %v3668
    %v3677 = vmul.f32 %v3658, %v3669
    %v3678 = vmul.f32 %v3656, %v3670
    %v3679 = vpack.c.bf16 %v3675, %v3671
    %v3680 = vpack.c.bf16 %v3676, %v3672
    %v3681 = vpack.c.bf16 %v3677, %v3673
    %v3682 = vpack.c.bf16 %v3678, %v3674
    %3683 = vst [vmem:[#allocation2 + $0x20] sm:$0xff] %v3679
    %3684 = vst [vmem:[#allocation2 + $0x28] sm:$0xff] %v3680
    %3685 = vst [vmem:[#allocation2 + $0x30] sm:$0xff] %v3681
    %3686 = vst [vmem:[#allocation2 + $0x38] sm:$0xff] %v3682
    %3687 = vrot.lane.b32.xlu0 %v3583, 15
    %v3688 = vpop.permute.xlu0 %3687
    %3689 = vrot.lane.b32.xlu0 %v3587, 15
    %v3690 = vpop.permute.xlu0 %3689
    %3691 = vrot.lane.b32.xlu0 %v3584, 15
    %v3692 = vpop.permute.xlu0 %3691
    %3693 = vrot.lane.b32.xlu0 %v3588, 15
    %v3694 = vpop.permute.xlu0 %3693
    %3695 = vrot.lane.b32.xlu0 %v3585, 15
    %v3696 = vpop.permute.xlu0 %3695
    %3697 = vrot.lane.b32.xlu0 %v3589, 15
    %v3698 = vpop.permute.xlu0 %3697
    %3699 = vrot.lane.b32.xlu0 %v3586, 15
    %v3700 = vpop.permute.xlu0 %3699
    %3701 = vrot.lane.b32.xlu0 %v3590, 15
    %v3702 = vpop.permute.xlu0 %3701
    %v3703 = vsel %vm341, %v3696, %v3700
    %v3704 = vsel %vm341, %v3698, %v3702
    %v3705 = vsel %vm341, %v3692, %v3696
    %v3706 = vsel %vm341, %v3694, %v3698
    %v3707 = vsel %vm341, %v3688, %v3692
    %v3708 = vsel %vm341, %v3690, %v3694
    %v3709 = vsel %vm341, %v3700, %v3688
    %v3710 = vsel %vm341, %v3702, %v3690
    %v3711 = vld [vmem:[%s1 + $0x100] sm:$0xff]
    %v3712 = vld [vmem:[%s1 + $0x108] sm:$0xff]
    %v3713 = vld [vmem:[%s1 + $0x110] sm:$0xff]
    %v3714 = vld [vmem:[%s1 + $0x118] sm:$0xff]
    %v3715 = vld [vmem:[%s1 + $0x120] sm:$0xff]
    %v3716 = vld [vmem:[%s1 + $0x128] sm:$0xff]
    %v3717 = vld [vmem:[%s1 + $0x130] sm:$0xff]
    %v3718 = vld [vmem:[%s1 + $0x138] sm:$0xff]
    %v3719 = vmul.f32 %v3709, %v3711
    %v3720 = vmul.f32 %v3707, %v3712
    %v3721 = vmul.f32 %v3705, %v3713
    %v3722 = vmul.f32 %v3703, %v3714
    %v3723 = vmul.f32 %v3710, %v3715
    %v3724 = vmul.f32 %v3708, %v3716
    %v3725 = vmul.f32 %v3706, %v3717
    %v3726 = vmul.f32 %v3704, %v3718
    %v3727 = vpack.c.bf16 %v3723, %v3719
    %v3728 = vpack.c.bf16 %v3724, %v3720
    %v3729 = vpack.c.bf16 %v3725, %v3721
    %v3730 = vpack.c.bf16 %v3726, %v3722
    %3731 = vst [vmem:[#allocation2 + $0x40] sm:$0xff] %v3727
    %3732 = vst [vmem:[#allocation2 + $0x48] sm:$0xff] %v3728
    %3733 = vst [vmem:[#allocation2 + $0x50] sm:$0xff] %v3729
    %3734 = vst [vmem:[#allocation2 + $0x58] sm:$0xff] %v3730
    %3735 = vrot.lane.b32.xlu0 %v3583, 1
    %v3736 = vpop.permute.xlu0 %3735
    %3737 = vrot.lane.b32.xlu0 %v3587, 1
    %v3738 = vpop.permute.xlu0 %3737
    %3739 = vrot.lane.b32.xlu0 %v3584, 1
    %v3740 = vpop.permute.xlu0 %3739
    %3741 = vrot.lane.b32.xlu0 %v3588, 1
    %v3742 = vpop.permute.xlu0 %3741
    %3743 = vrot.lane.b32.xlu0 %v3585, 1
    %v3744 = vpop.permute.xlu0 %3743
    %3745 = vrot.lane.b32.xlu0 %v3589, 1
    %v3746 = vpop.permute.xlu0 %3745
    %3747 = vrot.lane.b32.xlu0 %v3586, 1
    %v3748 = vpop.permute.xlu0 %3747
    %3749 = vrot.lane.b32.xlu0 %v3590, 1
    %v3750 = vpop.permute.xlu0 %3749
    %v3751 = vsel %vm438, %v3744, %v3748
    %v3752 = vsel %vm438, %v3746, %v3750
    %v3753 = vsel %vm438, %v3740, %v3744
    %v3754 = vsel %vm438, %v3742, %v3746
    %v3755 = vsel %vm438, %v3736, %v3740
    %v3756 = vsel %vm438, %v3738, %v3742
    %v3757 = vsel %vm438, %v3748, %v3736
    %v3758 = vsel %vm438, %v3750, %v3738
    %v3759 = vld [vmem:[%s1 + $0x180] sm:$0xff]
    %v3760 = vld [vmem:[%s1 + $0x188] sm:$0xff]
    %v3761 = vld [vmem:[%s1 + $0x190] sm:$0xff]
    %v3762 = vld [vmem:[%s1 + $0x198] sm:$0xff]
    %v3763 = vld [vmem:[%s1 + $0x1a0] sm:$0xff]
    %v3764 = vld [vmem:[%s1 + $0x1a8] sm:$0xff]
    %v3765 = vld [vmem:[%s1 + $0x1b0] sm:$0xff]
    %v3766 = vld [vmem:[%s1 + $0x1b8] sm:$0xff]
    %v3767 = vmul.f32 %v3757, %v3759
    %v3768 = vmul.f32 %v3755, %v3760
    %v3769 = vmul.f32 %v3753, %v3761
    %v3770 = vmul.f32 %v3751, %v3762
    %v3771 = vmul.f32 %v3758, %v3763
    %v3772 = vmul.f32 %v3756, %v3764
    %v3773 = vmul.f32 %v3754, %v3765
    %v3774 = vmul.f32 %v3752, %v3766
    %v3775 = vpack.c.bf16 %v3771, %v3767
    %v3776 = vpack.c.bf16 %v3772, %v3768
    %v3777 = vpack.c.bf16 %v3773, %v3769
    %v3778 = vpack.c.bf16 %v3774, %v3770
    %3779 = vst [vmem:[#allocation2 + $0x60] sm:$0xff] %v3775
    %3780 = vst [vmem:[#allocation2 + $0x68] sm:$0xff] %v3776
    %3781 = vst [vmem:[#allocation2 + $0x70] sm:$0xff] %v3777
    %3782 = vst [vmem:[#allocation2 + $0x78] sm:$0xff] %v3778
    %v3783 = vpack.c.bf16 %v3587, %v3583
    %v3784 = vpack.c.bf16 %v3588, %v3584
    %v3785 = vpack.c.bf16 %v3589, %v3585
    %v3786 = vpack.c.bf16 %v3590, %v3586
    %3787 = vst [vmem:[#allocation2 + $0x80] sm:$0xff] %v3783
    %3788 = vst [vmem:[#allocation2 + $0x88] sm:$0xff] %v3784
    %3789 = vst [vmem:[#allocation2 + $0x90] sm:$0xff] %v3785
    %3790 = vst [vmem:[#allocation2 + $0x98] sm:$0xff] %v3786
    %3791 = vrot.lane.b32.xlu0 %v3583, 127
    %v3792 = vpop.permute.xlu0 %3791
    %3793 = vrot.lane.b32.xlu0 %v3587, 127
    %v3794 = vpop.permute.xlu0 %3793
    %3795 = vrot.lane.b32.xlu0 %v3584, 127
    %v3796 = vpop.permute.xlu0 %3795
    %3797 = vrot.lane.b32.xlu0 %v3588, 127
    %v3798 = vpop.permute.xlu0 %3797
    %3799 = vrot.lane.b32.xlu0 %v3585, 127
    %v3800 = vpop.permute.xlu0 %3799
    %3801 = vrot.lane.b32.xlu0 %v3589, 127
    %v3802 = vpop.permute.xlu0 %3801
    %3803 = vrot.lane.b32.xlu0 %v3586, 127
    %v3804 = vpop.permute.xlu0 %3803
    %3805 = vrot.lane.b32.xlu0 %v3590, 127
    %v3806 = vpop.permute.xlu0 %3805
    %v3807 = vsel %vm551, %v3800, %v3804
    %v3808 = vsel %vm551, %v3802, %v3806
    %v3809 = vsel %vm551, %v3796, %v3800
    %v3810 = vsel %vm551, %v3798, %v3802
    %v3811 = vsel %vm551, %v3792, %v3796
    %v3812 = vsel %vm551, %v3794, %v3798
    %v3813 = vsel %vm551, %v3804, %v3792
    %v3814 = vsel %vm551, %v3806, %v3794
    %v3815 = vld [vmem:[%s1 + $0x280] sm:$0xff]
    %v3816 = vld [vmem:[%s1 + $0x288] sm:$0xff]
    %v3817 = vld [vmem:[%s1 + $0x290] sm:$0xff]
    %v3818 = vld [vmem:[%s1 + $0x298] sm:$0xff]
    %v3819 = vld [vmem:[%s1 + $0x2a0] sm:$0xff]
    %v3820 = vld [vmem:[%s1 + $0x2a8] sm:$0xff]
    %v3821 = vld [vmem:[%s1 + $0x2b0] sm:$0xff]
    %v3822 = vld [vmem:[%s1 + $0x2b8] sm:$0xff]
    %v3823 = vmul.f32 %v3811, %v3815
    %v3824 = vmul.f32 %v3809, %v3816
    %v3825 = vmul.f32 %v3807, %v3817
    %v3826 = vmul.f32 %v3813, %v3818
    %v3827 = vmul.f32 %v3812, %v3819
    %v3828 = vmul.f32 %v3810, %v3820
    %v3829 = vmul.f32 %v3808, %v3821
    %v3830 = vmul.f32 %v3814, %v3822
    %v3831 = vpack.c.bf16 %v3827, %v3823
    %v3832 = vpack.c.bf16 %v3828, %v3824
    %v3833 = vpack.c.bf16 %v3829, %v3825
    %v3834 = vpack.c.bf16 %v3830, %v3826
    %3835 = vst [vmem:[#allocation2 + $0xa0] sm:$0xff] %v3831
    %3836 = vst [vmem:[#allocation2 + $0xa8] sm:$0xff] %v3832
    %3837 = vst [vmem:[#allocation2 + $0xb0] sm:$0xff] %v3833
    %3838 = vst [vmem:[#allocation2 + $0xb8] sm:$0xff] %v3834
    %3839 = vrot.lane.b32.xlu0 %v3583, 113
    %v3840 = vpop.permute.xlu0 %3839
    %3841 = vrot.lane.b32.xlu0 %v3587, 113
    %v3842 = vpop.permute.xlu0 %3841
    %3843 = vrot.lane.b32.xlu0 %v3584, 113
    %v3844 = vpop.permute.xlu0 %3843
    %3845 = vrot.lane.b32.xlu0 %v3588, 113
    %v3846 = vpop.permute.xlu0 %3845
    %3847 = vrot.lane.b32.xlu0 %v3585, 113
    %v3848 = vpop.permute.xlu0 %3847
    %3849 = vrot.lane.b32.xlu0 %v3589, 113
    %v3850 = vpop.permute.xlu0 %3849
    %3851 = vrot.lane.b32.xlu0 %v3586, 113
    %v3852 = vpop.permute.xlu0 %3851
    %3853 = vrot.lane.b32.xlu0 %v3590, 113
    %v3854 = vpop.permute.xlu0 %3853
    %v3855 = vsel %vm648, %v3848, %v3852
    %v3856 = vsel %vm648, %v3850, %v3854
    %v3857 = vsel %vm648, %v3844, %v3848
    %v3858 = vsel %vm648, %v3846, %v3850
    %v3859 = vsel %vm648, %v3840, %v3844
    %v3860 = vsel %vm648, %v3842, %v3846
    %v3861 = vsel %vm648, %v3852, %v3840
    %v3862 = vsel %vm648, %v3854, %v3842
    %v3863 = vld [vmem:[%s1 + $0x300] sm:$0xff]
    %v3864 = vld [vmem:[%s1 + $0x308] sm:$0xff]
    %v3865 = vld [vmem:[%s1 + $0x310] sm:$0xff]
    %v3866 = vld [vmem:[%s1 + $0x318] sm:$0xff]
    %v3867 = vld [vmem:[%s1 + $0x320] sm:$0xff]
    %v3868 = vld [vmem:[%s1 + $0x328] sm:$0xff]
    %v3869 = vld [vmem:[%s1 + $0x330] sm:$0xff]
    %v3870 = vld [vmem:[%s1 + $0x338] sm:$0xff]
    %v3871 = vmul.f32 %v3859, %v3863
    %v3872 = vmul.f32 %v3857, %v3864
    %v3873 = vmul.f32 %v3855, %v3865
    %v3874 = vmul.f32 %v3861, %v3866
    %v3875 = vmul.f32 %v3860, %v3867
    %v3876 = vmul.f32 %v3858, %v3868
    %v3877 = vmul.f32 %v3856, %v3869
    %v3878 = vmul.f32 %v3862, %v3870
    %v3879 = vpack.c.bf16 %v3875, %v3871
    %v3880 = vpack.c.bf16 %v3876, %v3872
    %v3881 = vpack.c.bf16 %v3877, %v3873
    %v3882 = vpack.c.bf16 %v3878, %v3874
    %3883 = vst [vmem:[#allocation2 + $0xc0] sm:$0xff] %v3879
    %3884 = vst [vmem:[#allocation2 + $0xc8] sm:$0xff] %v3880
    %3885 = vst [vmem:[#allocation2 + $0xd0] sm:$0xff] %v3881
    %3886 = vst [vmem:[#allocation2 + $0xd8] sm:$0xff] %v3882
    %3887 = vrot.lane.b32.xlu0 %v3583, 112
    %v3888 = vpop.permute.xlu0 %3887
    %3889 = vrot.lane.b32.xlu0 %v3587, 112
    %v3890 = vpop.permute.xlu0 %3889
    %3891 = vrot.lane.b32.xlu0 %v3584, 112
    %v3892 = vpop.permute.xlu0 %3891
    %3893 = vrot.lane.b32.xlu0 %v3588, 112
    %v3894 = vpop.permute.xlu0 %3893
    %3895 = vrot.lane.b32.xlu0 %v3585, 112
    %v3896 = vpop.permute.xlu0 %3895
    %3897 = vrot.lane.b32.xlu0 %v3589, 112
    %v3898 = vpop.permute.xlu0 %3897
    %3899 = vrot.lane.b32.xlu0 %v3586, 112
    %v3900 = vpop.permute.xlu0 %3899
    %3901 = vrot.lane.b32.xlu0 %v3590, 112
    %v3902 = vpop.permute.xlu0 %3901
    %v3903 = vsel %vm745, %v3896, %v3900
    %v3904 = vsel %vm745, %v3898, %v3902
    %v3905 = vsel %vm745, %v3892, %v3896
    %v3906 = vsel %vm745, %v3894, %v3898
    %v3907 = vsel %vm745, %v3888, %v3892
    %v3908 = vsel %vm745, %v3890, %v3894
    %v3909 = vsel %vm745, %v3900, %v3888
    %v3910 = vsel %vm745, %v3902, %v3890
    %v3911 = vld [vmem:[%s1 + $0x380] sm:$0xff]
    %v3912 = vld [vmem:[%s1 + $0x388] sm:$0xff]
    %v3913 = vld [vmem:[%s1 + $0x390] sm:$0xff]
    %v3914 = vld [vmem:[%s1 + $0x398] sm:$0xff]
    %v3915 = vld [vmem:[%s1 + $0x3a0] sm:$0xff]
    %v3916 = vld [vmem:[%s1 + $0x3a8] sm:$0xff]
    %v3917 = vld [vmem:[%s1 + $0x3b0] sm:$0xff]
    %v3918 = vld [vmem:[%s1 + $0x3b8] sm:$0xff]
    %v3919 = vmul.f32 %v3907, %v3911
    %v3920 = vmul.f32 %v3905, %v3912
    %v3921 = vmul.f32 %v3903, %v3913
    %v3922 = vmul.f32 %v3909, %v3914
    %v3923 = vmul.f32 %v3908, %v3915
    %v3924 = vmul.f32 %v3906, %v3916
    %v3925 = vmul.f32 %v3904, %v3917
    %v3926 = vmul.f32 %v3910, %v3918
    %v3927 = vpack.c.bf16 %v3923, %v3919
    %v3928 = vpack.c.bf16 %v3924, %v3920
    %v3929 = vpack.c.bf16 %v3925, %v3921
    %v3930 = vpack.c.bf16 %v3926, %v3922
    %3931 = vst [vmem:[#allocation2 + $0xe0] sm:$0xff] %v3927
    %3932 = vst [vmem:[#allocation2 + $0xe8] sm:$0xff] %v3928
    %3933 = vst [vmem:[#allocation2 + $0xf0] sm:$0xff] %v3929
    %3934 = vst [vmem:[#allocation2 + $0xf8] sm:$0xff] %v3930
    %3935 = vrot.lane.b32.xlu0 %v3583, 111
    %v3936 = vpop.permute.xlu0 %3935
    %3937 = vrot.lane.b32.xlu0 %v3587, 111
    %v3938 = vpop.permute.xlu0 %3937
    %3939 = vrot.lane.b32.xlu0 %v3584, 111
    %v3940 = vpop.permute.xlu0 %3939
    %3941 = vrot.lane.b32.xlu0 %v3588, 111
    %v3942 = vpop.permute.xlu0 %3941
    %3943 = vrot.lane.b32.xlu0 %v3585, 111
    %v3944 = vpop.permute.xlu0 %3943
    %3945 = vrot.lane.b32.xlu0 %v3589, 111
    %v3946 = vpop.permute.xlu0 %3945
    %3947 = vrot.lane.b32.xlu0 %v3586, 111
    %v3948 = vpop.permute.xlu0 %3947
    %3949 = vrot.lane.b32.xlu0 %v3590, 111
    %v3950 = vpop.permute.xlu0 %3949
    %v3951 = vsel %vm842, %v3944, %v3948
    %v3952 = vsel %vm842, %v3946, %v3950
    %v3953 = vsel %vm842, %v3940, %v3944
    %v3954 = vsel %vm842, %v3942, %v3946
    %v3955 = vsel %vm842, %v3936, %v3940
    %v3956 = vsel %vm842, %v3938, %v3942
    %v3957 = vsel %vm842, %v3948, %v3936
    %v3958 = vsel %vm842, %v3950, %v3938
    %v3959 = vld [vmem:[%s1 + $0x400] sm:$0xff]
    %v3960 = vld [vmem:[%s1 + $0x408] sm:$0xff]
    %v3961 = vld [vmem:[%s1 + $0x410] sm:$0xff]
    %v3962 = vld [vmem:[%s1 + $0x418] sm:$0xff]
    %v3963 = vld [vmem:[%s1 + $0x420] sm:$0xff]
    %v3964 = vld [vmem:[%s1 + $0x428] sm:$0xff]
    %v3965 = vld [vmem:[%s1 + $0x430] sm:$0xff]
    %v3966 = vld [vmem:[%s1 + $0x438] sm:$0xff]
    %v3967 = vmul.f32 %v3955, %v3959
    %v3968 = vmul.f32 %v3953, %v3960
    %v3969 = vmul.f32 %v3951, %v3961
    %v3970 = vmul.f32 %v3957, %v3962
    %v3971 = vmul.f32 %v3956, %v3963
    %v3972 = vmul.f32 %v3954, %v3964
    %v3973 = vmul.f32 %v3952, %v3965
    %v3974 = vmul.f32 %v3958, %v3966
    %v3975 = vpack.c.bf16 %v3971, %v3967
    %v3976 = vpack.c.bf16 %v3972, %v3968
    %v3977 = vpack.c.bf16 %v3973, %v3969
    %v3978 = vpack.c.bf16 %v3974, %v3970
    %3979 = vst [vmem:[#allocation2 + $0x100] sm:$0xff] %v3975
    %3980 = vst [vmem:[#allocation2 + $0x108] sm:$0xff] %v3976
    %3981 = vst [vmem:[#allocation2 + $0x110] sm:$0xff] %v3977
    %3982 = vst [vmem:[#allocation2 + $0x118] sm:$0xff] %v3978
    %v3983 = vld [vmem:[#allocation8] sm:$0xff]
    %v3984 = vld [vmem:[#allocation8 + $0x8] sm:$0xff]
    %v3985 = vld [vmem:[#allocation8 + $0x10] sm:$0xff]
    %v3986 = vld [vmem:[#allocation8 + $0x18] sm:$0xff]
    %v3987 = vld [vmem:[#allocation2] sm:$0xff]
    %v3988 = vld [vmem:[#allocation2 + $0x8] sm:$0xff]
    %v3989 = vld [vmem:[#allocation2 + $0x10] sm:$0xff]
    %v3990 = vld [vmem:[#allocation2 + $0x18] sm:$0xff]
    %v3991 = vld [vmem:[#allocation2 + $0x20] sm:$0xff]
    %v3992 = vld [vmem:[#allocation2 + $0x28] sm:$0xff]
    %v3993 = vld [vmem:[#allocation2 + $0x30] sm:$0xff]
    %v3994 = vld [vmem:[#allocation2 + $0x38] sm:$0xff]
    %v3995 = vld [vmem:[#allocation2 + $0x40] sm:$0xff]
    %v3996 = vld [vmem:[#allocation2 + $0x48] sm:$0xff]
    %v3997 = vld [vmem:[#allocation2 + $0x50] sm:$0xff]
    %v3998 = vld [vmem:[#allocation2 + $0x58] sm:$0xff]
    %v3999 = vld [vmem:[#allocation2 + $0x60] sm:$0xff]
    %v4000 = vld [vmem:[#allocation2 + $0x68] sm:$0xff]
    %v4001 = vld [vmem:[#allocation2 + $0x70] sm:$0xff]
    %v4002 = vld [vmem:[#allocation2 + $0x78] sm:$0xff]
    %v4003 = vld [vmem:[#allocation2 + $0x80] sm:$0xff]
    %v4004 = vld [vmem:[#allocation2 + $0x88] sm:$0xff]
    %v4005 = vld [vmem:[#allocation2 + $0x90] sm:$0xff]
    %v4006 = vld [vmem:[#allocation2 + $0x98] sm:$0xff]
    %v4007 = vld [vmem:[#allocation2 + $0xa0] sm:$0xff]
    %v4008 = vld [vmem:[#allocation2 + $0xa8] sm:$0xff]
    %v4009 = vld [vmem:[#allocation2 + $0xb0] sm:$0xff]
    %v4010 = vld [vmem:[#allocation2 + $0xb8] sm:$0xff]
    %v4011 = vld [vmem:[#allocation2 + $0xc0] sm:$0xff]
    %v4012 = vld [vmem:[#allocation2 + $0xc8] sm:$0xff]
    %v4013 = vld [vmem:[#allocation2 + $0xd0] sm:$0xff]
    %v4014 = vld [vmem:[#allocation2 + $0xd8] sm:$0xff]
    %v4015 = vld [vmem:[#allocation2 + $0xe0] sm:$0xff]
    %v4016 = vld [vmem:[#allocation2 + $0xe8] sm:$0xff]
    %v4017 = vld [vmem:[#allocation2 + $0xf0] sm:$0xff]
    %v4018 = vld [vmem:[#allocation2 + $0xf8] sm:$0xff]
    %v4019 = vld [vmem:[#allocation2 + $0x100] sm:$0xff]
    %v4020 = vld [vmem:[#allocation2 + $0x108] sm:$0xff]
    %v4021 = vld [vmem:[#allocation2 + $0x110] sm:$0xff]
    %v4022 = vld [vmem:[#allocation2 + $0x118] sm:$0xff]
    %v4027 = vunpack.c.l.b16 %v3983
    %v4028 = vunpack.c.h.b16 %v3983
    %v4029 = vunpack.c.l.b16 %v3984
    %v4030 = vunpack.c.h.b16 %v3984
    %v4031 = vunpack.c.l.b16 %v3985
    %v4032 = vunpack.c.h.b16 %v3985
    %v4033 = vunpack.c.l.b16 %v3986
    %v4034 = vunpack.c.h.b16 %v3986
    %v4035 = vpack.c.b16 %v4029, %v4027
    %v4036 = vpack.c.b16 %v4030, %v4028
    %v4037 = vpack.c.b16 %v4033, %v4031
    %v4038 = vpack.c.b16 %v4034, %v4032
    %v4042 = vsel %vm2009, %v4036, 0
    %v4045 = vsel %vm2009, %v4038, 0
    %4047 = vmatprep.subr.bf16.mxu0 %v3988
    %4048 = vmatpush1.bf16.msra.mxu0 %v3987
    %4049 = vmatprep.subr.bf16.mxu0 %v3992
    %4050 = vmatpush1.bf16.msra.mxu0 %v3991
    %4051 = vmatprep.subr.bf16.mxu0 %v3996
    %4052 = vmatpush1.bf16.msra.mxu0 %v3995
    %4053 = vmatprep.subr.bf16.mxu0 %v4000
    %4054 = vmatpush1.bf16.msra.mxu0 %v3999
    %4055 = vmatprep.subr.bf16.mxu0 %v4004
    %4056 = vmatpush1.bf16.msra.mxu0 %v4003
    %4057 = vmatprep.subr.bf16.mxu0 %v4008
    %4058 = vmatpush1.bf16.msra.mxu0 %v4007
    %4059 = vmatprep.subr.bf16.mxu0 %v4012
    %4060 = vmatpush1.bf16.msra.mxu0 %v4011
    %4061 = vmatprep.subr.bf16.mxu0 %v4016
    %4062 = vmatpush1.bf16.msra.mxu0 %v4015
    %4063 = vmatprep.subr.bf16.mxu0 %v4020
    %4064 = vmatpush1.bf16.msra.mxu0 %v4019
    %4065 = vmatprep.subr.bf16.mxu0 0
    %4066 = vmatpush1.bf16.msra.mxu0 0
    %4067 = vmatprep.subr.bf16.mxu0 0
    %4068 = vmatpush1.bf16.msra.mxu0 0
    %4069 = vmatprep.subr.bf16.mxu0 0
    %4070 = vmatpush1.bf16.msra.mxu0 0
    %4071 = vmatprep.subr.bf16.mxu0 0
    %4072 = vmatpush1.bf16.msra.mxu0 0
    %4073 = vmatprep.subr.bf16.mxu0 0
    %4074 = vmatpush1.bf16.msra.mxu0 0
    %4075 = vmatprep.subr.bf16.mxu0 0
    %4076 = vmatpush1.bf16.msra.mxu0 0
    %4077 = vmatprep.subr.bf16.mxu0 0
    %4078 = vmatpush1.bf16.msra.mxu0 0
    %4079 = vmatprep.mubr.bf16.mxu0 %v4042
    %4080 = vmatmul.mubr.bf16.gmra.mrb[0].mxu0 %v4035
    %v4081 = vpop.f32.mrb[0].mxu0
    %v4082 = vadd.f32 0.0, %v4081
    %v4083 = vpop.f32.mrb[0].mxu0
    %v4084 = vadd.f32 0.0, %v4083
    %v4085 = vpop.f32.mrb[0].mxu0
    %v4086 = vadd.f32 0.0, %v4085
    %v4087 = vpop.f32.mrb[0].mxu0
    %v4088 = vadd.f32 0.0, %v4087
    %4089 = vmatprep.mubr.bf16.mxu0 %v4045
    %4090 = vmatmul.mubr.bf16.gmra.mrb[0].mxu0 %v4037
    %v4091 = vpop.f32.mrb[0].mxu0
    %v4092 = vadd.f32 0.0, %v4091
    %v4093 = vpop.f32.mrb[0].mxu0
    %v4094 = vadd.f32 0.0, %v4093
    %v4095 = vpop.f32.mrb[0].mxu0
    %v4096 = vadd.f32 0.0, %v4095
    %v4097 = vpop.f32.mrb[0].mxu0
    %v4098 = vadd.f32 0.0, %v4097
    %4099 = vdwg.mxu0
    %4100 = vmatprep.subr.bf16.mxu0 %v3990
    %4101 = vmatpush1.bf16.msra.mxu0 %v3989
    %4102 = vmatprep.subr.bf16.mxu0 %v3994
    %4103 = vmatpush1.bf16.msra.mxu0 %v3993
    %4104 = vmatprep.subr.bf16.mxu0 %v3998
    %4105 = vmatpush1.bf16.msra.mxu0 %v3997
    %4106 = vmatprep.subr.bf16.mxu0 %v4002
    %4107 = vmatpush1.bf16.msra.mxu0 %v4001
    %4108 = vmatprep.subr.bf16.mxu0 %v4006
    %4109 = vmatpush1.bf16.msra.mxu0 %v4005
    %4110 = vmatprep.subr.bf16.mxu0 %v4010
    %4111 = vmatpush1.bf16.msra.mxu0 %v4009
    %4112 = vmatprep.subr.bf16.mxu0 %v4014
    %4113 = vmatpush1.bf16.msra.mxu0 %v4013
    %4114 = vmatprep.subr.bf16.mxu0 %v4018
    %4115 = vmatpush1.bf16.msra.mxu0 %v4017
    %4116 = vmatprep.subr.bf16.mxu0 %v4022
    %4117 = vmatpush1.bf16.msra.mxu0 %v4021
    %4118 = vmatprep.subr.bf16.mxu0 0
    %4119 = vmatpush1.bf16.msra.mxu0 0
    %4120 = vmatprep.subr.bf16.mxu0 0
    %4121 = vmatpush1.bf16.msra.mxu0 0
    %4122 = vmatprep.subr.bf16.mxu0 0
    %4123 = vmatpush1.bf16.msra.mxu0 0
    %4124 = vmatprep.subr.bf16.mxu0 0
    %4125 = vmatpush1.bf16.msra.mxu0 0
    %4126 = vmatprep.subr.bf16.mxu0 0
    %4127 = vmatpush1.bf16.msra.mxu0 0
    %4128 = vmatprep.subr.bf16.mxu0 0
    %4129 = vmatpush1.bf16.msra.mxu0 0
    %4130 = vmatprep.subr.bf16.mxu0 0
    %4131 = vmatpush1.bf16.msra.mxu0 0
    %4132 = vmatprep.mubr.bf16.mxu0 %v4042
    %4133 = vmatmul.mubr.bf16.gmra.mrb[0].mxu0 %v4035
    %v4134 = vpop.f32.mrb[0].mxu0
    %v4135 = vadd.f32 0.0, %v4134
    %v4136 = vpop.f32.mrb[0].mxu0
    %v4137 = vadd.f32 0.0, %v4136
    %v4138 = vpop.f32.mrb[0].mxu0
    %v4139 = vadd.f32 0.0, %v4138
    %v4140 = vpop.f32.mrb[0].mxu0
    %v4141 = vadd.f32 0.0, %v4140
    %4142 = vmatprep.mubr.bf16.mxu0 %v4045
    %4143 = vmatmul.mubr.bf16.gmra.mrb[0].mxu0 %v4037
    %v4144 = vpop.f32.mrb[0].mxu0
    %v4145 = vadd.f32 0.0, %v4144
    %v4146 = vpop.f32.mrb[0].mxu0
    %v4147 = vadd.f32 0.0, %v4146
    %v4148 = vpop.f32.mrb[0].mxu0
    %v4149 = vadd.f32 0.0, %v4148
    %v4150 = vpop.f32.mrb[0].mxu0
    %v4151 = vadd.f32 0.0, %v4150
    %4152 = vdwg.mxu0
    %v4153 = vadd.f32 %v1280, %v2090
    %v4154 = vadd.f32 %v1282, %v2092
    %v4155 = vadd.f32 %v1466, %v2173
    %v4156 = vadd.f32 %v1468, %v2175
    %v4157 = vadd.f32 %v1284, %v2094
    %v4158 = vadd.f32 %v1286, %v2096
    %v4159 = vadd.f32 %v1470, %v2177
    %v4160 = vadd.f32 %v1472, %v2179
    %v4161 = vadd.f32 %v1290, %v2100
    %v4162 = vadd.f32 %v1292, %v2102
    %v4163 = vadd.f32 %v1476, %v2183
    %v4164 = vadd.f32 %v1478, %v2185
    %v4165 = vadd.f32 %v1294, %v2104
    %v4166 = vadd.f32 %v1296, %v2106
    %v4167 = vadd.f32 %v1480, %v2187
    %v4168 = vadd.f32 %v1482, %v2189
    %v4169 = vadd.f32 %v4153, %v2780
    %v4170 = vadd.f32 %v4154, %v2782
    %v4171 = vadd.f32 %v4155, %v2853
    %v4172 = vadd.f32 %v4156, %v2855
    %v4173 = vadd.f32 %v4157, %v2784
    %v4174 = vadd.f32 %v4158, %v2786
    %v4175 = vadd.f32 %v4159, %v2857
    %v4176 = vadd.f32 %v4160, %v2859
    %v4177 = vadd.f32 %v4161, %v2790
    %v4178 = vadd.f32 %v4162, %v2792
    %v4179 = vadd.f32 %v4163, %v2863
    %v4180 = vadd.f32 %v4164, %v2865
    %v4181 = vadd.f32 %v4165, %v2794
    %v4182 = vadd.f32 %v4166, %v2796
    %v4183 = vadd.f32 %v4167, %v2867
    %v4184 = vadd.f32 %v4168, %v2869
    %v4185 = vadd.f32 %v4169, %v3444
    %v4186 = vadd.f32 %v4170, %v3446
    %v4187 = vadd.f32 %v4171, %v3507
    %v4188 = vadd.f32 %v4172, %v3509
    %v4189 = vadd.f32 %v4173, %v3448
    %v4190 = vadd.f32 %v4174, %v3450
    %v4191 = vadd.f32 %v4175, %v3511
    %v4192 = vadd.f32 %v4176, %v3513
    %v4193 = vadd.f32 %v4177, %v3454
    %v4194 = vadd.f32 %v4178, %v3456
    %v4195 = vadd.f32 %v4179, %v3517
    %v4196 = vadd.f32 %v4180, %v3519
    %v4197 = vadd.f32 %v4181, %v3458
    %v4198 = vadd.f32 %v4182, %v3460
    %v4199 = vadd.f32 %v4183, %v3521
    %v4200 = vadd.f32 %v4184, %v3523
    %v4201 = vadd.f32 %v4185, %v4082
    %v4202 = vadd.f32 %v4186, %v4084
    %v4203 = vadd.f32 %v4187, %v4135
    %v4204 = vadd.f32 %v4188, %v4137
    %v4205 = vadd.f32 %v4189, %v4086
    %v4206 = vadd.f32 %v4190, %v4088
    %v4207 = vadd.f32 %v4191, %v4139
    %v4208 = vadd.f32 %v4192, %v4141
    %v4209 = vadd.f32 %v4193, %v4092
    %v4210 = vadd.f32 %v4194, %v4094
    %v4211 = vadd.f32 %v4195, %v4145
    %v4212 = vadd.f32 %v4196, %v4147
    %v4213 = vadd.f32 %v4197, %v4096
    %v4214 = vadd.f32 %v4198, %v4098
    %v4215 = vadd.f32 %v4199, %v4149
    %v4216 = vadd.f32 %v4200, %v4151
    %4218 = vset.pattern.permute.xlu0 0
    %4219 = vperm.xlu0 %4218, %v109
    %v4220 = vpop.permute.xlu0 %4219
    %4223 = vset.pattern.permute.xlu0 0
    %4224 = vperm.xlu0 %4223, %v110
    %v4225 = vpop.permute.xlu0 %4224
    %4228 = vset.pattern.permute.xlu0 0
    %4229 = vperm.xlu0 %4228, %v111
    %v4230 = vpop.permute.xlu0 %4229
    %4233 = vset.pattern.permute.xlu0 0
    %4234 = vperm.xlu0 %4233, %v112
    %v4235 = vpop.permute.xlu0 %4234
    %v4237 = vadd.f32 %v4201, %v4220
    %v4238 = vadd.f32 %v4202, %v4220
    %v4239 = vadd.f32 %v4203, %v4220
    %v4240 = vadd.f32 %v4204, %v4220
    %v4241 = vadd.f32 %v4205, %v4225
    %v4242 = vadd.f32 %v4206, %v4225
    %v4243 = vadd.f32 %v4207, %v4225
    %v4244 = vadd.f32 %v4208, %v4225
    %v4245 = vadd.f32 %v4209, %v4230
    %v4246 = vadd.f32 %v4210, %v4230
    %v4247 = vadd.f32 %v4211, %v4230
    %v4248 = vadd.f32 %v4212, %v4230
    %v4249 = vadd.f32 %v4213, %v4235
    %v4250 = vadd.f32 %v4214, %v4235
    %v4251 = vadd.f32 %v4215, %v4235
    %v4252 = vadd.f32 %v4216, %v4235
    %v4253 = vmul.f32 %v4237, 0.2
    %v4254 = vmul.f32 %v4238, 0.2
    %v4255 = vmul.f32 %v4239, 0.2
    %v4256 = vmul.f32 %v4240, 0.2
    %v4257 = vmul.f32 %v4241, 0.2
    %v4258 = vmul.f32 %v4242, 0.2
    %v4259 = vmul.f32 %v4243, 0.2
    %v4260 = vmul.f32 %v4244, 0.2
    %v4261 = vmul.f32 %v4245, 0.2
    %v4262 = vmul.f32 %v4246, 0.2
    %v4263 = vmul.f32 %v4247, 0.2
    %v4264 = vmul.f32 %v4248, 0.2
    %v4265 = vmul.f32 %v4249, 0.2
    %v4266 = vmul.f32 %v4250, 0.2
    %v4267 = vmul.f32 %v4251, 0.2
    %v4268 = vmul.f32 %v4252, 0.2
    %v4269 = vadd.f32 %v4253, %v85
    %v4270 = vadd.f32 %v4254, %v86
    %v4271 = vadd.f32 %v4255, %v87
    %v4272 = vadd.f32 %v4256, %v88
    %v4273 = vadd.f32 %v4257, %v89
    %v4274 = vadd.f32 %v4258, %v90
    %v4275 = vadd.f32 %v4259, %v91
    %v4276 = vadd.f32 %v4260, %v92
    %v4277 = vadd.f32 %v4261, %v93
    %v4278 = vadd.f32 %v4262, %v94
    %v4279 = vadd.f32 %v4263, %v95
    %v4280 = vadd.f32 %v4264, %v96
    %v4281 = vadd.f32 %v4265, %v97
    %v4282 = vadd.f32 %v4266, %v98
    %v4283 = vadd.f32 %v4267, %v99
    %v4284 = vadd.f32 %v4268, %v100
    %vm4285 = vcmp.ge.f32.partialorder %v4269, 0.0
    %vm4286 = vcmp.ge.f32.partialorder %v4270, 0.0
    %vm4287 = vcmp.ge.f32.partialorder %v4271, 0.0
    %vm4288 = vcmp.ge.f32.partialorder %v4272, 0.0
    %vm4289 = vcmp.ge.f32.partialorder %v4273, 0.0
    %vm4290 = vcmp.ge.f32.partialorder %v4274, 0.0
    %vm4291 = vcmp.ge.f32.partialorder %v4275, 0.0
    %vm4292 = vcmp.ge.f32.partialorder %v4276, 0.0
    %vm4293 = vcmp.ge.f32.partialorder %v4277, 0.0
    %vm4294 = vcmp.ge.f32.partialorder %v4278, 0.0
    %vm4295 = vcmp.ge.f32.partialorder %v4279, 0.0
    %vm4296 = vcmp.ge.f32.partialorder %v4280, 0.0
    %vm4297 = vcmp.ge.f32.partialorder %v4281, 0.0
    %vm4298 = vcmp.ge.f32.partialorder %v4282, 0.0
    %vm4299 = vcmp.ge.f32.partialorder %v4283, 0.0
    %vm4300 = vcmp.ge.f32.partialorder %v4284, 0.0
    %v4301 = vmul.f32 %v4269, 0.2
    %v4302 = vmul.f32 %v4270, 0.2
    %v4303 = vmul.f32 %v4271, 0.2
    %v4304 = vmul.f32 %v4272, 0.2
    %v4305 = vmul.f32 %v4273, 0.2
    %v4306 = vmul.f32 %v4274, 0.2
    %v4307 = vmul.f32 %v4275, 0.2
    %v4308 = vmul.f32 %v4276, 0.2
    %v4309 = vmul.f32 %v4277, 0.2
    %v4310 = vmul.f32 %v4278, 0.2
    %v4311 = vmul.f32 %v4279, 0.2
    %v4312 = vmul.f32 %v4280, 0.2
    %v4313 = vmul.f32 %v4281, 0.2
    %v4314 = vmul.f32 %v4282, 0.2
    %v4315 = vmul.f32 %v4283, 0.2
    %v4316 = vmul.f32 %v4284, 0.2
    %v4317 = vsel %vm4285, %v4269, %v4301
    %v4318 = vsel %vm4286, %v4270, %v4302
    %v4319 = vsel %vm4287, %v4271, %v4303
    %v4320 = vsel %vm4288, %v4272, %v4304
    %v4321 = vsel %vm4289, %v4273, %v4305
    %v4322 = vsel %vm4290, %v4274, %v4306
    %v4323 = vsel %vm4291, %v4275, %v4307
    %v4324 = vsel %vm4292, %v4276, %v4308
    %v4325 = vsel %vm4293, %v4277, %v4309
    %v4326 = vsel %vm4294, %v4278, %v4310
    %v4327 = vsel %vm4295, %v4279, %v4311
    %v4328 = vsel %vm4296, %v4280, %v4312
    %v4329 = vsel %vm4297, %v4281, %v4313
    %v4330 = vsel %vm4298, %v4282, %v4314
    %v4331 = vsel %vm4299, %v4283, %v4315
    %v4332 = vsel %vm4300, %v4284, %v4316
    %4333 = vst [vmem:[%s8] sm:$0xff] %v4317
    %4334 = vst [vmem:[%s8 + $0x8] sm:$0xff] %v4318
    %4335 = vst [vmem:[%s8 + $0x10] sm:$0xff] %v4319
    %4336 = vst [vmem:[%s8 + $0x18] sm:$0xff] %v4320
    %4337 = vst [vmem:[%s8 + $0x20] sm:$0xff] %v4321
    %4338 = vst [vmem:[%s8 + $0x28] sm:$0xff] %v4322
    %4339 = vst [vmem:[%s8 + $0x30] sm:$0xff] %v4323
    %4340 = vst [vmem:[%s8 + $0x38] sm:$0xff] %v4324
    %4341 = vst [vmem:[%s8 + $0x40] sm:$0xff] %v4325
    %4342 = vst [vmem:[%s8 + $0x48] sm:$0xff] %v4326
    %4343 = vst [vmem:[%s8 + $0x50] sm:$0xff] %v4327
    %4344 = vst [vmem:[%s8 + $0x58] sm:$0xff] %v4328
    %4345 = vst [vmem:[%s8 + $0x60] sm:$0xff] %v4329
    %4346 = vst [vmem:[%s8 + $0x68] sm:$0xff] %v4330
    %4347 = vst [vmem:[%s8 + $0x70] sm:$0xff] %v4331
    %4348 = vst [vmem:[%s8 + $0x78] sm:$0xff] %v4332
    // Predicated region
    $region50: #{rdb5c_forward.1} parent=1 // pred_check
      _
    $region51: #{rdb5c_forward.1} parent=1 // pred_check_branch
      %4350 = sbr.rel (0) target = $region53
    $region52: #{rdb5c_forward.1} parent=1 // pred_region
      _
    $region53: #{rdb5c_forward.1} parent=1 // pred_fallthru
      _
    // Predicated region
    $region54: #{rdb5c_forward.1} parent=1 // pred_check
      _
    $region55: #{rdb5c_forward.1} parent=1 // pred_check_branch
      %4352 = sbr.rel (0) target = $region57
    $region56: #{rdb5c_forward.1} parent=1 // pred_region
      _
    $region57: #{rdb5c_forward.1} parent=1 // pred_fallthru
      _
    %4353 = vsyncpa [#allocation4], 1
    %4354 = vsyncpa [#allocation6], 1
    %4355 = vsyncpa [#allocation9], 1

</llo_original>
